<compile_context>
chip_gen: v7x
topology: tpu7x:2x2x1
jax: 0.10.0
libtpu: 0.0.40
codegen_flags: <defaults>
</compile_context>

<pallas_src>
import jax
import jax.numpy as jnp
import numpy as np
from jax.experimental import pallas as pl
from jax.experimental.pallas import tpu as pltpu

EPS = 1e-5
LANE = 128
ROW_TILE = 256                # demo-sized; use 512-1024 in prod (halve on v7x)
VMEM_LIMIT = 48 * 1024 * 1024  # leaves headroom on v7x's 64 MiB physical VMEM


def _rup(x, m):
    return ((x + m - 1) // m) * m


# ---------------------------------------------------------------------------
# Kernel A: per-channel sum / sum-of-squares of x, accumulated over row tiles.
# (padded rows/channels are zero, so they contribute nothing to the sums)
# ---------------------------------------------------------------------------
def _stats_kernel(x_ref, sum_ref, sq_ref):
    @pl.when(pl.program_id(0) == 0)
    def _():
        sum_ref[...] = jnp.zeros_like(sum_ref)
        sq_ref[...] = jnp.zeros_like(sq_ref)

    x = x_ref[...]
    sum_ref[...] += jnp.sum(x, axis=0, keepdims=True)
    sq_ref[...] += jnp.sum(x * x, axis=0, keepdims=True)


# ---------------------------------------------------------------------------
# Kernel B: BN1+ReLU (folded affine) -> 1x1 conv matmul -> y1 tile, plus
#           accumulation of y1's per-channel sum / sumsq (masked to real rows).
# ---------------------------------------------------------------------------
def _make_stage1_kernel(tile_rows, m_valid):
    def kernel(x_ref, s1_ref, t1_ref, w1_ref, y_ref, sum_ref, sq_ref):
        @pl.when(pl.program_id(0) == 0)
        def _():
            sum_ref[...] = jnp.zeros_like(sum_ref)
            sq_ref[...] = jnp.zeros_like(sq_ref)

        a1 = jnp.maximum(x_ref[...] * s1_ref[...] + t1_ref[...], 0.0)
        y1 = jnp.dot(a1, w1_ref[...], preferred_element_type=jnp.float32)
        y_ref[...] = y1

        rid = (jax.lax.broadcasted_iota(jnp.int32, (tile_rows, 1), 0)
               + pl.program_id(0) * tile_rows)
        y1m = jnp.where(rid < m_valid, y1, 0.0)
        sum_ref[...] += jnp.sum(y1m, axis=0, keepdims=True)
        sq_ref[...] += jnp.sum(y1m * y1m, axis=0, keepdims=True)
    return kernel


# ---------------------------------------------------------------------------
# Kernel C: BN2+ReLU (in-kernel, conv zero-padding restored via static mask)
#           + 3x3 stride-s conv as 9 accumulated (C x C) matmuls over
#           stride-phase planes, plus y2 per-channel sum / sumsq accumulation.
#           One image per grid step; phase planes stay resident in VMEM.
# ---------------------------------------------------------------------------
def _make_conv3x3_kernel(stride, ho, wo, cp):
    nphase = stride * stride

    def kernel(*refs):
        phase_refs = refs[:nphase]
        mask_ref, s2_ref, t2_ref, w2_ref = refs[nphase:nphase + 4]
        y_ref, sum_ref, sq_ref = refs[nphase + 4:]

        @pl.when(pl.program_id(0) == 0)
        def _():
            sum_ref[...] = jnp.zeros_like(sum_ref)
            sq_ref[...] = jnp.zeros_like(sq_ref)

        s2 = s2_ref[...]
        t2 = t2_ref[...]
        acts = []
        for k in range(nphase):
            ph = phase_refs[k][...]                   # (1, R, Rw, Cp)
            m = mask_ref[k]                           # (R, Rw, 1)
            acts.append((jnp.maximum(ph * s2 + t2, 0.0) * m)[0])   # (R, Rw, Cp)

        acc = jnp.zeros((ho * wo, cp), jnp.float32)
        for dy in range(3):
            for dx in range(3):
                p, q = dy % stride, dx % stride
                oy, ox = dy // stride, dx // stride
                win = acts[p * stride + q][oy:oy + ho, ox:ox + wo, :]
                acc = acc + jnp.dot(win.reshape(ho * wo, cp),
                                    w2_ref[dy * 3 + dx],
                                    preferred_element_type=jnp.float32)

        y_ref[0] = acc
        sum_ref[...] += jnp.sum(acc, axis=0, keepdims=True)
        sq_ref[...] += jnp.sum(acc * acc, axis=0, keepdims=True)
    return kernel


# ---------------------------------------------------------------------------
# Kernel D: BN3+ReLU and shortcut BN_sc+ReLU (strided rows only), then the two
#           tail 1x1 convs fused into a single concat-K matmul.
# ---------------------------------------------------------------------------
def _tail_kernel(y2_ref, xs_ref, s3_ref, t3_ref, ssc_ref, tsc_ref, w_ref,
                 out_ref):
    h3 = jnp.maximum(y2_ref[...] * s3_ref[...] + t3_ref[...], 0.0)
    sc = jnp.maximum(xs_ref[...] * ssc_ref[...] + tsc_ref[...], 0.0)
    z = jnp.concatenate([h3, sc], axis=-1)
    out_ref[...] = jnp.dot(z, w_ref[...], preferred_element_type=jnp.float32)


# ---------------------------------------------------------------------------
# Glue helpers
# ---------------------------------------------------------------------------
def _affine(gamma, beta, csum, csq, count):
    mean = csum / count
    var = jnp.maximum(csq / count - mean * mean, 0.0)
    scale = gamma * jax.lax.rsqrt(var + EPS)
    shift = beta - mean * scale
    return scale, shift


def _mosaic(semantics):
    return pltpu.CompilerParams(dimension_semantics=semantics,
                                vmem_limit_bytes=VMEM_LIMIT)


def _big_res_block(x_nchw, params, *, stride):
    x = jnp.transpose(x_nchw, (0, 2, 3, 1)).astype(jnp.float32)     # NHWC
    N, H, W, Cin = x.shape
    Cmid = params["w1"].shape[1]
    Cout = params["w3"].shape[1]
    Ho = (H - 1) // stride + 1
    Wo = (W - 1) // stride + 1
    M0, M1 = N * H * W, N * Ho * Wo
    Cin_p, Cmid_p, Cout_p = (_rup(c, LANE) for c in (Cin, Cmid, Cout))

    # Zero-padded parameters: padded channels stay identically zero end-to-end.
    padc = lambda v, cp: jnp.pad(v, (0, cp - v.shape[0])).reshape(1, cp)
    padw = lambda w, rp, cp: jnp.pad(w, ((0, rp - w.shape[0]),
                                         (0, cp - w.shape[1])))
    g1, b1 = padc(params["g1"], Cin_p), padc(params["b1"], Cin_p)
    g2, b2 = padc(params["g2"], Cmid_p), padc(params["b2"], Cmid_p)
    g3, b3 = padc(params["g3"], Cmid_p), padc(params["b3"], Cmid_p)
    gsc, bsc = padc(params["gsc"], Cin_p), padc(params["bsc"], Cin_p)
    w1 = padw(params["w1"], Cin_p, Cmid_p)
    w3 = padw(params["w3"], Cmid_p, Cout_p)
    wsc = padw(params["wsc"], Cin_p, Cout_p)
    w2 = jnp.pad(params["w2"], ((0, 0), (0, 0), (0, Cmid_p - Cmid),
                                (0, Cmid_p - Cmid))).reshape(9, Cmid_p, Cmid_p)
    wcat = jnp.concatenate([w3, wsc], axis=0)          # (Cmid_p+Cin_p, Cout_p)

    # -------- stage A: batch statistics of x --------
    TM0 = min(ROW_TILE, _rup(M0, 8))
    M0p = _rup(M0, TM0)
    grid0 = M0p // TM0
    x_p = jnp.pad(x, ((0, 0), (0, 0), (0, 0), (0, Cin_p - Cin)))
    x2d = jnp.pad(x_p.reshape(M0, Cin_p), ((0, M0p - M0), (0, 0)))

    xsum, xsq = pl.pallas_call(
        _stats_kernel,
        grid=(grid0,),
        in_specs=[pl.BlockSpec((TM0, Cin_p), lambda i: (i, 0))],
        out_specs=[pl.BlockSpec((1, Cin_p), lambda i: (0, 0)),
                   pl.BlockSpec((1, Cin_p), lambda i: (0, 0))],
        out_shape=[jax.ShapeDtypeStruct((1, Cin_p), jnp.float32)] * 2,
        compiler_params=_mosaic(("arbitrary",)),
    )(x2d)

    s1, t1 = _affine(g1, b1, xsum, xsq, M0)
    ssc, tsc = _affine(gsc, bsc, xsum, xsq, M0)

    # -------- stage B: BN1+ReLU -> 1x1 conv, + y1 statistics --------
    y1_2d, ysum, ysq = pl.pallas_call(
        _make_stage1_kernel(TM0, M0),
        grid=(grid0,),
        in_specs=[pl.BlockSpec((TM0, Cin_p), lambda i: (i, 0)),
                  pl.BlockSpec((1, Cin_p), lambda i: (0, 0)),
                  pl.BlockSpec((1, Cin_p), lambda i: (0, 0)),
                  pl.BlockSpec((Cin_p, Cmid_p), lambda i: (0, 0))],
        out_specs=[pl.BlockSpec((TM0, Cmid_p), lambda i: (i, 0)),
                   pl.BlockSpec((1, Cmid_p), lambda i: (0, 0)),
                   pl.BlockSpec((1, Cmid_p), lambda i: (0, 0))],
        out_shape=[jax.ShapeDtypeStruct((M0p, Cmid_p), jnp.float32),
                   jax.ShapeDtypeStruct((1, Cmid_p), jnp.float32),
                   jax.ShapeDtypeStruct((1, Cmid_p), jnp.float32)],
        compiler_params=_mosaic(("arbitrary",)),
    )(x2d, s1, t1, w1)

    s2, t2 = _affine(g2, b2, ysum, ysq, M0)

    # -------- stage C: BN2+ReLU + 3x3 stride-s conv, + y2 statistics --------
    # Stride-phase planes of spatially padded y1 (contiguous slices only; total
    # HBM traffic ~1x y1 instead of the 9x of a materialized im2col).
    R, Rw = Ho + 2, Wo + 2
    Lh, Lw = stride * R, stride * Rw
    y1_img = y1_2d[:M0].reshape(N, H, W, Cmid_p)
    ypad = jnp.pad(y1_img, ((0, 0), (1, Lh - H - 1), (1, Lw - W - 1), (0, 0)))
    mfull = jnp.pad(jnp.ones((H, W), jnp.float32),
                    ((1, Lh - H - 1), (1, Lw - W - 1)))
    phases = [ypad[:, p::stride, q::stride, :]
              for p in range(stride) for q in range(stride)]
    masks = jnp.stack([mfull[p::stride, q::stride]
                       for p in range(stride) for q in range(stride)])[..., None]
    nphase = stride * stride

    y2_3d, y2sum, y2sq = pl.pallas_call(
        _make_conv3x3_kernel(stride, Ho, Wo, Cmid_p),
        grid=(N,),
        in_specs=([pl.BlockSpec((1, R, Rw, Cmid_p), lambda n: (n, 0, 0, 0))
                   for _ in range(nphase)]
                  + [pl.BlockSpec((nphase, R, Rw, 1), lambda n: (0, 0, 0, 0)),
                     pl.BlockSpec((1, Cmid_p), lambda n: (0, 0)),
                     pl.BlockSpec((1, Cmid_p), lambda n: (0, 0)),
                     pl.BlockSpec((9, Cmid_p, Cmid_p), lambda n: (0, 0, 0))]),
        out_specs=[pl.BlockSpec((1, Ho * Wo, Cmid_p), lambda n: (n, 0, 0)),
                   pl.BlockSpec((1, Cmid_p), lambda n: (0, 0)),
                   pl.BlockSpec((1, Cmid_p), lambda n: (0, 0))],
        out_shape=[jax.ShapeDtypeStruct((N, Ho * Wo, Cmid_p), jnp.float32),
                   jax.ShapeDtypeStruct((1, Cmid_p), jnp.float32),
                   jax.ShapeDtypeStruct((1, Cmid_p), jnp.float32)],
        compiler_params=_mosaic(("arbitrary",)),
    )(*phases, masks, s2, t2, w2)

    s3, t3 = _affine(g3, b3, y2sum, y2sq, M1)

    # -------- stage D: BN3+ReLU + fused (left 1x1 | shortcut 1x1) matmul ----
    TM1 = min(ROW_TILE, _rup(M1, 8))
    M1p = _rup(M1, TM1)
    y2_2d = jnp.pad(y2_3d.reshape(M1, Cmid_p), ((0, M1p - M1), (0, 0)))
    xs2d = jnp.pad(x_p[:, ::stride, ::stride, :].reshape(M1, Cin_p),
                   ((0, M1p - M1), (0, 0)))

    out2d = pl.pallas_call(
        _tail_kernel,
        grid=(M1p // TM1,),
        in_specs=[pl.BlockSpec((TM1, Cmid_p), lambda i: (i, 0)),
                  pl.BlockSpec((TM1, Cin_p), lambda i: (i, 0)),
                  pl.BlockSpec((1, Cmid_p), lambda i: (0, 0)),
                  pl.BlockSpec((1, Cmid_p), lambda i: (0, 0)),
                  pl.BlockSpec((1, Cin_p), lambda i: (0, 0)),
                  pl.BlockSpec((1, Cin_p), lambda i: (0, 0)),
                  pl.BlockSpec((Cmid_p + Cin_p, Cout_p), lambda i: (0, 0))],
        out_specs=pl.BlockSpec((TM1, Cout_p), lambda i: (i, 0)),
        out_shape=jax.ShapeDtypeStruct((M1p, Cout_p), jnp.float32),
        compiler_params=_mosaic(("parallel",)),
    )(y2_2d, xs2d, s3, t3, ssc, tsc, wcat)

    out = out2d[:M1, :Cout].reshape(N, Ho, Wo, Cout)
    return jnp.transpose(out, (0, 3, 1, 2))
    # TODO(synk): identity-shortcut config (stride==1 and Cin==Cout) would skip
    # the BN_sc/ReLU/1x1 path and add x directly; not exercised in this demo.


big_res_block = jax.jit(_big_res_block, static_argnames="stride")


# ---------------------------------------------------------------------------
# Pure-JAX reference (same math, NHWC) for validation.
# ---------------------------------------------------------------------------
def _bn_relu_ref(x, g, b):
    mean = x.mean(axis=(0, 1, 2))
    var = ((x - mean) ** 2).mean(axis=(0, 1, 2))
    return jax.nn.relu((x - mean) * jax.lax.rsqrt(var + EPS) * g + b)


def big_res_block_ref(x_nchw, params, stride):
    x = jnp.transpose(x_nchw, (0, 2, 3, 1))
    a1 = _bn_relu_ref(x, params["g1"], params["b1"])
    y1 = jnp.einsum("nhwc,cd->nhwd", a1, params["w1"])
    h2 = _bn_relu_ref(y1, params["g2"], params["b2"])
    y2 = jax.lax.conv_general_dilated(
        h2, params["w2"], window_strides=(stride, stride),
        padding=((1, 1), (1, 1)),
        dimension_numbers=("NHWC", "HWIO", "NHWC"))
    h3 = _bn_relu_ref(y2, params["g3"], params["b3"])
    left = jnp.einsum("nhwc,cd->nhwd", h3, params["w3"])
    asc = _bn_relu_ref(x, params["gsc"], params["bsc"])[:, ::stride, ::stride, :]
    short = jnp.einsum("nhwc,cd->nhwd", asc, params["wsc"])
    return jnp.transpose(left + short, (0, 3, 1, 2))


if __name__ == "__main__":
    # Small shapes: N=2, Cin=8, Cmid=8, Cout=16, H=W=16, stride=2
    N, Cin, Cmid, Cout, H, W, stride = 2, 8, 8, 16, 16, 16, 2

    key = jax.random.PRNGKey(0)
    ks = jax.random.split(key, 12)
    params = {
        "g1":  1.0 + 0.1 * jax.random.normal(ks[0], (Cin,), jnp.float32),
        "b1":  0.1 * jax.random.normal(ks[1], (Cin,), jnp.float32),
        "w1":  0.2 * jax.random.normal(ks[2], (Cin, Cmid), jnp.float32),
        "g2":  1.0 + 0.1 * jax.random.normal(ks[3], (Cmid,), jnp.float32),
        "b2":  0.1 * jax.random.normal(ks[4], (Cmid,), jnp.float32),
        "w2":  0.2 * jax.random.normal(ks[5], (3, 3, Cmid, Cmid), jnp.float32),
        "g3":  1.0 + 0.1 * jax.random.normal(ks[6], (Cmid,), jnp.float32),
        "b3":  0.1 * jax.random.normal(ks[7], (Cmid,), jnp.float32),
        "w3":  0.2 * jax.random.normal(ks[8], (Cmid, Cout), jnp.float32),
        "gsc": 1.0 + 0.1 * jax.random.normal(ks[9], (Cin,), jnp.float32),
        "bsc": 0.1 * jax.random.normal(ks[10], (Cin,), jnp.float32),
        "wsc": 0.2 * jax.random.normal(ks[11], (Cin, Cout), jnp.float32),
    }

    x = jax.random.normal(jax.random.PRNGKey(42), (N, Cin, H, W), jnp.float32)

    out = jax.block_until_ready(big_res_block(x, params, stride=stride))
    ref = jax.block_until_ready(big_res_block_ref(x, params, stride))

    assert out.shape == (N, Cout, H // stride, W // stride), out.shape
    np.testing.assert_allclose(np.asarray(out), np.asarray(ref),
                               rtol=2e-3, atol=2e-3)
    print("KERNEL_OK")
</pallas_src>

<mosaic_0001>
module attributes {stable_mosaic.version = 11 : i64} {
  func.func @_stats_kernel(%arg0: i32, %arg1: memref<256x128xf32, #tpu.memory_space<vmem>>, %arg2: memref<1x128xf32, #tpu.memory_space<vmem>>, %arg3: memref<1x128xf32, #tpu.memory_space<vmem>>) attributes {dimension_semantics = [#tpu.dimension_semantics<arbitrary>], iteration_bounds = array<i64: 2>, scalar_prefetch = 0 : i64, scratch_operands = 0 : i64, tpu.core_type = #tpu.core_type<tc>, window_params = [{transform_indices = @transform_0, window_bounds = array<i64: 256, 128>}, {pipeline_mode = #tpu.pipeline_mode<synchronous>, transform_indices = @transform_1, window_bounds = array<i64: 1, 128>}, {pipeline_mode = #tpu.pipeline_mode<synchronous>, transform_indices = @transform_2, window_bounds = array<i64: 1, 128>}]} {
    %c0_i32 = arith.constant 0 : i32
    %0 = arith.cmpi eq, %arg0, %c0_i32 : i32
    %1 = arith.extui %0 : i1 to i32
    %c0_i32_0 = arith.constant 0 : i32
    %2 = arith.cmpi ne, %1, %c0_i32_0 : i32
    scf.if %2 {
      %cst_11 = arith.constant 0.000000e+00 : f32
      %15 = vector.broadcast %cst_11 : f32 to vector<1x128xf32>
      %c0_12 = arith.constant 0 : index
      %c0_13 = arith.constant 0 : index
      %16 = vector.load %arg2[%c0_12, %c0_13] : memref<1x128xf32, #tpu.memory_space<vmem>>, vector<1x128xf32>
      tpu.vector_store %arg2[%c0_12, %c0_13], %15 {strides = array<i32>} : memref<1x128xf32, #tpu.memory_space<vmem>>, vector<1x128xf32>,
      %cst_14 = arith.constant 0.000000e+00 : f32
      %17 = vector.broadcast %cst_14 : f32 to vector<1x128xf32>
      %c0_15 = arith.constant 0 : index
      %c0_16 = arith.constant 0 : index
      %18 = vector.load %arg3[%c0_15, %c0_16] : memref<1x128xf32, #tpu.memory_space<vmem>>, vector<1x128xf32>
      tpu.vector_store %arg3[%c0_15, %c0_16], %17 {strides = array<i32>} : memref<1x128xf32, #tpu.memory_space<vmem>>, vector<1x128xf32>,
    } else {
    }
    %c0 = arith.constant 0 : index
    %c0_1 = arith.constant 0 : index
    %3 = vector.load %arg1[%c0, %c0_1] : memref<256x128xf32, #tpu.memory_space<vmem>>, vector<256x128xf32>
    %c0_2 = arith.constant 0 : index
    %c0_3 = arith.constant 0 : index
    %4 = vector.load %arg2[%c0_2, %c0_3] : memref<1x128xf32, #tpu.memory_space<vmem>>, vector<1x128xf32>
    %cst = arith.constant dense<0.000000e+00> : vector<128xf32>
    %5 = vector.multi_reduction <add>, %3, %cst [0] : vector<256x128xf32> to vector<128xf32>
    %6 = vector.shape_cast %5 : vector<128xf32> to vector<1x128xf32>
    %7 = arith.addf %4, %6 : vector<1x128xf32>
    %c0_4 = arith.constant 0 : index
    %c0_5 = arith.constant 0 : index
    %8 = vector.load %arg2[%c0_4, %c0_5] : memref<1x128xf32, #tpu.memory_space<vmem>>, vector<1x128xf32>
    tpu.vector_store %arg2[%c0_4, %c0_5], %7 {strides = array<i32>} : memref<1x128xf32, #tpu.memory_space<vmem>>, vector<1x128xf32>,
    %c0_6 = arith.constant 0 : index
    %c0_7 = arith.constant 0 : index
    %9 = vector.load %arg3[%c0_6, %c0_7] : memref<1x128xf32, #tpu.memory_space<vmem>>, vector<1x128xf32>
    %10 = arith.mulf %3, %3 : vector<256x128xf32>
    %cst_8 = arith.constant dense<0.000000e+00> : vector<128xf32>
    %11 = vector.multi_reduction <add>, %10, %cst_8 [0] : vector<256x128xf32> to vector<128xf32>
    %12 = vector.shape_cast %11 : vector<128xf32> to vector<1x128xf32>
    %13 = arith.addf %9, %12 : vector<1x128xf32>
    %c0_9 = arith.constant 0 : index
    %c0_10 = arith.constant 0 : index
    %14 = vector.load %arg3[%c0_9, %c0_10] : memref<1x128xf32, #tpu.memory_space<vmem>>, vector<1x128xf32>
    tpu.vector_store %arg3[%c0_9, %c0_10], %13 {strides = array<i32>} : memref<1x128xf32, #tpu.memory_space<vmem>>, vector<1x128xf32>,
    return
  }
  func.func @transform_0(%arg0: i32) -> (i32, i32) {
    %c0_i32 = arith.constant 0 : i32
    %c0_i32_0 = arith.constant 0 : i32
    return %arg0, %c0_i32 : i32, i32
  }
  func.func @transform_1(%arg0: i32) -> (i32, i32) {
    %c0_i32 = arith.constant 0 : i32
    %c0_i32_0 = arith.constant 0 : i32
    %c0_i32_1 = arith.constant 0 : i32
    return %c0_i32, %c0_i32_0 : i32, i32
  }
  func.func @transform_2(%arg0: i32) -> (i32, i32) {
    %c0_i32 = arith.constant 0 : i32
    %c0_i32_0 = arith.constant 0 : i32
    %c0_i32_1 = arith.constant 0 : i32
    return %c0_i32, %c0_i32_0 : i32, i32
  }
}

module attributes {stable_mosaic.version = 11 : i64} {
  func.func @kernel(%arg0: i32, %arg1: memref<256x128xf32, #tpu.memory_space<vmem>>, %arg2: memref<1x128xf32, #tpu.memory_space<vmem>>, %arg3: memref<1x128xf32, #tpu.memory_space<vmem>>, %arg4: memref<128x128xf32, #tpu.memory_space<vmem>>, %arg5: memref<256x128xf32, #tpu.memory_space<vmem>>, %arg6: memref<1x128xf32, #tpu.memory_space<vmem>>, %arg7: memref<1x128xf32, #tpu.memory_space<vmem>>) attributes {dimension_semantics = [#tpu.dimension_semantics<arbitrary>], iteration_bounds = array<i64: 2>, scalar_prefetch = 0 : i64, scratch_operands = 0 : i64, tpu.core_type = #tpu.core_type<tc>, window_params = [{transform_indices = @transform_0, window_bounds = array<i64: 256, 128>}, {pipeline_mode = #tpu.pipeline_mode<synchronous>, transform_indices = @transform_1, window_bounds = array<i64: 1, 128>}, {pipeline_mode = #tpu.pipeline_mode<synchronous>, transform_indices = @transform_2, window_bounds = array<i64: 1, 128>}, {pipeline_mode = #tpu.pipeline_mode<synchronous>, transform_indices = @transform_3, window_bounds = array<i64: 128, 128>}, {transform_indices = @transform_4, window_bounds = array<i64: 256, 128>}, {pipeline_mode = #tpu.pipeline_mode<synchronous>, transform_indices = @transform_5, window_bounds = array<i64: 1, 128>}, {pipeline_mode = #tpu.pipeline_mode<synchronous>, transform_indices = @transform_6, window_bounds = array<i64: 1, 128>}]} {
    %c0_i32 = arith.constant 0 : i32
    %0 = arith.cmpi eq, %arg0, %c0_i32 : i32
    %1 = arith.extui %0 : i1 to i32
    %c0_i32_0 = arith.constant 0 : i32
    %2 = arith.cmpi ne, %1, %c0_i32_0 : i32
    scf.if %2 {
      %cst_22 = arith.constant 0.000000e+00 : f32
      %36 = vector.broadcast %cst_22 : f32 to vector<1x128xf32>
      %c0_23 = arith.constant 0 : index
      %c0_24 = arith.constant 0 : index
      %37 = vector.load %arg6[%c0_23, %c0_24] : memref<1x128xf32, #tpu.memory_space<vmem>>, vector<1x128xf32>
      tpu.vector_store %arg6[%c0_23, %c0_24], %36 {strides = array<i32>} : memref<1x128xf32, #tpu.memory_space<vmem>>, vector<1x128xf32>,
      %cst_25 = arith.constant 0.000000e+00 : f32
      %38 = vector.broadcast %cst_25 : f32 to vector<1x128xf32>
      %c0_26 = arith.constant 0 : index
      %c0_27 = arith.constant 0 : index
      %39 = vector.load %arg7[%c0_26, %c0_27] : memref<1x128xf32, #tpu.memory_space<vmem>>, vector<1x128xf32>
      tpu.vector_store %arg7[%c0_26, %c0_27], %38 {strides = array<i32>} : memref<1x128xf32, #tpu.memory_space<vmem>>, vector<1x128xf32>,
    } else {
    }
    %c0 = arith.constant 0 : index
    %c0_1 = arith.constant 0 : index
    %3 = vector.load %arg1[%c0, %c0_1] : memref<256x128xf32, #tpu.memory_space<vmem>>, vector<256x128xf32>
    %c0_2 = arith.constant 0 : index
    %c0_3 = arith.constant 0 : index
    %4 = vector.load %arg2[%c0_2, %c0_3] : memref<1x128xf32, #tpu.memory_space<vmem>>, vector<1x128xf32>
    %5 = vector.broadcast %4 : vector<1x128xf32> to vector<256x128xf32>
    %6 = arith.mulf %3, %5 : vector<256x128xf32>
    %c0_4 = arith.constant 0 : index
    %c0_5 = arith.constant 0 : index
    %7 = vector.load %arg3[%c0_4, %c0_5] : memref<1x128xf32, #tpu.memory_space<vmem>>, vector<1x128xf32>
    %8 = vector.broadcast %7 : vector<1x128xf32> to vector<256x128xf32>
    %9 = arith.addf %6, %8 : vector<256x128xf32>
    %cst = arith.constant 0.000000e+00 : f32
    %10 = vector.broadcast %cst : f32 to vector<256x128xf32>
    %11 = arith.maximumf %9, %10 : vector<256x128xf32>
    %c0_6 = arith.constant 0 : index
    %c0_7 = arith.constant 0 : index
    %12 = vector.load %arg4[%c0_6, %c0_7] : memref<128x128xf32, #tpu.memory_space<vmem>>, vector<128x128xf32>
    %cst_8 = arith.constant dense<0.000000e+00> : vector<256x128xf32>
    %13 = tpu.matmul %11, %12, %cst_8 {dimension_numbers = #tpu.dot_dimension_numbers<[1], [0], [0], [1], [0, 0, 1, 1], [], []>} : vector<256x128xf32>, vector<128x128xf32>, vector<256x128xf32> -> vector<256x128xf32>
    %c0_9 = arith.constant 0 : index
    %c0_10 = arith.constant 0 : index
    %14 = vector.load %arg5[%c0_9, %c0_10] : memref<256x128xf32, #tpu.memory_space<vmem>>, vector<256x128xf32>
    tpu.vector_store %arg5[%c0_9, %c0_10], %13 {strides = array<i32>} : memref<256x128xf32, #tpu.memory_space<vmem>>, vector<256x128xf32>,
    %15 = tpu.iota {dimensions = array<i32: 0>} : vector<256x1xi32>
    %c256_i32 = arith.constant 256 : i32
    %16 = arith.muli %arg0, %c256_i32 : i32
    %17 = vector.broadcast %16 : i32 to vector<256x1xi32>
    %18 = arith.addi %15, %17 : vector<256x1xi32>
    %c512_i32 = arith.constant 512 : i32
    %19 = vector.broadcast %c512_i32 : i32 to vector<256x1xi32>
    %20 = arith.cmpi slt, %18, %19 : vector<256x1xi32>
    %cst_11 = arith.constant 0.000000e+00 : f32
    %21 = vector.shape_cast %20 : vector<256x1xi1> to vector<256x1xi1>
    %22 = vector.broadcast %21 : vector<256x1xi1> to vector<256x128xi1>
    %23 = vector.broadcast %cst_11 : f32 to vector<256x128xf32>
    %24 = arith.select %22, %13, %23 : vector<256x128xi1>, vector<256x128xf32>
    %c0_12 = arith.constant 0 : index
    %c0_13 = arith.constant 0 : index
    %25 = vector.load %arg6[%c0_12, %c0_13] : memref<1x128xf32, #tpu.memory_space<vmem>>, vector<1x128xf32>
    %cst_14 = arith.constant dense<0.000000e+00> : vector<128xf32>
    %26 = vector.multi_reduction <add>, %24, %cst_14 [0] : vector<256x128xf32> to vector<128xf32>
    %27 = vector.shape_cast %26 : vector<128xf32> to vector<1x128xf32>
    %28 = arith.addf %25, %27 : vector<1x128xf32>
    %c0_15 = arith.constant 0 : index
    %c0_16 = arith.constant 0 : index
    %29 = vector.load %arg6[%c0_15, %c0_16] : memref<1x128xf32, #tpu.memory_space<vmem>>, vector<1x128xf32>
    tpu.vector_store %arg6[%c0_15, %c0_16], %28 {strides = array<i32>} : memref<1x128xf32, #tpu.memory_space<vmem>>, vector<1x128xf32>,
    %c0_17 = arith.constant 0 : index
    %c0_18 = arith.constant 0 : index
    %30 = vector.load %arg7[%c0_17, %c0_18] : memref<1x128xf32, #tpu.memory_space<vmem>>, vector<1x128xf32>
    %31 = arith.mulf %24, %24 : vector<256x128xf32>
    %cst_19 = arith.constant dense<0.000000e+00> : vector<128xf32>
    %32 = vector.multi_reduction <add>, %31, %cst_19 [0] : vector<256x128xf32> to vector<128xf32>
    %33 = vector.shape_cast %32 : vector<128xf32> to vector<1x128xf32>
    %34 = arith.addf %30, %33 : vector<1x128xf32>
    %c0_20 = arith.constant 0 : index
    %c0_21 = arith.constant 0 : index
    %35 = vector.load %arg7[%c0_20, %c0_21] : memref<1x128xf32, #tpu.memory_space<vmem>>, vector<1x128xf32>
    tpu.vector_store %arg7[%c0_20, %c0_21], %34 {strides = array<i32>} : memref<1x128xf32, #tpu.memory_space<vmem>>, vector<1x128xf32>,
    return
  }
  func.func @transform_0(%arg0: i32) -> (i32, i32) {
    %c0_i32 = arith.constant 0 : i32
    %c0_i32_0 = arith.constant 0 : i32
    return %arg0, %c0_i32 : i32, i32
  }
  func.func @transform_1(%arg0: i32) -> (i32, i32) {
    %c0_i32 = arith.constant 0 : i32
    %c0_i32_0 = arith.constant 0 : i32
    %c0_i32_1 = arith.constant 0 : i32
    return %c0_i32, %c0_i32_0 : i32, i32
  }
  func.func @transform_2(%arg0: i32) -> (i32, i32) {
    %c0_i32 = arith.constant 0 : i32
    %c0_i32_0 = arith.constant 0 : i32
    %c0_i32_1 = arith.constant 0 : i32
    return %c0_i32, %c0_i32_0 : i32, i32
  }
  func.func @transform_3(%arg0: i32) -> (i32, i32) {
    %c0_i32 = arith.constant 0 : i32
    %c0_i32_0 = arith.constant 0 : i32
    %c0_i32_1 = arith.constant 0 : i32
    return %c0_i32, %c0_i32_0 : i32, i32
  }
  func.func @transform_4(%arg0: i32) -> (i32, i32) {
    %c0_i32 = arith.constant 0 : i32
    %c0_i32_0 = arith.constant 0 : i32
    return %arg0, %c0_i32 : i32, i32
  }
  func.func @transform_5(%arg0: i32) -> (i32, i32) {
    %c0_i32 = arith.constant 0 : i32
    %c0_i32_0 = arith.constant 0 : i32
    %c0_i32_1 = arith.constant 0 : i32
    return %c0_i32, %c0_i32_0 : i32, i32
  }
  func.func @transform_6(%arg0: i32) -> (i32, i32) {
    %c0_i32 = arith.constant 0 : i32
    %c0_i32_0 = arith.constant 0 : i32
    %c0_i32_1 = arith.constant 0 : i32
    return %c0_i32, %c0_i32_0 : i32, i32
  }
}

module attributes {stable_mosaic.version = 11 : i64} {
  func.func @kernel(%arg0: i32, %arg1: memref<1x10x10x128xf32, #tpu.memory_space<vmem>>, %arg2: memref<1x10x10x128xf32, #tpu.memory_space<vmem>>, %arg3: memref<1x10x10x128xf32, #tpu.memory_space<vmem>>, %arg4: memref<1x10x10x128xf32, #tpu.memory_space<vmem>>, %arg5: memref<4x10x10x1xf32, #tpu.memory_space<vmem>>, %arg6: memref<1x128xf32, #tpu.memory_space<vmem>>, %arg7: memref<1x128xf32, #tpu.memory_space<vmem>>, %arg8: memref<9x128x128xf32, #tpu.memory_space<vmem>>, %arg9: memref<1x64x128xf32, #tpu.memory_space<vmem>>, %arg10: memref<1x128xf32, #tpu.memory_space<vmem>>, %arg11: memref<1x128xf32, #tpu.memory_space<vmem>>) attributes {dimension_semantics = [#tpu.dimension_semantics<arbitrary>], iteration_bounds = array<i64: 2>, scalar_prefetch = 0 : i64, scratch_operands = 0 : i64, tpu.core_type = #tpu.core_type<tc>, window_params = [{transform_indices = @transform_0, window_bounds = array<i64: 1, 10, 10, 128>}, {transform_indices = @transform_1, window_bounds = array<i64: 1, 10, 10, 128>}, {transform_indices = @transform_2, window_bounds = array<i64: 1, 10, 10, 128>}, {transform_indices = @transform_3, window_bounds = array<i64: 1, 10, 10, 128>}, {pipeline_mode = #tpu.pipeline_mode<synchronous>, transform_indices = @transform_4, window_bounds = array<i64: 4, 10, 10, 1>}, {pipeline_mode = #tpu.pipeline_mode<synchronous>, transform_indices = @transform_5, window_bounds = array<i64: 1, 128>}, {pipeline_mode = #tpu.pipeline_mode<synchronous>, transform_indices = @transform_6, window_bounds = array<i64: 1, 128>}, {pipeline_mode = #tpu.pipeline_mode<synchronous>, transform_indices = @transform_7, window_bounds = array<i64: 9, 128, 128>}, {transform_indices = @transform_8, window_bounds = array<i64: 1, 64, 128>}, {pipeline_mode = #tpu.pipeline_mode<synchronous>, transform_indices = @transform_9, window_bounds = array<i64: 1, 128>}, {pipeline_mode = #tpu.pipeline_mode<synchronous>, transform_indices = @transform_10, window_bounds = array<i64: 1, 128>}]} {
    %c0_i32 = arith.constant 0 : i32
    %0 = arith.cmpi eq, %arg0, %c0_i32 : i32
    %1 = arith.extui %0 : i1 to i32
    %c0_i32_0 = arith.constant 0 : i32
    %2 = arith.cmpi ne, %1, %c0_i32_0 : i32
    scf.if %2 {
      %cst_81 = arith.constant 0.000000e+00 : f32
      %134 = vector.broadcast %cst_81 : f32 to vector<1x128xf32>
      %c0_82 = arith.constant 0 : index
      %c0_83 = arith.constant 0 : index
      %135 = vector.load %arg10[%c0_82, %c0_83] : memref<1x128xf32, #tpu.memory_space<vmem>>, vector<1x128xf32>
      tpu.vector_store %arg10[%c0_82, %c0_83], %134 {strides = array<i32>} : memref<1x128xf32, #tpu.memory_space<vmem>>, vector<1x128xf32>,
      %cst_84 = arith.constant 0.000000e+00 : f32
      %136 = vector.broadcast %cst_84 : f32 to vector<1x128xf32>
      %c0_85 = arith.constant 0 : index
      %c0_86 = arith.constant 0 : index
      %137 = vector.load %arg11[%c0_85, %c0_86] : memref<1x128xf32, #tpu.memory_space<vmem>>, vector<1x128xf32>
      tpu.vector_store %arg11[%c0_85, %c0_86], %136 {strides = array<i32>} : memref<1x128xf32, #tpu.memory_space<vmem>>, vector<1x128xf32>,
    } else {
    }
    %c0 = arith.constant 0 : index
    %c0_1 = arith.constant 0 : index
    %3 = vector.load %arg6[%c0, %c0_1] : memref<1x128xf32, #tpu.memory_space<vmem>>, vector<1x128xf32>
    %c0_2 = arith.constant 0 : index
    %c0_3 = arith.constant 0 : index
    %4 = vector.load %arg7[%c0_2, %c0_3] : memref<1x128xf32, #tpu.memory_space<vmem>>, vector<1x128xf32>
    %c0_4 = arith.constant 0 : index
    %c0_5 = arith.constant 0 : index
    %c0_6 = arith.constant 0 : index
    %c0_7 = arith.constant 0 : index
    %5 = vector.load %arg1[%c0_4, %c0_5, %c0_6, %c0_7] : memref<1x10x10x128xf32, #tpu.memory_space<vmem>>, vector<1x10x10x128xf32>
    %c0_8 = arith.constant 0 : index
    %c0_9 = arith.constant 0 : index
    %c0_10 = arith.constant 0 : index
    %c0_11 = arith.constant 0 : index
    %6 = vector.load %arg5[%c0_8, %c0_9, %c0_10, %c0_11] : memref<4x10x10x1xf32, #tpu.memory_space<vmem>>, vector<1x10x10x1xf32>
    %7 = vector.shape_cast %6 : vector<1x10x10x1xf32> to vector<10x10x1xf32>
    %8 = vector.shape_cast %3 : vector<1x128xf32> to vector<1x1x1x128xf32>
    %9 = vector.broadcast %8 : vector<1x1x1x128xf32> to vector<1x10x10x128xf32>
    %10 = arith.mulf %5, %9 : vector<1x10x10x128xf32>
    %11 = vector.shape_cast %4 : vector<1x128xf32> to vector<1x1x1x128xf32>
    %12 = vector.broadcast %11 : vector<1x1x1x128xf32> to vector<1x10x10x128xf32>
    %13 = arith.addf %10, %12 : vector<1x10x10x128xf32>
    %cst = arith.constant 0.000000e+00 : f32
    %14 = vector.broadcast %cst : f32 to vector<1x10x10x128xf32>
    %15 = arith.maximumf %13, %14 : vector<1x10x10x128xf32>
    %16 = vector.shape_cast %7 : vector<10x10x1xf32> to vector<1x10x10x1xf32>
    %17 = vector.broadcast %16 : vector<1x10x10x1xf32> to vector<1x10x10x128xf32>
    %18 = arith.mulf %15, %17 : vector<1x10x10x128xf32>
    %19 = vector.shape_cast %18 : vector<1x10x10x128xf32> to vector<10x10x128xf32>
    %c0_12 = arith.constant 0 : index
    %c0_13 = arith.constant 0 : index
    %c0_14 = arith.constant 0 : index
    %c0_15 = arith.constant 0 : index
    %20 = vector.load %arg2[%c0_12, %c0_13, %c0_14, %c0_15] : memref<1x10x10x128xf32, #tpu.memory_space<vmem>>, vector<1x10x10x128xf32>
    %c1 = arith.constant 1 : index
    %c0_16 = arith.constant 0 : index
    %c0_17 = arith.constant 0 : index
    %c0_18 = arith.constant 0 : index
    %21 = vector.load %arg5[%c1, %c0_16, %c0_17, %c0_18] : memref<4x10x10x1xf32, #tpu.memory_space<vmem>>, vector<1x10x10x1xf32>
    %22 = vector.shape_cast %21 : vector<1x10x10x1xf32> to vector<10x10x1xf32>
    %23 = vector.shape_cast %3 : vector<1x128xf32> to vector<1x1x1x128xf32>
    %24 = vector.broadcast %23 : vector<1x1x1x128xf32> to vector<1x10x10x128xf32>
    %25 = arith.mulf %20, %24 : vector<1x10x10x128xf32>
    %26 = vector.shape_cast %4 : vector<1x128xf32> to vector<1x1x1x128xf32>
    %27 = vector.broadcast %26 : vector<1x1x1x128xf32> to vector<1x10x10x128xf32>
    %28 = arith.addf %25, %27 : vector<1x10x10x128xf32>
    %cst_19 = arith.constant 0.000000e+00 : f32
    %29 = vector.broadcast %cst_19 : f32 to vector<1x10x10x128xf32>
    %30 = arith.maximumf %28, %29 : vector<1x10x10x128xf32>
    %31 = vector.shape_cast %22 : vector<10x10x1xf32> to vector<1x10x10x1xf32>
    %32 = vector.broadcast %31 : vector<1x10x10x1xf32> to vector<1x10x10x128xf32>
    %33 = arith.mulf %30, %32 : vector<1x10x10x128xf32>
    %34 = vector.shape_cast %33 : vector<1x10x10x128xf32> to vector<10x10x128xf32>
    %c0_20 = arith.constant 0 : index
    %c0_21 = arith.constant 0 : index
    %c0_22 = arith.constant 0 : index
    %c0_23 = arith.constant 0 : index
    %35 = vector.load %arg3[%c0_20, %c0_21, %c0_22, %c0_23] : memref<1x10x10x128xf32, #tpu.memory_space<vmem>>, vector<1x10x10x128xf32>
    %c2 = arith.constant 2 : index
    %c0_24 = arith.constant 0 : index
    %c0_25 = arith.constant 0 : index
    %c0_26 = arith.constant 0 : index
    %36 = vector.load %arg5[%c2, %c0_24, %c0_25, %c0_26] : memref<4x10x10x1xf32, #tpu.memory_space<vmem>>, vector<1x10x10x1xf32>
    %37 = vector.shape_cast %36 : vector<1x10x10x1xf32> to vector<10x10x1xf32>
    %38 = vector.shape_cast %3 : vector<1x128xf32> to vector<1x1x1x128xf32>
    %39 = vector.broadcast %38 : vector<1x1x1x128xf32> to vector<1x10x10x128xf32>
    %40 = arith.mulf %35, %39 : vector<1x10x10x128xf32>
    %41 = vector.shape_cast %4 : vector<1x128xf32> to vector<1x1x1x128xf32>
    %42 = vector.broadcast %41 : vector<1x1x1x128xf32> to vector<1x10x10x128xf32>
    %43 = arith.addf %40, %42 : vector<1x10x10x128xf32>
    %cst_27 = arith.constant 0.000000e+00 : f32
    %44 = vector.broadcast %cst_27 : f32 to vector<1x10x10x128xf32>
    %45 = arith.maximumf %43, %44 : vector<1x10x10x128xf32>
    %46 = vector.shape_cast %37 : vector<10x10x1xf32> to vector<1x10x10x1xf32>
    %47 = vector.broadcast %46 : vector<1x10x10x1xf32> to vector<1x10x10x128xf32>
    %48 = arith.mulf %45, %47 : vector<1x10x10x128xf32>
    %49 = vector.shape_cast %48 : vector<1x10x10x128xf32> to vector<10x10x128xf32>
    %c0_28 = arith.constant 0 : index
    %c0_29 = arith.constant 0 : index
    %c0_30 = arith.constant 0 : index
    %c0_31 = arith.constant 0 : index
    %50 = vector.load %arg4[%c0_28, %c0_29, %c0_30, %c0_31] : memref<1x10x10x128xf32, #tpu.memory_space<vmem>>, vector<1x10x10x128xf32>
    %c3 = arith.constant 3 : index
    %c0_32 = arith.constant 0 : index
    %c0_33 = arith.constant 0 : index
    %c0_34 = arith.constant 0 : index
    %51 = vector.load %arg5[%c3, %c0_32, %c0_33, %c0_34] : memref<4x10x10x1xf32, #tpu.memory_space<vmem>>, vector<1x10x10x1xf32>
    %52 = vector.shape_cast %51 : vector<1x10x10x1xf32> to vector<10x10x1xf32>
    %53 = vector.shape_cast %3 : vector<1x128xf32> to vector<1x1x1x128xf32>
    %54 = vector.broadcast %53 : vector<1x1x1x128xf32> to vector<1x10x10x128xf32>
    %55 = arith.mulf %50, %54 : vector<1x10x10x128xf32>
    %56 = vector.shape_cast %4 : vector<1x128xf32> to vector<1x1x1x128xf32>
    %57 = vector.broadcast %56 : vector<1x1x1x128xf32> to vector<1x10x10x128xf32>
    %58 = arith.addf %55, %57 : vector<1x10x10x128xf32>
    %cst_35 = arith.constant 0.000000e+00 : f32
    %59 = vector.broadcast %cst_35 : f32 to vector<1x10x10x128xf32>
    %60 = arith.maximumf %58, %59 : vector<1x10x10x128xf32>
    %61 = vector.shape_cast %52 : vector<10x10x1xf32> to vector<1x10x10x1xf32>
    %62 = vector.broadcast %61 : vector<1x10x10x1xf32> to vector<1x10x10x128xf32>
    %63 = arith.mulf %60, %62 : vector<1x10x10x128xf32>
    %64 = vector.shape_cast %63 : vector<1x10x10x128xf32> to vector<10x10x128xf32>
    %cst_36 = arith.constant 0.000000e+00 : f32
    %65 = vector.broadcast %cst_36 : f32 to vector<64x128xf32>
    %66 = vector.extract_strided_slice %19 {offsets = [0, 0, 0], sizes = [8, 8, 128], strides = [1, 1, 1]} : vector<10x10x128xf32> to vector<8x8x128xf32>
    %67 = vector.shape_cast %66 : vector<8x8x128xf32> to vector<64x128xf32>
    %c0_37 = arith.constant 0 : index
    %c0_38 = arith.constant 0 : index
    %c0_39 = arith.constant 0 : index
    %68 = vector.load %arg8[%c0_37, %c0_38, %c0_39] : memref<9x128x128xf32, #tpu.memory_space<vmem>>, vector<1x128x128xf32>
    %69 = vector.shape_cast %68 : vector<1x128x128xf32> to vector<128x128xf32>
    %cst_40 = arith.constant dense<0.000000e+00> : vector<64x128xf32>
    %70 = tpu.matmul %67, %69, %cst_40 {dimension_numbers = #tpu.dot_dimension_numbers<[1], [0], [0], [1], [0, 0, 1, 1], [], []>} : vector<64x128xf32>, vector<128x128xf32>, vector<64x128xf32> -> vector<64x128xf32>
    %71 = arith.addf %65, %70 : vector<64x128xf32>
    %72 = vector.extract_strided_slice %34 {offsets = [0, 0, 0], sizes = [8, 8, 128], strides = [1, 1, 1]} : vector<10x10x128xf32> to vector<8x8x128xf32>
    %73 = vector.shape_cast %72 : vector<8x8x128xf32> to vector<64x128xf32>
    %c1_41 = arith.constant 1 : index
    %c0_42 = arith.constant 0 : index
    %c0_43 = arith.constant 0 : index
    %74 = vector.load %arg8[%c1_41, %c0_42, %c0_43] : memref<9x128x128xf32, #tpu.memory_space<vmem>>, vector<1x128x128xf32>
    %75 = vector.shape_cast %74 : vector<1x128x128xf32> to vector<128x128xf32>
    %cst_44 = arith.constant dense<0.000000e+00> : vector<64x128xf32>
    %76 = tpu.matmul %73, %75, %cst_44 {dimension_numbers = #tpu.dot_dimension_numbers<[1], [0], [0], [1], [0, 0, 1, 1], [], []>} : vector<64x128xf32>, vector<128x128xf32>, vector<64x128xf32> -> vector<64x128xf32>
    %77 = arith.addf %71, %76 : vector<64x128xf32>
    %78 = vector.extract_strided_slice %19 {offsets = [0, 1, 0], sizes = [8, 8, 128], strides = [1, 1, 1]} : vector<10x10x128xf32> to vector<8x8x128xf32>
    %79 = vector.shape_cast %78 : vector<8x8x128xf32> to vector<64x128xf32>
    %c2_45 = arith.constant 2 : index
    %c0_46 = arith.constant 0 : index
    %c0_47 = arith.constant 0 : index
    %80 = vector.load %arg8[%c2_45, %c0_46, %c0_47] : memref<9x128x128xf32, #tpu.memory_space<vmem>>, vector<1x128x128xf32>
    %81 = vector.shape_cast %80 : vector<1x128x128xf32> to vector<128x128xf32>
    %cst_48 = arith.constant dense<0.000000e+00> : vector<64x128xf32>
    %82 = tpu.matmul %79, %81, %cst_48 {dimension_numbers = #tpu.dot_dimension_numbers<[1], [0], [0], [1], [0, 0, 1, 1], [], []>} : vector<64x128xf32>, vector<128x128xf32>, vector<64x128xf32> -> vector<64x128xf32>
    %83 = arith.addf %77, %82 : vector<64x128xf32>
    %84 = vector.extract_strided_slice %49 {offsets = [0, 0, 0], sizes = [8, 8, 128], strides = [1, 1, 1]} : vector<10x10x128xf32> to vector<8x8x128xf32>
    %85 = vector.shape_cast %84 : vector<8x8x128xf32> to vector<64x128xf32>
    %c3_49 = arith.constant 3 : index
    %c0_50 = arith.constant 0 : index
    %c0_51 = arith.constant 0 : index
    %86 = vector.load %arg8[%c3_49, %c0_50, %c0_51] : memref<9x128x128xf32, #tpu.memory_space<vmem>>, vector<1x128x128xf32>
    %87 = vector.shape_cast %86 : vector<1x128x128xf32> to vector<128x128xf32>
    %cst_52 = arith.constant dense<0.000000e+00> : vector<64x128xf32>
    %88 = tpu.matmul %85, %87, %cst_52 {dimension_numbers = #tpu.dot_dimension_numbers<[1], [0], [0], [1], [0, 0, 1, 1], [], []>} : vector<64x128xf32>, vector<128x128xf32>, vector<64x128xf32> -> vector<64x128xf32>
    %89 = arith.addf %83, %88 : vector<64x128xf32>
    %90 = vector.extract_strided_slice %64 {offsets = [0, 0, 0], sizes = [8, 8, 128], strides = [1, 1, 1]} : vector<10x10x128xf32> to vector<8x8x128xf32>
    %91 = vector.shape_cast %90 : vector<8x8x128xf32> to vector<64x128xf32>
    %c4 = arith.constant 4 : index
    %c0_53 = arith.constant 0 : index
    %c0_54 = arith.constant 0 : index
    %92 = vector.load %arg8[%c4, %c0_53, %c0_54] : memref<9x128x128xf32, #tpu.memory_space<vmem>>, vector<1x128x128xf32>
    %93 = vector.shape_cast %92 : vector<1x128x128xf32> to vector<128x128xf32>
    %cst_55 = arith.constant dense<0.000000e+00> : vector<64x128xf32>
    %94 = tpu.matmul %91, %93, %cst_55 {dimension_numbers = #tpu.dot_dimension_numbers<[1], [0], [0], [1], [0, 0, 1, 1], [], []>} : vector<64x128xf32>, vector<128x128xf32>, vector<64x128xf32> -> vector<64x128xf32>
    %95 = arith.addf %89, %94 : vector<64x128xf32>
    %96 = vector.extract_strided_slice %49 {offsets = [0, 1, 0], sizes = [8, 8, 128], strides = [1, 1, 1]} : vector<10x10x128xf32> to vector<8x8x128xf32>
    %97 = vector.shape_cast %96 : vector<8x8x128xf32> to vector<64x128xf32>
    %c5 = arith.constant 5 : index
    %c0_56 = arith.constant 0 : index
    %c0_57 = arith.constant 0 : index
    %98 = vector.load %arg8[%c5, %c0_56, %c0_57] : memref<9x128x128xf32, #tpu.memory_space<vmem>>, vector<1x128x128xf32>
    %99 = vector.shape_cast %98 : vector<1x128x128xf32> to vector<128x128xf32>
    %cst_58 = arith.constant dense<0.000000e+00> : vector<64x128xf32>
    %100 = tpu.matmul %97, %99, %cst_58 {dimension_numbers = #tpu.dot_dimension_numbers<[1], [0], [0], [1], [0, 0, 1, 1], [], []>} : vector<64x128xf32>, vector<128x128xf32>, vector<64x128xf32> -> vector<64x128xf32>
    %101 = arith.addf %95, %100 : vector<64x128xf32>
    %102 = vector.extract_strided_slice %19 {offsets = [1, 0, 0], sizes = [8, 8, 128], strides = [1, 1, 1]} : vector<10x10x128xf32> to vector<8x8x128xf32>
    %103 = vector.shape_cast %102 : vector<8x8x128xf32> to vector<64x128xf32>
    %c6 = arith.constant 6 : index
    %c0_59 = arith.constant 0 : index
    %c0_60 = arith.constant 0 : index
    %104 = vector.load %arg8[%c6, %c0_59, %c0_60] : memref<9x128x128xf32, #tpu.memory_space<vmem>>, vector<1x128x128xf32>
    %105 = vector.shape_cast %104 : vector<1x128x128xf32> to vector<128x128xf32>
    %cst_61 = arith.constant dense<0.000000e+00> : vector<64x128xf32>
    %106 = tpu.matmul %103, %105, %cst_61 {dimension_numbers = #tpu.dot_dimension_numbers<[1], [0], [0], [1], [0, 0, 1, 1], [], []>} : vector<64x128xf32>, vector<128x128xf32>, vector<64x128xf32> -> vector<64x128xf32>
    %107 = arith.addf %101, %106 : vector<64x128xf32>
    %108 = vector.extract_strided_slice %34 {offsets = [1, 0, 0], sizes = [8, 8, 128], strides = [1, 1, 1]} : vector<10x10x128xf32> to vector<8x8x128xf32>
    %109 = vector.shape_cast %108 : vector<8x8x128xf32> to vector<64x128xf32>
    %c7 = arith.constant 7 : index
    %c0_62 = arith.constant 0 : index
    %c0_63 = arith.constant 0 : index
    %110 = vector.load %arg8[%c7, %c0_62, %c0_63] : memref<9x128x128xf32, #tpu.memory_space<vmem>>, vector<1x128x128xf32>
    %111 = vector.shape_cast %110 : vector<1x128x128xf32> to vector<128x128xf32>
    %cst_64 = arith.constant dense<0.000000e+00> : vector<64x128xf32>
    %112 = tpu.matmul %109, %111, %cst_64 {dimension_numbers = #tpu.dot_dimension_numbers<[1], [0], [0], [1], [0, 0, 1, 1], [], []>} : vector<64x128xf32>, vector<128x128xf32>, vector<64x128xf32> -> vector<64x128xf32>
    %113 = arith.addf %107, %112 : vector<64x128xf32>
    %114 = vector.extract_strided_slice %19 {offsets = [1, 1, 0], sizes = [8, 8, 128], strides = [1, 1, 1]} : vector<10x10x128xf32> to vector<8x8x128xf32>
    %115 = vector.shape_cast %114 : vector<8x8x128xf32> to vector<64x128xf32>
    %c8 = arith.constant 8 : index
    %c0_65 = arith.constant 0 : index
    %c0_66 = arith.constant 0 : index
    %116 = vector.load %arg8[%c8, %c0_65, %c0_66] : memref<9x128x128xf32, #tpu.memory_space<vmem>>, vector<1x128x128xf32>
    %117 = vector.shape_cast %116 : vector<1x128x128xf32> to vector<128x128xf32>
    %cst_67 = arith.constant dense<0.000000e+00> : vector<64x128xf32>
    %118 = tpu.matmul %115, %117, %cst_67 {dimension_numbers = #tpu.dot_dimension_numbers<[1], [0], [0], [1], [0, 0, 1, 1], [], []>} : vector<64x128xf32>, vector<128x128xf32>, vector<64x128xf32> -> vector<64x128xf32>
    %119 = arith.addf %113, %118 : vector<64x128xf32>
    %c0_68 = arith.constant 0 : index
    %c0_69 = arith.constant 0 : index
    %c0_70 = arith.constant 0 : index
    %120 = vector.load %arg9[%c0_68, %c0_69, %c0_70] : memref<1x64x128xf32, #tpu.memory_space<vmem>>, vector<1x64x128xf32>
    %121 = vector.shape_cast %120 : vector<1x64x128xf32> to vector<64x128xf32>
    %122 = vector.shape_cast %119 : vector<64x128xf32> to vector<1x64x128xf32>
    tpu.vector_store %arg9[%c0_68, %c0_69, %c0_70], %122 {strides = array<i32>} : memref<1x64x128xf32, #tpu.memory_space<vmem>>, vector<1x64x128xf32>,
    %c0_71 = arith.constant 0 : index
    %c0_72 = arith.constant 0 : index
    %123 = vector.load %arg10[%c0_71, %c0_72] : memref<1x128xf32, #tpu.memory_space<vmem>>, vector<1x128xf32>
    %cst_73 = arith.constant dense<0.000000e+00> : vector<128xf32>
    %124 = vector.multi_reduction <add>, %119, %cst_73 [0] : vector<64x128xf32> to vector<128xf32>
    %125 = vector.shape_cast %124 : vector<128xf32> to vector<1x128xf32>
    %126 = arith.addf %123, %125 : vector<1x128xf32>
    %c0_74 = arith.constant 0 : index
    %c0_75 = arith.constant 0 : index
    %127 = vector.load %arg10[%c0_74, %c0_75] : memref<1x128xf32, #tpu.memory_space<vmem>>, vector<1x128xf32>
    tpu.vector_store %arg10[%c0_74, %c0_75], %126 {strides = array<i32>} : memref<1x128xf32, #tpu.memory_space<vmem>>, vector<1x128xf32>,
    %c0_76 = arith.constant 0 : index
    %c0_77 = arith.constant 0 : index
    %128 = vector.load %arg11[%c0_76, %c0_77] : memref<1x128xf32, #tpu.memory_space<vmem>>, vector<1x128xf32>
    %129 = arith.mulf %119, %119 : vector<64x128xf32>
    %cst_78 = arith.constant dense<0.000000e+00> : vector<128xf32>
    %130 = vector.multi_reduction <add>, %129, %cst_78 [0] : vector<64x128xf32> to vector<128xf32>
    %131 = vector.shape_cast %130 : vector<128xf32> to vector<1x128xf32>
    %132 = arith.addf %128, %131 : vector<1x128xf32>
    %c0_79 = arith.constant 0 : index
    %c0_80 = arith.constant 0 : index
    %133 = vector.load %arg11[%c0_79, %c0_80] : memref<1x128xf32, #tpu.memory_space<vmem>>, vector<1x128xf32>
    tpu.vector_store %arg11[%c0_79, %c0_80], %132 {strides = array<i32>} : memref<1x128xf32, #tpu.memory_space<vmem>>, vector<1x128xf32>,
    return
  }
  func.func @transform_0(%arg0: i32) -> (i32, i32, i32, i32) {
    %c0_i32 = arith.constant 0 : i32
    %c0_i32_0 = arith.constant 0 : i32
    %c0_i32_1 = arith.constant 0 : i32
    %c0_i32_2 = arith.constant 0 : i32
    return %arg0, %c0_i32, %c0_i32_0, %c0_i32_1 : i32, i32, i32, i32
  }
  func.func @transform_1(%arg0: i32) -> (i32, i32, i32, i32) {
    %c0_i32 = arith.constant 0 : i32
    %c0_i32_0 = arith.constant 0 : i32
    %c0_i32_1 = arith.constant 0 : i32
    %c0_i32_2 = arith.constant 0 : i32
    return %arg0, %c0_i32, %c0_i32_0, %c0_i32_1 : i32, i32, i32, i32
  }
  func.func @transform_2(%arg0: i32) -> (i32, i32, i32, i32) {
    %c0_i32 = arith.constant 0 : i32
    %c0_i32_0 = arith.constant 0 : i32
    %c0_i32_1 = arith.constant 0 : i32
    %c0_i32_2 = arith.constant 0 : i32
    return %arg0, %c0_i32, %c0_i32_0, %c0_i32_1 : i32, i32, i32, i32
  }
  func.func @transform_3(%arg0: i32) -> (i32, i32, i32, i32) {
    %c0_i32 = arith.constant 0 : i32
    %c0_i32_0 = arith.constant 0 : i32
    %c0_i32_1 = arith.constant 0 : i32
    %c0_i32_2 = arith.constant 0 : i32
    return %arg0, %c0_i32, %c0_i32_0, %c0_i32_1 : i32, i32, i32, i32
  }
  func.func @transform_4(%arg0: i32) -> (i32, i32, i32, i32) {
    %c0_i32 = arith.constant 0 : i32
    %c0_i32_0 = arith.constant 0 : i32
    %c0_i32_1 = arith.constant 0 : i32
    %c0_i32_2 = arith.constant 0 : i32
    %c0_i32_3 = arith.constant 0 : i32
    return %c0_i32, %c0_i32_0, %c0_i32_1, %c0_i32_2 : i32, i32, i32, i32
  }
  func.func @transform_5(%arg0: i32) -> (i32, i32) {
    %c0_i32 = arith.constant 0 : i32
    %c0_i32_0 = arith.constant 0 : i32
    %c0_i32_1 = arith.constant 0 : i32
    return %c0_i32, %c0_i32_0 : i32, i32
  }
  func.func @transform_6(%arg0: i32) -> (i32, i32) {
    %c0_i32 = arith.constant 0 : i32
    %c0_i32_0 = arith.constant 0 : i32
    %c0_i32_1 = arith.constant 0 : i32
    return %c0_i32, %c0_i32_0 : i32, i32
  }
  func.func @transform_7(%arg0: i32) -> (i32, i32, i32) {
    %c0_i32 = arith.constant 0 : i32
    %c0_i32_0 = arith.constant 0 : i32
    %c0_i32_1 = arith.constant 0 : i32
    %c0_i32_2 = arith.constant 0 : i32
    return %c0_i32, %c0_i32_0, %c0_i32_1 : i32, i32, i32
  }
  func.func @transform_8(%arg0: i32) -> (i32, i32, i32) {
    %c0_i32 = arith.constant 0 : i32
    %c0_i32_0 = arith.constant 0 : i32
    %c0_i32_1 = arith.constant 0 : i32
    return %arg0, %c0_i32, %c0_i32_0 : i32, i32, i32
  }
  func.func @transform_9(%arg0: i32) -> (i32, i32) {
    %c0_i32 = arith.constant 0 : i32
    %c0_i32_0 = arith.constant 0 : i32
    %c0_i32_1 = arith.constant 0 : i32
    return %c0_i32, %c0_i32_0 : i32, i32
  }
  func.func @transform_10(%arg0: i32) -> (i32, i32) {
    %c0_i32 = arith.constant 0 : i32
    %c0_i32_0 = arith.constant 0 : i32
    %c0_i32_1 = arith.constant 0 : i32
    return %c0_i32, %c0_i32_0 : i32, i32
  }
}

module attributes {stable_mosaic.version = 11 : i64} {
  func.func @_tail_kernel(%arg0: i32, %arg1: memref<128x128xf32, #tpu.memory_space<vmem>>, %arg2: memref<128x128xf32, #tpu.memory_space<vmem>>, %arg3: memref<1x128xf32, #tpu.memory_space<vmem>>, %arg4: memref<1x128xf32, #tpu.memory_space<vmem>>, %arg5: memref<1x128xf32, #tpu.memory_space<vmem>>, %arg6: memref<1x128xf32, #tpu.memory_space<vmem>>, %arg7: memref<256x128xf32, #tpu.memory_space<vmem>>, %arg8: memref<128x128xf32, #tpu.memory_space<vmem>>) attributes {dimension_semantics = [#tpu.dimension_semantics<parallel>], iteration_bounds = array<i64: 1>, scalar_prefetch = 0 : i64, scratch_operands = 0 : i64, tpu.core_type = #tpu.core_type<tc>, window_params = [{transform_indices = @transform_0, window_bounds = array<i64: 128, 128>}, {transform_indices = @transform_1, window_bounds = array<i64: 128, 128>}, {pipeline_mode = #tpu.pipeline_mode<synchronous>, transform_indices = @transform_2, window_bounds = array<i64: 1, 128>}, {pipeline_mode = #tpu.pipeline_mode<synchronous>, transform_indices = @transform_3, window_bounds = array<i64: 1, 128>}, {pipeline_mode = #tpu.pipeline_mode<synchronous>, transform_indices = @transform_4, window_bounds = array<i64: 1, 128>}, {pipeline_mode = #tpu.pipeline_mode<synchronous>, transform_indices = @transform_5, window_bounds = array<i64: 1, 128>}, {pipeline_mode = #tpu.pipeline_mode<synchronous>, transform_indices = @transform_6, window_bounds = array<i64: 256, 128>}, {transform_indices = @transform_7, window_bounds = array<i64: 128, 128>}]} {
    %c0 = arith.constant 0 : index
    %c0_0 = arith.constant 0 : index
    %0 = vector.load %arg1[%c0, %c0_0] : memref<128x128xf32, #tpu.memory_space<vmem>>, vector<128x128xf32>
    %c0_1 = arith.constant 0 : index
    %c0_2 = arith.constant 0 : index
    %1 = vector.load %arg3[%c0_1, %c0_2] : memref<1x128xf32, #tpu.memory_space<vmem>>, vector<1x128xf32>
    %2 = vector.broadcast %1 : vector<1x128xf32> to vector<128x128xf32>
    %3 = arith.mulf %0, %2 : vector<128x128xf32>
    %c0_3 = arith.constant 0 : index
    %c0_4 = arith.constant 0 : index
    %4 = vector.load %arg4[%c0_3, %c0_4] : memref<1x128xf32, #tpu.memory_space<vmem>>, vector<1x128xf32>
    %5 = vector.broadcast %4 : vector<1x128xf32> to vector<128x128xf32>
    %6 = arith.addf %3, %5 : vector<128x128xf32>
    %cst = arith.constant 0.000000e+00 : f32
    %7 = vector.broadcast %cst : f32 to vector<128x128xf32>
    %8 = arith.maximumf %6, %7 : vector<128x128xf32>
    %c0_5 = arith.constant 0 : index
    %c0_6 = arith.constant 0 : index
    %9 = vector.load %arg2[%c0_5, %c0_6] : memref<128x128xf32, #tpu.memory_space<vmem>>, vector<128x128xf32>
    %c0_7 = arith.constant 0 : index
    %c0_8 = arith.constant 0 : index
    %10 = vector.load %arg5[%c0_7, %c0_8] : memref<1x128xf32, #tpu.memory_space<vmem>>, vector<1x128xf32>
    %11 = vector.broadcast %10 : vector<1x128xf32> to vector<128x128xf32>
    %12 = arith.mulf %9, %11 : vector<128x128xf32>
    %c0_9 = arith.constant 0 : index
    %c0_10 = arith.constant 0 : index
    %13 = vector.load %arg6[%c0_9, %c0_10] : memref<1x128xf32, #tpu.memory_space<vmem>>, vector<1x128xf32>
    %14 = vector.broadcast %13 : vector<1x128xf32> to vector<128x128xf32>
    %15 = arith.addf %12, %14 : vector<128x128xf32>
    %cst_11 = arith.constant 0.000000e+00 : f32
    %16 = vector.broadcast %cst_11 : f32 to vector<128x128xf32>
    %17 = arith.maximumf %15, %16 : vector<128x128xf32>
    %18 = tpu.concatenate %8, %17 in 1 : vector<128x128xf32>, vector<128x128xf32> -> vector<128x256xf32>
    %c0_12 = arith.constant 0 : index
    %c0_13 = arith.constant 0 : index
    %19 = vector.load %arg7[%c0_12, %c0_13] : memref<256x128xf32, #tpu.memory_space<vmem>>, vector<256x128xf32>
    %cst_14 = arith.constant dense<0.000000e+00> : vector<128x128xf32>
    %20 = tpu.matmul %18, %19, %cst_14 {dimension_numbers = #tpu.dot_dimension_numbers<[1], [0], [0], [1], [0, 0, 1, 1], [], []>} : vector<128x256xf32>, vector<256x128xf32>, vector<128x128xf32> -> vector<128x128xf32>
    %c0_15 = arith.constant 0 : index
    %c0_16 = arith.constant 0 : index
    %21 = vector.load %arg8[%c0_15, %c0_16] : memref<128x128xf32, #tpu.memory_space<vmem>>, vector<128x128xf32>
    tpu.vector_store %arg8[%c0_15, %c0_16], %20 {strides = array<i32>} : memref<128x128xf32, #tpu.memory_space<vmem>>, vector<128x128xf32>,
    return
  }
  func.func @transform_0(%arg0: i32) -> (i32, i32) {
    %c0_i32 = arith.constant 0 : i32
    %c0_i32_0 = arith.constant 0 : i32
    return %arg0, %c0_i32 : i32, i32
  }
  func.func @transform_1(%arg0: i32) -> (i32, i32) {
    %c0_i32 = arith.constant 0 : i32
    %c0_i32_0 = arith.constant 0 : i32
    return %arg0, %c0_i32 : i32, i32
  }
  func.func @transform_2(%arg0: i32) -> (i32, i32) {
    %c0_i32 = arith.constant 0 : i32
    %c0_i32_0 = arith.constant 0 : i32
    %c0_i32_1 = arith.constant 0 : i32
    return %c0_i32, %c0_i32_0 : i32, i32
  }
  func.func @transform_3(%arg0: i32) -> (i32, i32) {
    %c0_i32 = arith.constant 0 : i32
    %c0_i32_0 = arith.constant 0 : i32
    %c0_i32_1 = arith.constant 0 : i32
    return %c0_i32, %c0_i32_0 : i32, i32
  }
  func.func @transform_4(%arg0: i32) -> (i32, i32) {
    %c0_i32 = arith.constant 0 : i32
    %c0_i32_0 = arith.constant 0 : i32
    %c0_i32_1 = arith.constant 0 : i32
    return %c0_i32, %c0_i32_0 : i32, i32
  }
  func.func @transform_5(%arg0: i32) -> (i32, i32) {
    %c0_i32 = arith.constant 0 : i32
    %c0_i32_0 = arith.constant 0 : i32
    %c0_i32_1 = arith.constant 0 : i32
    return %c0_i32, %c0_i32_0 : i32, i32
  }
  func.func @transform_6(%arg0: i32) -> (i32, i32) {
    %c0_i32 = arith.constant 0 : i32
    %c0_i32_0 = arith.constant 0 : i32
    %c0_i32_1 = arith.constant 0 : i32
    return %c0_i32, %c0_i32_0 : i32, i32
  }
  func.func @transform_7(%arg0: i32) -> (i32, i32) {
    %c0_i32 = arith.constant 0 : i32
    %c0_i32_0 = arith.constant 0 : i32
    return %arg0, %c0_i32 : i32, i32
  }
}

</mosaic_0001>

<llo_original>
// kernel: _big_res_block.4
$region0: #{_big_res_block.4}
  #allocation0 [shape = 'u32[]', space=smem, size = 0x4, offset = 0x4, fixed_abs, tag = 'smem constant byte address 0x4 - core index']
  #allocation1 [shape = 'u32[144,128]{1,0:T(1,128)}', space=vmem, size = 0x12000, scoped, tag = 'internal scratch']
  %s0 = inlined_call_operand.vmem [shape: f32[512,128], index: 0, kind: input, shape index: {}]
  %s1 = inlined_call_operand.vmem [shape: f32[1,128], index: 1, kind: output, shape index: {0}]
  %s2 = inlined_call_operand.vmem [shape: f32[1,128], index: 2, kind: output, shape index: {1}]
  %3 = xla_tuple %s1, %s2
  %s4 = sld [smem:[#allocation0]]
  $region49: #{_big_res_block.4} parent=0
    _
  %s6 = ssub.s32 1, %s4
  %s7 = scalar_select 0, %s6, %s4
  loop: start=0, step=1, limit=4
  $region2: #{_big_res_block.4} parent=0 // loop_pre_header
    _
  $region3: #{_big_res_block.4} parent=0 // loop_header
    %s9 = sphi 0, %s13
    %p10 = scmp.ge.s32.totalorder %s9, 4
    %s19 = sphi 0, %s21
    %s22 = sphi 0, %s19
    %s23 = sphi 0, %s22
    %s39 = sphi 0, %s23
    %s43 = sphi 0, %s43
    %s45 = sphi 0, %s43
    %s46 = sphi 0, %s45
    %s60 = sphi 0, %s46
    %s64 = sphi 0, %s64
    %s66 = sphi 0, %s64
    %s67 = sphi 0, %s66
    %s81 = sphi 0, %s67
  $region4: #{_big_res_block.4} parent=0 // loop_header_branch
    %12 = sbr.rel (%p10) target = $region8
  $region5: #{_big_res_block.4} parent=0 // loop_body
    %s14 = ssub.s32 %s9, 1
    %s15 = ssub.s32 %s9, 2
    %s16 = sadd.s32 %s9, 1
    %s17 = ssub.s32 %s9, %s16
    %p18 = scmp.eq.s32.totalorder %s17, 0
    %s20 = sadd.s32 %s19, 1
    %s21 = scalar_select %p18, %s19, %s20
    %p24 = pneg %p18
    %p25 = scmp.eq.s32.totalorder %s9, 1
    %p26 = por %p24, %p25
    %p27 = scmp.ne.s32.totalorder %s19, %s22
    %p28 = scmp.eq.s32.totalorder %s9, 0
    %p29 = por %p27, %p28
    %p30 = scmp.ne.s32.totalorder %s19, %s22
    %p31 = scmp.eq.s32.totalorder %s14, 1
    %p32 = por %p30, %p31
    %p33 = scmp.ne.s32.totalorder %s22, %s23
    %p34 = scmp.eq.s32.totalorder %s14, 0
    %p35 = por %p33, %p34
    %p36 = scmp.ne.s32.totalorder %s22, %s23
    %p37 = scmp.eq.s32.totalorder %s15, 1
    %p38 = por %p36, %p37
    %p40 = scmp.ne.s32.totalorder %s23, %s39
    %p41 = scmp.eq.s32.totalorder %s15, 0
    %p42 = por %p40, %p41
    %s44 = sadd.s32 %s43, 1
    %p47 = scmp.eq.s32.totalorder %s9, 1
    %p48 = scmp.ne.s32.totalorder %s43, %s45
    %p49 = scmp.eq.s32.totalorder %s9, 0
    %p50 = por %p48, %p49
    %p51 = scmp.ne.s32.totalorder %s43, %s45
    %p52 = scmp.eq.s32.totalorder %s14, 1
    %p53 = por %p51, %p52
    %p54 = scmp.ne.s32.totalorder %s45, %s46
    %p55 = scmp.eq.s32.totalorder %s14, 0
    %p56 = por %p54, %p55
    %p57 = scmp.ne.s32.totalorder %s45, %s46
    %p58 = scmp.eq.s32.totalorder %s15, 1
    %p59 = por %p57, %p58
    %p61 = scmp.ne.s32.totalorder %s46, %s60
    %p62 = scmp.eq.s32.totalorder %s15, 0
    %p63 = por %p61, %p62
    %s65 = sadd.s32 %s64, 1
    %p68 = scmp.eq.s32.totalorder %s9, 1
    %p69 = scmp.ne.s32.totalorder %s64, %s66
    %p70 = scmp.eq.s32.totalorder %s9, 0
    %p71 = por %p69, %p70
    %p72 = scmp.ne.s32.totalorder %s64, %s66
    %p73 = scmp.eq.s32.totalorder %s14, 1
    %p74 = por %p72, %p73
    %p75 = scmp.ne.s32.totalorder %s66, %s67
    %p76 = scmp.eq.s32.totalorder %s14, 0
    %p77 = por %p75, %p76
    %p78 = scmp.ne.s32.totalorder %s66, %s67
    %p79 = scmp.eq.s32.totalorder %s15, 1
    %p80 = por %p78, %p79
    %p82 = scmp.ne.s32.totalorder %s67, %s81
    %p83 = scmp.eq.s32.totalorder %s15, 0
    %p84 = por %p82, %p83
    %p85 = scmp.le.s32.totalorder 1, %s9
    %p86 = scmp.lt.s32.totalorder %s9, 3
    %p87 = pnand %p85, %p86
    %p88 = pneg %p87
    // Predicated region
    $region9: #{_big_res_block.4} parent=5 // pred_check
      _
    $region10: #{_big_res_block.4} parent=5 // pred_check_branch
      %90 = sbr.rel (%p87) target = $region12
    $region11: #{_big_res_block.4} parent=5 // pred_region
      %s91 = ssub.s32 %s9, 1
    $region12: #{_big_res_block.4} parent=5 // pred_fallthru
      _
    %p92 = scmp.lt.s32.totalorder %s9, 2
    // Predicated region
    $region13: #{_big_res_block.4} parent=5 // pred_check
      %p93 = pneg %p92
    $region14: #{_big_res_block.4} parent=5 // pred_check_branch
      %95 = sbr.rel (%p93) target = $region16
    $region15: #{_big_res_block.4} parent=5 // pred_region
      // Predicated region
      $region17: #{_big_res_block.4} parent=15 // pred_check
        %p96 = pneg %p29
      $region18: #{_big_res_block.4} parent=15 // pred_check_branch
        %98 = sbr.rel (%p96) target = $region20
      $region19: #{_big_res_block.4} parent=15 // pred_region
        %s99 = smul.u32 32, %s9
        %p100 = scmp.lt.s32.totalorder %s99, 63
        %s101 = scalar_select %p100, %s99, 63
        %s102 = smul.addr %s101, 8
        %s103 = scalar_lea.vmem %s0, %s102
        %s104 = smul.u32 32, %s9
      $region20: #{_big_res_block.4} parent=15 // pred_fallthru
        _
    $region16: #{_big_res_block.4} parent=5 // pred_fallthru
      _
    %p105 = scmp.le.s32.totalorder 1, %s9
    %p106 = scmp.lt.s32.totalorder %s9, 3
    %p107 = pnand %p105, %p106
    %p108 = pneg %p107
    // Predicated region
    $region21: #{_big_res_block.4} parent=5 // pred_check
      _
    $region22: #{_big_res_block.4} parent=5 // pred_check_branch
      %110 = sbr.rel (%p107) target = $region24
    $region23: #{_big_res_block.4} parent=5 // pred_region
      %s111 = ssub.s32 %s9, 1
      %s112 = smul.u32 32, %s14
      %p113 = scmp.lt.s32.totalorder %s112, 63
      %s114 = scalar_select %p113, %s112, 63
      %s115 = smul.addr %s114, 8
      %s116 = scalar_lea.vmem %s0, %s115
      %p117 = pneg %p35
      %p118 = pneg %p32
      %p119 = pneg %p56
      %p120 = pneg %p53
      %p121 = pneg %p77
      %p122 = pneg %p74
      %s123 = smul.u32 32, %s14
      %p124 = scmp.lt.s32.totalorder %s123, 63
      %s125 = scalar_select %p124, %s123, 63
      %s126 = smul.addr %s125, 8
      %s127 = scalar_lea.vmem %s0, %s126
      %s128 = smul.u32 32, %s14
      %p129 = scmp.eq.s32.totalorder %s14, 0
      // Predicated region
      $region25: #{_big_res_block.4} parent=23 // pred_check
        %p130 = pneg %p129
      $region26: #{_big_res_block.4} parent=23 // pred_check_branch
        %132 = sbr.rel (%p130) target = $region28
      $region27: #{_big_res_block.4} parent=23 // pred_region
        %133 = vst [vmem:[%s1] sm:$0x1] 0.0
        %134 = vst [vmem:[%s2] sm:$0x1] 0.0
      $region28: #{_big_res_block.4} parent=23 // pred_fallthru
        _
      %v135 = vld [vmem:[%s127] sm:$0xff]
      %v136 = vld [vmem:[%s127 + $0x8] sm:$0xff]
      %v137 = vld [vmem:[%s127 + $0x10] sm:$0xff]
      %v138 = vld [vmem:[%s127 + $0x18] sm:$0xff]
      %v139 = vld [vmem:[%s127 + $0x20] sm:$0xff]
      %v140 = vld [vmem:[%s127 + $0x28] sm:$0xff]
      %v141 = vld [vmem:[%s127 + $0x30] sm:$0xff]
      %v142 = vld [vmem:[%s127 + $0x38] sm:$0xff]
      %v143 = vld [vmem:[%s127 + $0x40] sm:$0xff]
      %v144 = vld [vmem:[%s127 + $0x48] sm:$0xff]
      %v145 = vld [vmem:[%s127 + $0x50] sm:$0xff]
      %v146 = vld [vmem:[%s127 + $0x58] sm:$0xff]
      %v147 = vld [vmem:[%s127 + $0x60] sm:$0xff]
      %v148 = vld [vmem:[%s127 + $0x68] sm:$0xff]
      %v149 = vld [vmem:[%s127 + $0x70] sm:$0xff]
      %v150 = vld [vmem:[%s127 + $0x78] sm:$0xff]
      %v151 = vld [vmem:[%s127 + $0x80] sm:$0xff]
      %v152 = vld [vmem:[%s127 + $0x88] sm:$0xff]
      %v153 = vld [vmem:[%s127 + $0x90] sm:$0xff]
      %v154 = vld [vmem:[%s127 + $0x98] sm:$0xff]
      %v155 = vld [vmem:[%s127 + $0xa0] sm:$0xff]
      %v156 = vld [vmem:[%s127 + $0xa8] sm:$0xff]
      %v157 = vld [vmem:[%s127 + $0xb0] sm:$0xff]
      %v158 = vld [vmem:[%s127 + $0xb8] sm:$0xff]
      %v159 = vld [vmem:[%s127 + $0xc0] sm:$0xff]
      %v160 = vld [vmem:[%s127 + $0xc8] sm:$0xff]
      %v161 = vld [vmem:[%s127 + $0xd0] sm:$0xff]
      %v162 = vld [vmem:[%s127 + $0xd8] sm:$0xff]
      %v163 = vld [vmem:[%s127 + $0xe0] sm:$0xff]
      %v164 = vld [vmem:[%s127 + $0xe8] sm:$0xff]
      %v165 = vld [vmem:[%s127 + $0xf0] sm:$0xff]
      %v166 = vld [vmem:[%s127 + $0xf8] sm:$0xff]
      %v167 = vld [vmem:[%s1] sm:$0x1]
      %v168 = vadd.f32 %v135, %v136
      %v169 = vadd.f32 %v168, %v137
      %v170 = vadd.f32 %v169, %v138
      %v171 = vadd.f32 %v170, %v139
      %v172 = vadd.f32 %v171, %v140
      %v173 = vadd.f32 %v172, %v141
      %v174 = vadd.f32 %v173, %v142
      %v175 = vadd.f32 %v174, %v143
      %v176 = vadd.f32 %v175, %v144
      %v177 = vadd.f32 %v176, %v145
      %v178 = vadd.f32 %v177, %v146
      %v179 = vadd.f32 %v178, %v147
      %v180 = vadd.f32 %v179, %v148
      %v181 = vadd.f32 %v180, %v149
      %v182 = vadd.f32 %v181, %v150
      %v183 = vadd.f32 %v182, %v151
      %v184 = vadd.f32 %v183, %v152
      %v185 = vadd.f32 %v184, %v153
      %v186 = vadd.f32 %v185, %v154
      %v187 = vadd.f32 %v186, %v155
      %v188 = vadd.f32 %v187, %v156
      %v189 = vadd.f32 %v188, %v157
      %v190 = vadd.f32 %v189, %v158
      %v191 = vadd.f32 %v190, %v159
      %v192 = vadd.f32 %v191, %v160
      %v193 = vadd.f32 %v192, %v161
      %v194 = vadd.f32 %v193, %v162
      %v195 = vadd.f32 %v194, %v163
      %v196 = vadd.f32 %v195, %v164
      %v197 = vadd.f32 %v196, %v165
      %v198 = vadd.f32 %v197, %v166
      %v199 = vrot.slane %v198, 4
      %v200 = vadd.f32 %v198, %v199
      %v201 = vrot.slane %v200, 2
      %v202 = vadd.f32 %v200, %v201
      %v203 = vrot.slane %v202, 1
      %v204 = vadd.f32 %v202, %v203
      %v205 = vadd.f32 %v167, %v204
      %206 = vst [vmem:[%s1] sm:$0x1] %v205
      %v207 = vld [vmem:[%s2] sm:$0x1]
      %v208 = vmul.f32 %v135, %v135
      %v209 = vmul.f32 %v136, %v136
      %v210 = vmul.f32 %v137, %v137
      %v211 = vmul.f32 %v138, %v138
      %v212 = vmul.f32 %v139, %v139
      %v213 = vmul.f32 %v140, %v140
      %v214 = vmul.f32 %v141, %v141
      %v215 = vmul.f32 %v142, %v142
      %v216 = vmul.f32 %v143, %v143
      %v217 = vmul.f32 %v144, %v144
      %v218 = vmul.f32 %v145, %v145
      %v219 = vmul.f32 %v146, %v146
      %v220 = vmul.f32 %v147, %v147
      %v221 = vmul.f32 %v148, %v148
      %v222 = vmul.f32 %v149, %v149
      %v223 = vmul.f32 %v150, %v150
      %v224 = vmul.f32 %v151, %v151
      %v225 = vmul.f32 %v152, %v152
      %v226 = vmul.f32 %v153, %v153
      %v227 = vmul.f32 %v154, %v154
      %v228 = vmul.f32 %v155, %v155
      %v229 = vmul.f32 %v156, %v156
      %v230 = vmul.f32 %v157, %v157
      %v231 = vmul.f32 %v158, %v158
      %v232 = vmul.f32 %v159, %v159
      %v233 = vmul.f32 %v160, %v160
      %v234 = vmul.f32 %v161, %v161
      %v235 = vmul.f32 %v162, %v162
      %v236 = vmul.f32 %v163, %v163
      %v237 = vmul.f32 %v164, %v164
      %v238 = vmul.f32 %v165, %v165
      %v239 = vmul.f32 %v166, %v166
      %v240 = vadd.f32 %v208, %v209
      %v241 = vadd.f32 %v240, %v210
      %v242 = vadd.f32 %v241, %v211
      %v243 = vadd.f32 %v242, %v212
      %v244 = vadd.f32 %v243, %v213
      %v245 = vadd.f32 %v244, %v214
      %v246 = vadd.f32 %v245, %v215
      %v247 = vadd.f32 %v246, %v216
      %v248 = vadd.f32 %v247, %v217
      %v249 = vadd.f32 %v248, %v218
      %v250 = vadd.f32 %v249, %v219
      %v251 = vadd.f32 %v250, %v220
      %v252 = vadd.f32 %v251, %v221
      %v253 = vadd.f32 %v252, %v222
      %v254 = vadd.f32 %v253, %v223
      %v255 = vadd.f32 %v254, %v224
      %v256 = vadd.f32 %v255, %v225
      %v257 = vadd.f32 %v256, %v226
      %v258 = vadd.f32 %v257, %v227
      %v259 = vadd.f32 %v258, %v228
      %v260 = vadd.f32 %v259, %v229
      %v261 = vadd.f32 %v260, %v230
      %v262 = vadd.f32 %v261, %v231
      %v263 = vadd.f32 %v262, %v232
      %v264 = vadd.f32 %v263, %v233
      %v265 = vadd.f32 %v264, %v234
      %v266 = vadd.f32 %v265, %v235
      %v267 = vadd.f32 %v266, %v236
      %v268 = vadd.f32 %v267, %v237
      %v269 = vadd.f32 %v268, %v238
      %v270 = vadd.f32 %v269, %v239
      %v271 = vrot.slane %v270, 4
      %v272 = vadd.f32 %v270, %v271
      %v273 = vrot.slane %v272, 2
      %v274 = vadd.f32 %v272, %v273
      %v275 = vrot.slane %v274, 1
      %v276 = vadd.f32 %v274, %v275
      %v277 = vadd.f32 %v207, %v276
      %278 = vst [vmem:[%s2] sm:$0x1] %v277
      // Predicated region
      $region29: #{_big_res_block.4} parent=23 // pred_check
        %p279 = pneg %p53
      $region30: #{_big_res_block.4} parent=23 // pred_check_branch
        %281 = sbr.rel (%p279) target = $region32
      $region31: #{_big_res_block.4} parent=23 // pred_region
        _
      $region32: #{_big_res_block.4} parent=23 // pred_fallthru
        _
      // Predicated region
      $region33: #{_big_res_block.4} parent=23 // pred_check
        %p282 = pneg %p74
      $region34: #{_big_res_block.4} parent=23 // pred_check_branch
        %284 = sbr.rel (%p282) target = $region36
      $region35: #{_big_res_block.4} parent=23 // pred_region
        _
      $region36: #{_big_res_block.4} parent=23 // pred_fallthru
        _
      // Predicated region
      $region37: #{_big_res_block.4} parent=23 // pred_check
        %p285 = pneg %p53
      $region38: #{_big_res_block.4} parent=23 // pred_check_branch
        %287 = sbr.rel (%p285) target = $region40
      $region39: #{_big_res_block.4} parent=23 // pred_region
        _
      $region40: #{_big_res_block.4} parent=23 // pred_fallthru
        _
      // Predicated region
      $region41: #{_big_res_block.4} parent=23 // pred_check
        %p288 = pneg %p74
      $region42: #{_big_res_block.4} parent=23 // pred_check_branch
        %290 = sbr.rel (%p288) target = $region44
      $region43: #{_big_res_block.4} parent=23 // pred_region
        _
      $region44: #{_big_res_block.4} parent=23 // pred_fallthru
        _
    $region24: #{_big_res_block.4} parent=5 // pred_fallthru
      _
    %p291 = scmp.le.s32.totalorder 2, %s9
    // Predicated region
    $region45: #{_big_res_block.4} parent=5 // pred_check
      %p292 = pneg %p291
    $region46: #{_big_res_block.4} parent=5 // pred_check_branch
      %294 = sbr.rel (%p292) target = $region48
    $region47: #{_big_res_block.4} parent=5 // pred_region
      %s295 = ssub.s32 %s9, 2
    $region48: #{_big_res_block.4} parent=5 // pred_fallthru
      _
  $region6: #{_big_res_block.4} parent=0 // loop_footer
    %s13 = sadd.s32 1, %s9
  $region7: #{_big_res_block.4} parent=0 // loop_footer_branch
    %8 = sbr.rel target = $region3
  $region8: #{_big_res_block.4} parent=0 // loop_exit
    _

// kernel: _big_res_block.5
$region0: #{_big_res_block.5}
  #allocation0 [shape = 'u32[]', space=smem, size = 0x4, offset = 0x4, fixed_abs, tag = 'smem constant byte address 0x4 - core index']
  #allocation1 [shape = 'u32[144,128]{1,0:T(1,128)}', space=vmem, size = 0x12000, scoped, tag = 'internal scratch']
  %s0 = inlined_call_operand.vmem [shape: f32[512,128], index: 0, kind: input, shape index: {}]
  %s1 = inlined_call_operand.vmem [shape: f32[1,128], index: 1, kind: input, shape index: {}]
  %s2 = inlined_call_operand.vmem [shape: f32[1,128], index: 2, kind: input, shape index: {}]
  %s3 = inlined_call_operand.vmem [shape: f32[128,128], index: 3, kind: input, shape index: {}]
  %s4 = inlined_call_operand.vmem [shape: f32[512,128], index: 4, kind: output, shape index: {0}]
  %s5 = inlined_call_operand.vmem [shape: f32[1,128], index: 5, kind: output, shape index: {1}]
  %s6 = inlined_call_operand.vmem [shape: f32[1,128], index: 6, kind: output, shape index: {2}]
  %7 = xla_tuple %s4, %s5, %s6
  %s8 = sld [smem:[#allocation0]]
  $region69: #{_big_res_block.5} parent=0
    _
  %s10 = ssub.s32 1, %s8
  %s11 = scalar_select 0, %s10, %s8
  loop: start=0, step=1, limit=4
  $region2: #{_big_res_block.5} parent=0 // loop_pre_header
    _
  $region3: #{_big_res_block.5} parent=0 // loop_header
    %s13 = sphi 0, %s17
    %p14 = scmp.ge.s32.totalorder %s13, 4
    %s23 = sphi 0, %s25
    %s26 = sphi 0, %s23
    %s27 = sphi 0, %s26
    %s43 = sphi 0, %s27
    %s47 = sphi 0, %s47
    %s49 = sphi 0, %s47
    %s50 = sphi 0, %s49
    %s64 = sphi 0, %s50
    %s68 = sphi 0, %s68
    %s70 = sphi 0, %s68
    %s71 = sphi 0, %s70
    %s85 = sphi 0, %s71
    %s89 = sphi 0, %s89
    %s91 = sphi 0, %s89
    %s92 = sphi 0, %s91
    %s106 = sphi 0, %s92
    %s112 = sphi 0, %s114
    %s115 = sphi 0, %s112
    %s116 = sphi 0, %s115
    %s132 = sphi 0, %s116
    %s136 = sphi 0, %s136
    %s138 = sphi 0, %s136
    %s139 = sphi 0, %s138
    %s153 = sphi 0, %s139
    %s157 = sphi 0, %s157
    %s159 = sphi 0, %s157
    %s160 = sphi 0, %s159
    %s174 = sphi 0, %s160
  $region4: #{_big_res_block.5} parent=0 // loop_header_branch
    %16 = sbr.rel (%p14) target = $region8
  $region5: #{_big_res_block.5} parent=0 // loop_body
    %s18 = ssub.s32 %s13, 1
    %s19 = ssub.s32 %s13, 2
    %s20 = sadd.s32 %s13, 1
    %s21 = ssub.s32 %s13, %s20
    %p22 = scmp.eq.s32.totalorder %s21, 0
    %s24 = sadd.s32 %s23, 1
    %s25 = scalar_select %p22, %s23, %s24
    %p28 = pneg %p22
    %p29 = scmp.eq.s32.totalorder %s13, 1
    %p30 = por %p28, %p29
    %p31 = scmp.ne.s32.totalorder %s23, %s26
    %p32 = scmp.eq.s32.totalorder %s13, 0
    %p33 = por %p31, %p32
    %p34 = scmp.ne.s32.totalorder %s23, %s26
    %p35 = scmp.eq.s32.totalorder %s18, 1
    %p36 = por %p34, %p35
    %p37 = scmp.ne.s32.totalorder %s26, %s27
    %p38 = scmp.eq.s32.totalorder %s18, 0
    %p39 = por %p37, %p38
    %p40 = scmp.ne.s32.totalorder %s26, %s27
    %p41 = scmp.eq.s32.totalorder %s19, 1
    %p42 = por %p40, %p41
    %p44 = scmp.ne.s32.totalorder %s27, %s43
    %p45 = scmp.eq.s32.totalorder %s19, 0
    %p46 = por %p44, %p45
    %s48 = sadd.s32 %s47, 1
    %p51 = scmp.eq.s32.totalorder %s13, 1
    %p52 = scmp.ne.s32.totalorder %s47, %s49
    %p53 = scmp.eq.s32.totalorder %s13, 0
    %p54 = por %p52, %p53
    %p55 = scmp.ne.s32.totalorder %s47, %s49
    %p56 = scmp.eq.s32.totalorder %s18, 1
    %p57 = por %p55, %p56
    %p58 = scmp.ne.s32.totalorder %s49, %s50
    %p59 = scmp.eq.s32.totalorder %s18, 0
    %p60 = por %p58, %p59
    %p61 = scmp.ne.s32.totalorder %s49, %s50
    %p62 = scmp.eq.s32.totalorder %s19, 1
    %p63 = por %p61, %p62
    %p65 = scmp.ne.s32.totalorder %s50, %s64
    %p66 = scmp.eq.s32.totalorder %s19, 0
    %p67 = por %p65, %p66
    %s69 = sadd.s32 %s68, 1
    %p72 = scmp.eq.s32.totalorder %s13, 1
    %p73 = scmp.ne.s32.totalorder %s68, %s70
    %p74 = scmp.eq.s32.totalorder %s13, 0
    %p75 = por %p73, %p74
    %p76 = scmp.ne.s32.totalorder %s68, %s70
    %p77 = scmp.eq.s32.totalorder %s18, 1
    %p78 = por %p76, %p77
    %p79 = scmp.ne.s32.totalorder %s70, %s71
    %p80 = scmp.eq.s32.totalorder %s18, 0
    %p81 = por %p79, %p80
    %p82 = scmp.ne.s32.totalorder %s70, %s71
    %p83 = scmp.eq.s32.totalorder %s19, 1
    %p84 = por %p82, %p83
    %p86 = scmp.ne.s32.totalorder %s71, %s85
    %p87 = scmp.eq.s32.totalorder %s19, 0
    %p88 = por %p86, %p87
    %s90 = sadd.s32 %s89, 1
    %p93 = scmp.eq.s32.totalorder %s13, 1
    %p94 = scmp.ne.s32.totalorder %s89, %s91
    %p95 = scmp.eq.s32.totalorder %s13, 0
    %p96 = por %p94, %p95
    %p97 = scmp.ne.s32.totalorder %s89, %s91
    %p98 = scmp.eq.s32.totalorder %s18, 1
    %p99 = por %p97, %p98
    %p100 = scmp.ne.s32.totalorder %s91, %s92
    %p101 = scmp.eq.s32.totalorder %s18, 0
    %p102 = por %p100, %p101
    %p103 = scmp.ne.s32.totalorder %s91, %s92
    %p104 = scmp.eq.s32.totalorder %s19, 1
    %p105 = por %p103, %p104
    %p107 = scmp.ne.s32.totalorder %s92, %s106
    %p108 = scmp.eq.s32.totalorder %s19, 0
    %p109 = por %p107, %p108
    %s110 = ssub.s32 %s13, %s20
    %p111 = scmp.eq.s32.totalorder %s110, 0
    %s113 = sadd.s32 %s112, 1
    %s114 = scalar_select %p111, %s112, %s113
    %p117 = pneg %p111
    %p118 = scmp.eq.s32.totalorder %s13, 1
    %p119 = por %p117, %p118
    %p120 = scmp.ne.s32.totalorder %s112, %s115
    %p121 = scmp.eq.s32.totalorder %s13, 0
    %p122 = por %p120, %p121
    %p123 = scmp.ne.s32.totalorder %s112, %s115
    %p124 = scmp.eq.s32.totalorder %s18, 1
    %p125 = por %p123, %p124
    %p126 = scmp.ne.s32.totalorder %s115, %s116
    %p127 = scmp.eq.s32.totalorder %s18, 0
    %p128 = por %p126, %p127
    %p129 = scmp.ne.s32.totalorder %s115, %s116
    %p130 = scmp.eq.s32.totalorder %s19, 1
    %p131 = por %p129, %p130
    %p133 = scmp.ne.s32.totalorder %s116, %s132
    %p134 = scmp.eq.s32.totalorder %s19, 0
    %p135 = por %p133, %p134
    %s137 = sadd.s32 %s136, 1
    %p140 = scmp.eq.s32.totalorder %s13, 1
    %p141 = scmp.ne.s32.totalorder %s136, %s138
    %p142 = scmp.eq.s32.totalorder %s13, 0
    %p143 = por %p141, %p142
    %p144 = scmp.ne.s32.totalorder %s136, %s138
    %p145 = scmp.eq.s32.totalorder %s18, 1
    %p146 = por %p144, %p145
    %p147 = scmp.ne.s32.totalorder %s138, %s139
    %p148 = scmp.eq.s32.totalorder %s18, 0
    %p149 = por %p147, %p148
    %p150 = scmp.ne.s32.totalorder %s138, %s139
    %p151 = scmp.eq.s32.totalorder %s19, 1
    %p152 = por %p150, %p151
    %p154 = scmp.ne.s32.totalorder %s139, %s153
    %p155 = scmp.eq.s32.totalorder %s19, 0
    %p156 = por %p154, %p155
    %s158 = sadd.s32 %s157, 1
    %p161 = scmp.eq.s32.totalorder %s13, 1
    %p162 = scmp.ne.s32.totalorder %s157, %s159
    %p163 = scmp.eq.s32.totalorder %s13, 0
    %p164 = por %p162, %p163
    %p165 = scmp.ne.s32.totalorder %s157, %s159
    %p166 = scmp.eq.s32.totalorder %s18, 1
    %p167 = por %p165, %p166
    %p168 = scmp.ne.s32.totalorder %s159, %s160
    %p169 = scmp.eq.s32.totalorder %s18, 0
    %p170 = por %p168, %p169
    %p171 = scmp.ne.s32.totalorder %s159, %s160
    %p172 = scmp.eq.s32.totalorder %s19, 1
    %p173 = por %p171, %p172
    %p175 = scmp.ne.s32.totalorder %s160, %s174
    %p176 = scmp.eq.s32.totalorder %s19, 0
    %p177 = por %p175, %p176
    %p178 = scmp.le.s32.totalorder 1, %s13
    %p179 = scmp.lt.s32.totalorder %s13, 3
    %p180 = pnand %p178, %p179
    %p181 = pneg %p180
    // Predicated region
    $region9: #{_big_res_block.5} parent=5 // pred_check
      _
    $region10: #{_big_res_block.5} parent=5 // pred_check_branch
      %183 = sbr.rel (%p180) target = $region12
    $region11: #{_big_res_block.5} parent=5 // pred_region
      %s184 = ssub.s32 %s13, 1
      // Predicated region
      $region13: #{_big_res_block.5} parent=11 // pred_check
        %p185 = pneg %p60
      $region14: #{_big_res_block.5} parent=11 // pred_check_branch
        %187 = sbr.rel (%p185) target = $region16
      $region15: #{_big_res_block.5} parent=11 // pred_region
        _
      $region16: #{_big_res_block.5} parent=11 // pred_fallthru
        _
      // Predicated region
      $region17: #{_big_res_block.5} parent=11 // pred_check
        %p188 = pneg %p81
      $region18: #{_big_res_block.5} parent=11 // pred_check_branch
        %190 = sbr.rel (%p188) target = $region20
      $region19: #{_big_res_block.5} parent=11 // pred_region
        _
      $region20: #{_big_res_block.5} parent=11 // pred_fallthru
        _
      // Predicated region
      $region21: #{_big_res_block.5} parent=11 // pred_check
        %p191 = pneg %p102
      $region22: #{_big_res_block.5} parent=11 // pred_check_branch
        %193 = sbr.rel (%p191) target = $region24
      $region23: #{_big_res_block.5} parent=11 // pred_region
        _
      $region24: #{_big_res_block.5} parent=11 // pred_fallthru
        _
    $region12: #{_big_res_block.5} parent=5 // pred_fallthru
      _
    %p194 = scmp.lt.s32.totalorder %s13, 2
    // Predicated region
    $region25: #{_big_res_block.5} parent=5 // pred_check
      %p195 = pneg %p194
    $region26: #{_big_res_block.5} parent=5 // pred_check_branch
      %197 = sbr.rel (%p195) target = $region28
    $region27: #{_big_res_block.5} parent=5 // pred_region
      // Predicated region
      $region29: #{_big_res_block.5} parent=27 // pred_check
        %p198 = pneg %p33
      $region30: #{_big_res_block.5} parent=27 // pred_check_branch
        %200 = sbr.rel (%p198) target = $region32
      $region31: #{_big_res_block.5} parent=27 // pred_region
        %s201 = smul.u32 32, %s13
        %p202 = scmp.lt.s32.totalorder %s201, 63
        %s203 = scalar_select %p202, %s201, 63
        %s204 = smul.addr %s203, 8
        %s205 = scalar_lea.vmem %s0, %s204
        %s206 = smul.u32 32, %s13
      $region32: #{_big_res_block.5} parent=27 // pred_fallthru
        _
    $region28: #{_big_res_block.5} parent=5 // pred_fallthru
      _
    %p207 = scmp.le.s32.totalorder 1, %s13
    %p208 = scmp.lt.s32.totalorder %s13, 3
    %p209 = pnand %p207, %p208
    %p210 = pneg %p209
    // Predicated region
    $region33: #{_big_res_block.5} parent=5 // pred_check
      _
    $region34: #{_big_res_block.5} parent=5 // pred_check_branch
      %212 = sbr.rel (%p209) target = $region36
    $region35: #{_big_res_block.5} parent=5 // pred_region
      %s213 = ssub.s32 %s13, 1
      %s214 = smul.u32 32, %s18
      %p215 = scmp.lt.s32.totalorder %s214, 63
      %s216 = scalar_select %p215, %s214, 63
      %s217 = smul.addr %s216, 8
      %s218 = scalar_lea.vmem %s0, %s217
      %p219 = pneg %p39
      %p220 = pneg %p36
      %p221 = pneg %p60
      %p222 = pneg %p57
      %p223 = pneg %p81
      %p224 = pneg %p78
      %p225 = pneg %p102
      %p226 = pneg %p99
      %p227 = pneg %p128
      %p228 = pneg %p125
      %s229 = smul.u32 32, %s18
      %p230 = scmp.lt.s32.totalorder %s229, 63
      %s231 = scalar_select %p230, %s229, 63
      %s232 = smul.addr %s231, 8
      %s233 = scalar_lea.vmem %s4, %s232
      %p234 = pneg %p149
      %p235 = pneg %p146
      %p236 = pneg %p170
      %p237 = pneg %p167
      %s238 = smul.u32 32, %s18
      %p239 = scmp.lt.s32.totalorder %s238, 63
      %s240 = scalar_select %p239, %s238, 63
      %s241 = smul.addr %s240, 8
      %s242 = scalar_lea.vmem %s0, %s241
      %s243 = smul.u32 32, %s18
      %s244 = smul.u32 32, %s18
      %p245 = scmp.lt.s32.totalorder %s244, 63
      %s246 = scalar_select %p245, %s244, 63
      %s247 = smul.addr %s246, 8
      %s248 = scalar_lea.vmem %s4, %s247
      %s249 = smul.u32 32, %s18
      %p250 = scmp.eq.s32.totalorder %s18, 0
      // Predicated region
      $region37: #{_big_res_block.5} parent=35 // pred_check
        %p251 = pneg %p250
      $region38: #{_big_res_block.5} parent=35 // pred_check_branch
        %253 = sbr.rel (%p251) target = $region40
      $region39: #{_big_res_block.5} parent=35 // pred_region
        %254 = vst [vmem:[%s5] sm:$0x1] 0.0
        %255 = vst [vmem:[%s6] sm:$0x1] 0.0
      $region40: #{_big_res_block.5} parent=35 // pred_fallthru
        _
      %v256 = vld [vmem:[%s242] sm:$0xff]
      %v257 = vld [vmem:[%s242 + $0x8] sm:$0xff]
      %v258 = vld [vmem:[%s242 + $0x10] sm:$0xff]
      %v259 = vld [vmem:[%s242 + $0x18] sm:$0xff]
      %v260 = vld [vmem:[%s242 + $0x20] sm:$0xff]
      %v261 = vld [vmem:[%s242 + $0x28] sm:$0xff]
      %v262 = vld [vmem:[%s242 + $0x30] sm:$0xff]
      %v263 = vld [vmem:[%s242 + $0x38] sm:$0xff]
      %v264 = vld [vmem:[%s242 + $0x40] sm:$0xff]
      %v265 = vld [vmem:[%s242 + $0x48] sm:$0xff]
      %v266 = vld [vmem:[%s242 + $0x50] sm:$0xff]
      %v267 = vld [vmem:[%s242 + $0x58] sm:$0xff]
      %v268 = vld [vmem:[%s242 + $0x60] sm:$0xff]
      %v269 = vld [vmem:[%s242 + $0x68] sm:$0xff]
      %v270 = vld [vmem:[%s242 + $0x70] sm:$0xff]
      %v271 = vld [vmem:[%s242 + $0x78] sm:$0xff]
      %v272 = vld [vmem:[%s242 + $0x80] sm:$0xff]
      %v273 = vld [vmem:[%s242 + $0x88] sm:$0xff]
      %v274 = vld [vmem:[%s242 + $0x90] sm:$0xff]
      %v275 = vld [vmem:[%s242 + $0x98] sm:$0xff]
      %v276 = vld [vmem:[%s242 + $0xa0] sm:$0xff]
      %v277 = vld [vmem:[%s242 + $0xa8] sm:$0xff]
      %v278 = vld [vmem:[%s242 + $0xb0] sm:$0xff]
      %v279 = vld [vmem:[%s242 + $0xb8] sm:$0xff]
      %v280 = vld [vmem:[%s242 + $0xc0] sm:$0xff]
      %v281 = vld [vmem:[%s242 + $0xc8] sm:$0xff]
      %v282 = vld [vmem:[%s242 + $0xd0] sm:$0xff]
      %v283 = vld [vmem:[%s242 + $0xd8] sm:$0xff]
      %v284 = vld [vmem:[%s242 + $0xe0] sm:$0xff]
      %v285 = vld [vmem:[%s242 + $0xe8] sm:$0xff]
      %v286 = vld [vmem:[%s242 + $0xf0] sm:$0xff]
      %v287 = vld [vmem:[%s242 + $0xf8] sm:$0xff]
      %v288 = vld [vmem:[%s1] sm:$0x1]
      %v290 = vlaneseq
      %v291 = vshrl.u32 %v290, 7
      %v292 = vsub.s32 0, %v291
      %v293 = vrot.slane %v288, %v292
      %v295 = vmul.f32 %v256, %v293
      %v296 = vmul.f32 %v257, %v293
      %v297 = vmul.f32 %v258, %v293
      %v298 = vmul.f32 %v259, %v293
      %v299 = vmul.f32 %v260, %v293
      %v300 = vmul.f32 %v261, %v293
      %v301 = vmul.f32 %v262, %v293
      %v302 = vmul.f32 %v263, %v293
      %v303 = vmul.f32 %v264, %v293
      %v304 = vmul.f32 %v265, %v293
      %v305 = vmul.f32 %v266, %v293
      %v306 = vmul.f32 %v267, %v293
      %v307 = vmul.f32 %v268, %v293
      %v308 = vmul.f32 %v269, %v293
      %v309 = vmul.f32 %v270, %v293
      %v310 = vmul.f32 %v271, %v293
      %v311 = vmul.f32 %v272, %v293
      %v312 = vmul.f32 %v273, %v293
      %v313 = vmul.f32 %v274, %v293
      %v314 = vmul.f32 %v275, %v293
      %v315 = vmul.f32 %v276, %v293
      %v316 = vmul.f32 %v277, %v293
      %v317 = vmul.f32 %v278, %v293
      %v318 = vmul.f32 %v279, %v293
      %v319 = vmul.f32 %v280, %v293
      %v320 = vmul.f32 %v281, %v293
      %v321 = vmul.f32 %v282, %v293
      %v322 = vmul.f32 %v283, %v293
      %v323 = vmul.f32 %v284, %v293
      %v324 = vmul.f32 %v285, %v293
      %v325 = vmul.f32 %v286, %v293
      %v326 = vmul.f32 %v287, %v293
      %v327 = vld [vmem:[%s2] sm:$0x1]
      %v329 = vlaneseq
      %v330 = vshrl.u32 %v329, 7
      %v331 = vsub.s32 0, %v330
      %v332 = vrot.slane %v327, %v331
      %v334 = vadd.f32 %v295, %v332
      %v335 = vadd.f32 %v296, %v332
      %v336 = vadd.f32 %v297, %v332
      %v337 = vadd.f32 %v298, %v332
      %v338 = vadd.f32 %v299, %v332
      %v339 = vadd.f32 %v300, %v332
      %v340 = vadd.f32 %v301, %v332
      %v341 = vadd.f32 %v302, %v332
      %v342 = vadd.f32 %v303, %v332
      %v343 = vadd.f32 %v304, %v332
      %v344 = vadd.f32 %v305, %v332
      %v345 = vadd.f32 %v306, %v332
      %v346 = vadd.f32 %v307, %v332
      %v347 = vadd.f32 %v308, %v332
      %v348 = vadd.f32 %v309, %v332
      %v349 = vadd.f32 %v310, %v332
      %v350 = vadd.f32 %v311, %v332
      %v351 = vadd.f32 %v312, %v332
      %v352 = vadd.f32 %v313, %v332
      %v353 = vadd.f32 %v314, %v332
      %v354 = vadd.f32 %v315, %v332
      %v355 = vadd.f32 %v316, %v332
      %v356 = vadd.f32 %v317, %v332
      %v357 = vadd.f32 %v318, %v332
      %v358 = vadd.f32 %v319, %v332
      %v359 = vadd.f32 %v320, %v332
      %v360 = vadd.f32 %v321, %v332
      %v361 = vadd.f32 %v322, %v332
      %v362 = vadd.f32 %v323, %v332
      %v363 = vadd.f32 %v324, %v332
      %v364 = vadd.f32 %v325, %v332
      %v365 = vadd.f32 %v326, %v332
      %v366 = vmax.f32 %v334, 0.0
      %v367 = vmax.f32 %v335, 0.0
      %v368 = vmax.f32 %v336, 0.0
      %v369 = vmax.f32 %v337, 0.0
      %v370 = vmax.f32 %v338, 0.0
      %v371 = vmax.f32 %v339, 0.0
      %v372 = vmax.f32 %v340, 0.0
      %v373 = vmax.f32 %v341, 0.0
      %v374 = vmax.f32 %v342, 0.0
      %v375 = vmax.f32 %v343, 0.0
      %v376 = vmax.f32 %v344, 0.0
      %v377 = vmax.f32 %v345, 0.0
      %v378 = vmax.f32 %v346, 0.0
      %v379 = vmax.f32 %v347, 0.0
      %v380 = vmax.f32 %v348, 0.0
      %v381 = vmax.f32 %v349, 0.0
      %v382 = vmax.f32 %v350, 0.0
      %v383 = vmax.f32 %v351, 0.0
      %v384 = vmax.f32 %v352, 0.0
      %v385 = vmax.f32 %v353, 0.0
      %v386 = vmax.f32 %v354, 0.0
      %v387 = vmax.f32 %v355, 0.0
      %v388 = vmax.f32 %v356, 0.0
      %v389 = vmax.f32 %v357, 0.0
      %v390 = vmax.f32 %v358, 0.0
      %v391 = vmax.f32 %v359, 0.0
      %v392 = vmax.f32 %v360, 0.0
      %v393 = vmax.f32 %v361, 0.0
      %v394 = vmax.f32 %v362, 0.0
      %v395 = vmax.f32 %v363, 0.0
      %v396 = vmax.f32 %v364, 0.0
      %v397 = vmax.f32 %v365, 0.0
      %v398 = vld [vmem:[%s3] sm:$0xff]
      %v399 = vld [vmem:[%s3 + $0x8] sm:$0xff]
      %v400 = vld [vmem:[%s3 + $0x10] sm:$0xff]
      %v401 = vld [vmem:[%s3 + $0x18] sm:$0xff]
      %v402 = vld [vmem:[%s3 + $0x20] sm:$0xff]
      %v403 = vld [vmem:[%s3 + $0x28] sm:$0xff]
      %v404 = vld [vmem:[%s3 + $0x30] sm:$0xff]
      %v405 = vld [vmem:[%s3 + $0x38] sm:$0xff]
      %v406 = vld [vmem:[%s3 + $0x40] sm:$0xff]
      %v407 = vld [vmem:[%s3 + $0x48] sm:$0xff]
      %v408 = vld [vmem:[%s3 + $0x50] sm:$0xff]
      %v409 = vld [vmem:[%s3 + $0x58] sm:$0xff]
      %v410 = vld [vmem:[%s3 + $0x60] sm:$0xff]
      %v411 = vld [vmem:[%s3 + $0x68] sm:$0xff]
      %v412 = vld [vmem:[%s3 + $0x70] sm:$0xff]
      %v413 = vld [vmem:[%s3 + $0x78] sm:$0xff]
      %414 = vmatprep.subr.mxu0 0.0
      %415 = vmatpush1.msra.mxu0 %v398
      %416 = vmatprep.subr.mxu0 0.0
      %417 = vmatpush1.msra.mxu0 %v399
      %418 = vmatprep.subr.mxu0 0.0
      %419 = vmatpush1.msra.mxu0 %v400
      %420 = vmatprep.subr.mxu0 0.0
      %421 = vmatpush1.msra.mxu0 %v401
      %422 = vmatprep.subr.mxu0 0.0
      %423 = vmatpush1.msra.mxu0 %v402
      %424 = vmatprep.subr.mxu0 0.0
      %425 = vmatpush1.msra.mxu0 %v403
      %426 = vmatprep.subr.mxu0 0.0
      %427 = vmatpush1.msra.mxu0 %v404
      %428 = vmatprep.subr.mxu0 0.0
      %429 = vmatpush1.msra.mxu0 %v405
      %430 = vmatprep.subr.mxu0 0.0
      %431 = vmatpush1.msra.mxu0 %v406
      %432 = vmatprep.subr.mxu0 0.0
      %433 = vmatpush1.msra.mxu0 %v407
      %434 = vmatprep.subr.mxu0 0.0
      %435 = vmatpush1.msra.mxu0 %v408
      %436 = vmatprep.subr.mxu0 0.0
      %437 = vmatpush1.msra.mxu0 %v409
      %438 = vmatprep.subr.mxu0 0.0
      %439 = vmatpush1.msra.mxu0 %v410
      %440 = vmatprep.subr.mxu0 0.0
      %441 = vmatpush1.msra.mxu0 %v411
      %442 = vmatprep.subr.mxu0 0.0
      %443 = vmatpush1.msra.mxu0 %v412
      %444 = vmatprep.subr.mxu0 0.0
      %445 = vmatpush1.msra.mxu0 %v413
      %446 = vmatprep.subr.mxu0 0.0
      %447 = vmatpush1.msra.mxu0 0.0
      %448 = vmatprep.subr.mxu0 0.0
      %449 = vmatpush1.msra.mxu0 0.0
      %450 = vmatprep.subr.mxu0 0.0
      %451 = vmatpush1.msra.mxu0 0.0
      %452 = vmatprep.subr.mxu0 0.0
      %453 = vmatpush1.msra.mxu0 0.0
      %454 = vmatprep.subr.mxu0 0.0
      %455 = vmatpush1.msra.mxu0 0.0
      %456 = vmatprep.subr.mxu0 0.0
      %457 = vmatpush1.msra.mxu0 0.0
      %458 = vmatprep.subr.mxu0 0.0
      %459 = vmatpush1.msra.mxu0 0.0
      %460 = vmatprep.subr.mxu0 0.0
      %461 = vmatpush1.msra.mxu0 0.0
      %462 = vmatprep.subr.mxu0 0.0
      %463 = vmatpush1.msra.mxu0 0.0
      %464 = vmatprep.subr.mxu0 0.0
      %465 = vmatpush1.msra.mxu0 0.0
      %466 = vmatprep.subr.mxu0 0.0
      %467 = vmatpush1.msra.mxu0 0.0
      %468 = vmatprep.subr.mxu0 0.0
      %469 = vmatpush1.msra.mxu0 0.0
      %470 = vmatprep.subr.mxu0 0.0
      %471 = vmatpush1.msra.mxu0 0.0
      %472 = vmatprep.subr.mxu0 0.0
      %473 = vmatpush1.msra.mxu0 0.0
      %474 = vmatprep.subr.mxu0 0.0
      %475 = vmatpush1.msra.mxu0 0.0
      %476 = vmatprep.subr.mxu0 0.0
      %477 = vmatpush1.msra.mxu0 0.0
      %478 = vmatprep.mubr.f32.mxu0 0.0
      %479 = vmatmul.mubr.f32.gmra.mrb[0].mxu0 %v366
      %v480 = vpop.f32.mrb[0].mxu0
      %v481 = vadd.f32 0.0, %v480
      %v482 = vpop.f32.mrb[0].mxu0
      %483 = vmatprep.mubr.f32.mxu0 0.0
      %484 = vmatmul.mubr.f32.gmra.mrb[0].mxu0 %v367
      %v485 = vpop.f32.mrb[0].mxu0
      %v486 = vadd.f32 0.0, %v485
      %v487 = vpop.f32.mrb[0].mxu0
      %488 = vmatprep.mubr.f32.mxu0 0.0
      %489 = vmatmul.mubr.f32.gmra.mrb[0].mxu0 %v368
      %v490 = vpop.f32.mrb[0].mxu0
      %v491 = vadd.f32 0.0, %v490
      %v492 = vpop.f32.mrb[0].mxu0
      %493 = vmatprep.mubr.f32.mxu0 0.0
      %494 = vmatmul.mubr.f32.gmra.mrb[0].mxu0 %v369
      %v495 = vpop.f32.mrb[0].mxu0
      %v496 = vadd.f32 0.0, %v495
      %v497 = vpop.f32.mrb[0].mxu0
      %498 = vmatprep.mubr.f32.mxu0 0.0
      %499 = vmatmul.mubr.f32.gmra.mrb[0].mxu0 %v370
      %v500 = vpop.f32.mrb[0].mxu0
      %v501 = vadd.f32 0.0, %v500
      %v502 = vpop.f32.mrb[0].mxu0
      %503 = vmatprep.mubr.f32.mxu0 0.0
      %504 = vmatmul.mubr.f32.gmra.mrb[0].mxu0 %v371
      %v505 = vpop.f32.mrb[0].mxu0
      %v506 = vadd.f32 0.0, %v505
      %v507 = vpop.f32.mrb[0].mxu0
      %508 = vmatprep.mubr.f32.mxu0 0.0
      %509 = vmatmul.mubr.f32.gmra.mrb[0].mxu0 %v372
      %v510 = vpop.f32.mrb[0].mxu0
      %v511 = vadd.f32 0.0, %v510
      %v512 = vpop.f32.mrb[0].mxu0
      %513 = vmatprep.mubr.f32.mxu0 0.0
      %514 = vmatmul.mubr.f32.gmra.mrb[0].mxu0 %v373
      %v515 = vpop.f32.mrb[0].mxu0
      %v516 = vadd.f32 0.0, %v515
      %v517 = vpop.f32.mrb[0].mxu0
      %518 = vmatprep.mubr.f32.mxu0 0.0
      %519 = vmatmul.mubr.f32.gmra.mrb[0].mxu0 %v374
      %v520 = vpop.f32.mrb[0].mxu0
      %v521 = vadd.f32 0.0, %v520
      %v522 = vpop.f32.mrb[0].mxu0
      %523 = vmatprep.mubr.f32.mxu0 0.0
      %524 = vmatmul.mubr.f32.gmra.mrb[0].mxu0 %v375
      %v525 = vpop.f32.mrb[0].mxu0
      %v526 = vadd.f32 0.0, %v525
      %v527 = vpop.f32.mrb[0].mxu0
      %528 = vmatprep.mubr.f32.mxu0 0.0
      %529 = vmatmul.mubr.f32.gmra.mrb[0].mxu0 %v376
      %v530 = vpop.f32.mrb[0].mxu0
      %v531 = vadd.f32 0.0, %v530
      %v532 = vpop.f32.mrb[0].mxu0
      %533 = vmatprep.mubr.f32.mxu0 0.0
      %534 = vmatmul.mubr.f32.gmra.mrb[0].mxu0 %v377
      %v535 = vpop.f32.mrb[0].mxu0
      %v536 = vadd.f32 0.0, %v535
      %v537 = vpop.f32.mrb[0].mxu0
      %538 = vmatprep.mubr.f32.mxu0 0.0
      %539 = vmatmul.mubr.f32.gmra.mrb[0].mxu0 %v378
      %v540 = vpop.f32.mrb[0].mxu0
      %v541 = vadd.f32 0.0, %v540
      %v542 = vpop.f32.mrb[0].mxu0
      %543 = vmatprep.mubr.f32.mxu0 0.0
      %544 = vmatmul.mubr.f32.gmra.mrb[0].mxu0 %v379
      %v545 = vpop.f32.mrb[0].mxu0
      %v546 = vadd.f32 0.0, %v545
      %v547 = vpop.f32.mrb[0].mxu0
      %548 = vmatprep.mubr.f32.mxu0 0.0
      %549 = vmatmul.mubr.f32.gmra.mrb[0].mxu0 %v380
      %v550 = vpop.f32.mrb[0].mxu0
      %v551 = vadd.f32 0.0, %v550
      %v552 = vpop.f32.mrb[0].mxu0
      %553 = vmatprep.mubr.f32.mxu0 0.0
      %554 = vmatmul.mubr.f32.gmra.mrb[0].mxu0 %v381
      %v555 = vpop.f32.mrb[0].mxu0
      %v556 = vadd.f32 0.0, %v555
      %v557 = vpop.f32.mrb[0].mxu0
      %558 = vmatprep.mubr.f32.mxu0 0.0
      %559 = vmatmul.mubr.f32.gmra.mrb[0].mxu0 %v382
      %v560 = vpop.f32.mrb[0].mxu0
      %v561 = vadd.f32 0.0, %v560
      %v562 = vpop.f32.mrb[0].mxu0
      %563 = vmatprep.mubr.f32.mxu0 0.0
      %564 = vmatmul.mubr.f32.gmra.mrb[0].mxu0 %v383
      %v565 = vpop.f32.mrb[0].mxu0
      %v566 = vadd.f32 0.0, %v565
      %v567 = vpop.f32.mrb[0].mxu0
      %568 = vmatprep.mubr.f32.mxu0 0.0
      %569 = vmatmul.mubr.f32.gmra.mrb[0].mxu0 %v384
      %v570 = vpop.f32.mrb[0].mxu0
      %v571 = vadd.f32 0.0, %v570
      %v572 = vpop.f32.mrb[0].mxu0
      %573 = vmatprep.mubr.f32.mxu0 0.0
      %574 = vmatmul.mubr.f32.gmra.mrb[0].mxu0 %v385
      %v575 = vpop.f32.mrb[0].mxu0
      %v576 = vadd.f32 0.0, %v575
      %v577 = vpop.f32.mrb[0].mxu0
      %578 = vmatprep.mubr.f32.mxu0 0.0
      %579 = vmatmul.mubr.f32.gmra.mrb[0].mxu0 %v386
      %v580 = vpop.f32.mrb[0].mxu0
      %v581 = vadd.f32 0.0, %v580
      %v582 = vpop.f32.mrb[0].mxu0
      %583 = vmatprep.mubr.f32.mxu0 0.0
      %584 = vmatmul.mubr.f32.gmra.mrb[0].mxu0 %v387
      %v585 = vpop.f32.mrb[0].mxu0
      %v586 = vadd.f32 0.0, %v585
      %v587 = vpop.f32.mrb[0].mxu0
      %588 = vmatprep.mubr.f32.mxu0 0.0
      %589 = vmatmul.mubr.f32.gmra.mrb[0].mxu0 %v388
      %v590 = vpop.f32.mrb[0].mxu0
      %v591 = vadd.f32 0.0, %v590
      %v592 = vpop.f32.mrb[0].mxu0
      %593 = vmatprep.mubr.f32.mxu0 0.0
      %594 = vmatmul.mubr.f32.gmra.mrb[0].mxu0 %v389
      %v595 = vpop.f32.mrb[0].mxu0
      %v596 = vadd.f32 0.0, %v595
      %v597 = vpop.f32.mrb[0].mxu0
      %598 = vmatprep.mubr.f32.mxu0 0.0
      %599 = vmatmul.mubr.f32.gmra.mrb[0].mxu0 %v390
      %v600 = vpop.f32.mrb[0].mxu0
      %v601 = vadd.f32 0.0, %v600
      %v602 = vpop.f32.mrb[0].mxu0
      %603 = vmatprep.mubr.f32.mxu0 0.0
      %604 = vmatmul.mubr.f32.gmra.mrb[0].mxu0 %v391
      %v605 = vpop.f32.mrb[0].mxu0
      %v606 = vadd.f32 0.0, %v605
      %v607 = vpop.f32.mrb[0].mxu0
      %608 = vmatprep.mubr.f32.mxu0 0.0
      %609 = vmatmul.mubr.f32.gmra.mrb[0].mxu0 %v392
      %v610 = vpop.f32.mrb[0].mxu0
      %v611 = vadd.f32 0.0, %v610
      %v612 = vpop.f32.mrb[0].mxu0
      %613 = vmatprep.mubr.f32.mxu0 0.0
      %614 = vmatmul.mubr.f32.gmra.mrb[0].mxu0 %v393
      %v615 = vpop.f32.mrb[0].mxu0
      %v616 = vadd.f32 0.0, %v615
      %v617 = vpop.f32.mrb[0].mxu0
      %618 = vmatprep.mubr.f32.mxu0 0.0
      %619 = vmatmul.mubr.f32.gmra.mrb[0].mxu0 %v394
      %v620 = vpop.f32.mrb[0].mxu0
      %v621 = vadd.f32 0.0, %v620
      %v622 = vpop.f32.mrb[0].mxu0
      %623 = vmatprep.mubr.f32.mxu0 0.0
      %624 = vmatmul.mubr.f32.gmra.mrb[0].mxu0 %v395
      %v625 = vpop.f32.mrb[0].mxu0
      %v626 = vadd.f32 0.0, %v625
      %v627 = vpop.f32.mrb[0].mxu0
      %628 = vmatprep.mubr.f32.mxu0 0.0
      %629 = vmatmul.mubr.f32.gmra.mrb[0].mxu0 %v396
      %v630 = vpop.f32.mrb[0].mxu0
      %v631 = vadd.f32 0.0, %v630
      %v632 = vpop.f32.mrb[0].mxu0
      %633 = vmatprep.mubr.f32.mxu0 0.0
      %634 = vmatmul.mubr.f32.gmra.mrb[0].mxu0 %v397
      %v635 = vpop.f32.mrb[0].mxu0
      %v636 = vadd.f32 0.0, %v635
      %v637 = vpop.f32.mrb[0].mxu0
      %638 = vdwg.mxu0
      %639 = vst [vmem:[%s248] sm:$0xff] %v481
      %640 = vst [vmem:[%s248 + $0x8] sm:$0xff] %v486
      %641 = vst [vmem:[%s248 + $0x10] sm:$0xff] %v491
      %642 = vst [vmem:[%s248 + $0x18] sm:$0xff] %v496
      %643 = vst [vmem:[%s248 + $0x20] sm:$0xff] %v501
      %644 = vst [vmem:[%s248 + $0x28] sm:$0xff] %v506
      %645 = vst [vmem:[%s248 + $0x30] sm:$0xff] %v511
      %646 = vst [vmem:[%s248 + $0x38] sm:$0xff] %v516
      %647 = vst [vmem:[%s248 + $0x40] sm:$0xff] %v521
      %648 = vst [vmem:[%s248 + $0x48] sm:$0xff] %v526
      %649 = vst [vmem:[%s248 + $0x50] sm:$0xff] %v531
      %650 = vst [vmem:[%s248 + $0x58] sm:$0xff] %v536
      %651 = vst [vmem:[%s248 + $0x60] sm:$0xff] %v541
      %652 = vst [vmem:[%s248 + $0x68] sm:$0xff] %v546
      %653 = vst [vmem:[%s248 + $0x70] sm:$0xff] %v551
      %654 = vst [vmem:[%s248 + $0x78] sm:$0xff] %v556
      %655 = vst [vmem:[%s248 + $0x80] sm:$0xff] %v561
      %656 = vst [vmem:[%s248 + $0x88] sm:$0xff] %v566
      %657 = vst [vmem:[%s248 + $0x90] sm:$0xff] %v571
      %658 = vst [vmem:[%s248 + $0x98] sm:$0xff] %v576
      %659 = vst [vmem:[%s248 + $0xa0] sm:$0xff] %v581
      %660 = vst [vmem:[%s248 + $0xa8] sm:$0xff] %v586
      %661 = vst [vmem:[%s248 + $0xb0] sm:$0xff] %v591
      %662 = vst [vmem:[%s248 + $0xb8] sm:$0xff] %v596
      %663 = vst [vmem:[%s248 + $0xc0] sm:$0xff] %v601
      %664 = vst [vmem:[%s248 + $0xc8] sm:$0xff] %v606
      %665 = vst [vmem:[%s248 + $0xd0] sm:$0xff] %v611
      %666 = vst [vmem:[%s248 + $0xd8] sm:$0xff] %v616
      %667 = vst [vmem:[%s248 + $0xe0] sm:$0xff] %v621
      %668 = vst [vmem:[%s248 + $0xe8] sm:$0xff] %v626
      %669 = vst [vmem:[%s248 + $0xf0] sm:$0xff] %v631
      %670 = vst [vmem:[%s248 + $0xf8] sm:$0xff] %v636
      %v671 = vlaneseq
      %v672 = vshrl.u32 %v671, 7
      %v673 = vadd.s32 %v672, 8
      %v674 = vadd.s32 %v672, 16
      %v675 = vadd.s32 %v672, 24
      %v676 = vadd.s32 %v672, 32
      %v677 = vadd.s32 %v672, 40
      %v678 = vadd.s32 %v672, 48
      %v679 = vadd.s32 %v672, 56
      %v680 = vadd.s32 %v672, 64
      %v681 = vadd.s32 %v672, 72
      %v682 = vadd.s32 %v672, 80
      %v683 = vadd.s32 %v672, 88
      %v684 = vadd.s32 %v672, 96
      %v685 = vadd.s32 %v672, 104
      %v686 = vadd.s32 %v672, 112
      %v687 = vadd.s32 %v672, 120
      %v688 = vadd.s32 %v672, 128
      %v689 = vadd.s32 %v672, 136
      %v690 = vadd.s32 %v672, 144
      %v691 = vadd.s32 %v672, 152
      %v692 = vadd.s32 %v672, 160
      %v693 = vadd.s32 %v672, 168
      %v694 = vadd.s32 %v672, 176
      %v695 = vadd.s32 %v672, 184
      %v696 = vadd.s32 %v672, 192
      %v697 = vadd.s32 %v672, 200
      %v698 = vadd.s32 %v672, 208
      %v699 = vadd.s32 %v672, 216
      %v700 = vadd.s32 %v672, 224
      %v701 = vadd.s32 %v672, 232
      %v702 = vadd.s32 %v672, 240
      %v703 = vadd.s32 %v672, 248
      %s704 = smul.u32 %s18, 256
      %v705 = vstv %s704
      %v706 = vadd.s32 %v672, %v705
      %v707 = vadd.s32 %v673, %v705
      %v708 = vadd.s32 %v674, %v705
      %v709 = vadd.s32 %v675, %v705
      %v710 = vadd.s32 %v676, %v705
      %v711 = vadd.s32 %v677, %v705
      %v712 = vadd.s32 %v678, %v705
      %v713 = vadd.s32 %v679, %v705
      %v714 = vadd.s32 %v680, %v705
      %v715 = vadd.s32 %v681, %v705
      %v716 = vadd.s32 %v682, %v705
      %v717 = vadd.s32 %v683, %v705
      %v718 = vadd.s32 %v684, %v705
      %v719 = vadd.s32 %v685, %v705
      %v720 = vadd.s32 %v686, %v705
      %v721 = vadd.s32 %v687, %v705
      %v722 = vadd.s32 %v688, %v705
      %v723 = vadd.s32 %v689, %v705
      %v724 = vadd.s32 %v690, %v705
      %v725 = vadd.s32 %v691, %v705
      %v726 = vadd.s32 %v692, %v705
      %v727 = vadd.s32 %v693, %v705
      %v728 = vadd.s32 %v694, %v705
      %v729 = vadd.s32 %v695, %v705
      %v730 = vadd.s32 %v696, %v705
      %v731 = vadd.s32 %v697, %v705
      %v732 = vadd.s32 %v698, %v705
      %v733 = vadd.s32 %v699, %v705
      %v734 = vadd.s32 %v700, %v705
      %v735 = vadd.s32 %v701, %v705
      %v736 = vadd.s32 %v702, %v705
      %v737 = vadd.s32 %v703, %v705
      %vm738 = vcmp.lt.s32.totalorder %v706, 512
      %vm739 = vcmp.lt.s32.totalorder %v707, 512
      %vm740 = vcmp.lt.s32.totalorder %v708, 512
      %vm741 = vcmp.lt.s32.totalorder %v709, 512
      %vm742 = vcmp.lt.s32.totalorder %v710, 512
      %vm743 = vcmp.lt.s32.totalorder %v711, 512
      %vm744 = vcmp.lt.s32.totalorder %v712, 512
      %vm745 = vcmp.lt.s32.totalorder %v713, 512
      %vm746 = vcmp.lt.s32.totalorder %v714, 512
      %vm747 = vcmp.lt.s32.totalorder %v715, 512
      %vm748 = vcmp.lt.s32.totalorder %v716, 512
      %vm749 = vcmp.lt.s32.totalorder %v717, 512
      %vm750 = vcmp.lt.s32.totalorder %v718, 512
      %vm751 = vcmp.lt.s32.totalorder %v719, 512
      %vm752 = vcmp.lt.s32.totalorder %v720, 512
      %vm753 = vcmp.lt.s32.totalorder %v721, 512
      %vm754 = vcmp.lt.s32.totalorder %v722, 512
      %vm755 = vcmp.lt.s32.totalorder %v723, 512
      %vm756 = vcmp.lt.s32.totalorder %v724, 512
      %vm757 = vcmp.lt.s32.totalorder %v725, 512
      %vm758 = vcmp.lt.s32.totalorder %v726, 512
      %vm759 = vcmp.lt.s32.totalorder %v727, 512
      %vm760 = vcmp.lt.s32.totalorder %v728, 512
      %vm761 = vcmp.lt.s32.totalorder %v729, 512
      %vm762 = vcmp.lt.s32.totalorder %v730, 512
      %vm763 = vcmp.lt.s32.totalorder %v731, 512
      %vm764 = vcmp.lt.s32.totalorder %v732, 512
      %vm765 = vcmp.lt.s32.totalorder %v733, 512
      %vm766 = vcmp.lt.s32.totalorder %v734, 512
      %vm767 = vcmp.lt.s32.totalorder %v735, 512
      %vm768 = vcmp.lt.s32.totalorder %v736, 512
      %vm769 = vcmp.lt.s32.totalorder %v737, 512
      %v770 = vsel %vm738, 1, 0
      %v771 = vsel %vm739, 1, 0
      %v772 = vsel %vm740, 1, 0
      %v773 = vsel %vm741, 1, 0
      %v774 = vsel %vm742, 1, 0
      %v775 = vsel %vm743, 1, 0
      %v776 = vsel %vm744, 1, 0
      %v777 = vsel %vm745, 1, 0
      %v778 = vsel %vm746, 1, 0
      %v779 = vsel %vm747, 1, 0
      %v780 = vsel %vm748, 1, 0
      %v781 = vsel %vm749, 1, 0
      %v782 = vsel %vm750, 1, 0
      %v783 = vsel %vm751, 1, 0
      %v784 = vsel %vm752, 1, 0
      %v785 = vsel %vm753, 1, 0
      %v786 = vsel %vm754, 1, 0
      %v787 = vsel %vm755, 1, 0
      %v788 = vsel %vm756, 1, 0
      %v789 = vsel %vm757, 1, 0
      %v790 = vsel %vm758, 1, 0
      %v791 = vsel %vm759, 1, 0
      %v792 = vsel %vm760, 1, 0
      %v793 = vsel %vm761, 1, 0
      %v794 = vsel %vm762, 1, 0
      %v795 = vsel %vm763, 1, 0
      %v796 = vsel %vm764, 1, 0
      %v797 = vsel %vm765, 1, 0
      %v798 = vsel %vm766, 1, 0
      %v799 = vsel %vm767, 1, 0
      %v800 = vsel %vm768, 1, 0
      %v801 = vsel %vm769, 1, 0
      %vm802 = vcmp.eq.s32.totalorder %v770, 1
      %vm803 = vcmp.eq.s32.totalorder %v771, 1
      %vm804 = vcmp.eq.s32.totalorder %v772, 1
      %vm805 = vcmp.eq.s32.totalorder %v773, 1
      %vm806 = vcmp.eq.s32.totalorder %v774, 1
      %vm807 = vcmp.eq.s32.totalorder %v775, 1
      %vm808 = vcmp.eq.s32.totalorder %v776, 1
      %vm809 = vcmp.eq.s32.totalorder %v777, 1
      %vm810 = vcmp.eq.s32.totalorder %v778, 1
      %vm811 = vcmp.eq.s32.totalorder %v779, 1
      %vm812 = vcmp.eq.s32.totalorder %v780, 1
      %vm813 = vcmp.eq.s32.totalorder %v781, 1
      %vm814 = vcmp.eq.s32.totalorder %v782, 1
      %vm815 = vcmp.eq.s32.totalorder %v783, 1
      %vm816 = vcmp.eq.s32.totalorder %v784, 1
      %vm817 = vcmp.eq.s32.totalorder %v785, 1
      %vm818 = vcmp.eq.s32.totalorder %v786, 1
      %vm819 = vcmp.eq.s32.totalorder %v787, 1
      %vm820 = vcmp.eq.s32.totalorder %v788, 1
      %vm821 = vcmp.eq.s32.totalorder %v789, 1
      %vm822 = vcmp.eq.s32.totalorder %v790, 1
      %vm823 = vcmp.eq.s32.totalorder %v791, 1
      %vm824 = vcmp.eq.s32.totalorder %v792, 1
      %vm825 = vcmp.eq.s32.totalorder %v793, 1
      %vm826 = vcmp.eq.s32.totalorder %v794, 1
      %vm827 = vcmp.eq.s32.totalorder %v795, 1
      %vm828 = vcmp.eq.s32.totalorder %v796, 1
      %vm829 = vcmp.eq.s32.totalorder %v797, 1
      %vm830 = vcmp.eq.s32.totalorder %v798, 1
      %vm831 = vcmp.eq.s32.totalorder %v799, 1
      %vm832 = vcmp.eq.s32.totalorder %v800, 1
      %vm833 = vcmp.eq.s32.totalorder %v801, 1
      %v834 = vsel %vm802, %v481, 0.0
      %v835 = vsel %vm803, %v486, 0.0
      %v836 = vsel %vm804, %v491, 0.0
      %v837 = vsel %vm805, %v496, 0.0
      %v838 = vsel %vm806, %v501, 0.0
      %v839 = vsel %vm807, %v506, 0.0
      %v840 = vsel %vm808, %v511, 0.0
      %v841 = vsel %vm809, %v516, 0.0
      %v842 = vsel %vm810, %v521, 0.0
      %v843 = vsel %vm811, %v526, 0.0
      %v844 = vsel %vm812, %v531, 0.0
      %v845 = vsel %vm813, %v536, 0.0
      %v846 = vsel %vm814, %v541, 0.0
      %v847 = vsel %vm815, %v546, 0.0
      %v848 = vsel %vm816, %v551, 0.0
      %v849 = vsel %vm817, %v556, 0.0
      %v850 = vsel %vm818, %v561, 0.0
      %v851 = vsel %vm819, %v566, 0.0
      %v852 = vsel %vm820, %v571, 0.0
      %v853 = vsel %vm821, %v576, 0.0
      %v854 = vsel %vm822, %v581, 0.0
      %v855 = vsel %vm823, %v586, 0.0
      %v856 = vsel %vm824, %v591, 0.0
      %v857 = vsel %vm825, %v596, 0.0
      %v858 = vsel %vm826, %v601, 0.0
      %v859 = vsel %vm827, %v606, 0.0
      %v860 = vsel %vm828, %v611, 0.0
      %v861 = vsel %vm829, %v616, 0.0
      %v862 = vsel %vm830, %v621, 0.0
      %v863 = vsel %vm831, %v626, 0.0
      %v864 = vsel %vm832, %v631, 0.0
      %v865 = vsel %vm833, %v636, 0.0
      %v866 = vld [vmem:[%s5] sm:$0x1]
      %v867 = vadd.f32 %v834, %v835
      %v868 = vadd.f32 %v867, %v836
      %v869 = vadd.f32 %v868, %v837
      %v870 = vadd.f32 %v869, %v838
      %v871 = vadd.f32 %v870, %v839
      %v872 = vadd.f32 %v871, %v840
      %v873 = vadd.f32 %v872, %v841
      %v874 = vadd.f32 %v873, %v842
      %v875 = vadd.f32 %v874, %v843
      %v876 = vadd.f32 %v875, %v844
      %v877 = vadd.f32 %v876, %v845
      %v878 = vadd.f32 %v877, %v846
      %v879 = vadd.f32 %v878, %v847
      %v880 = vadd.f32 %v879, %v848
      %v881 = vadd.f32 %v880, %v849
      %v882 = vadd.f32 %v881, %v850
      %v883 = vadd.f32 %v882, %v851
      %v884 = vadd.f32 %v883, %v852
      %v885 = vadd.f32 %v884, %v853
      %v886 = vadd.f32 %v885, %v854
      %v887 = vadd.f32 %v886, %v855
      %v888 = vadd.f32 %v887, %v856
      %v889 = vadd.f32 %v888, %v857
      %v890 = vadd.f32 %v889, %v858
      %v891 = vadd.f32 %v890, %v859
      %v892 = vadd.f32 %v891, %v860
      %v893 = vadd.f32 %v892, %v861
      %v894 = vadd.f32 %v893, %v862
      %v895 = vadd.f32 %v894, %v863
      %v896 = vadd.f32 %v895, %v864
      %v897 = vadd.f32 %v896, %v865
      %v898 = vrot.slane %v897, 4
      %v899 = vadd.f32 %v897, %v898
      %v900 = vrot.slane %v899, 2
      %v901 = vadd.f32 %v899, %v900
      %v902 = vrot.slane %v901, 1
      %v903 = vadd.f32 %v901, %v902
      %v904 = vadd.f32 %v866, %v903
      %905 = vst [vmem:[%s5] sm:$0x1] %v904
      %v906 = vld [vmem:[%s6] sm:$0x1]
      %v907 = vmul.f32 %v834, %v834
      %v908 = vmul.f32 %v835, %v835
      %v909 = vmul.f32 %v836, %v836
      %v910 = vmul.f32 %v837, %v837
      %v911 = vmul.f32 %v838, %v838
      %v912 = vmul.f32 %v839, %v839
      %v913 = vmul.f32 %v840, %v840
      %v914 = vmul.f32 %v841, %v841
      %v915 = vmul.f32 %v842, %v842
      %v916 = vmul.f32 %v843, %v843
      %v917 = vmul.f32 %v844, %v844
      %v918 = vmul.f32 %v845, %v845
      %v919 = vmul.f32 %v846, %v846
      %v920 = vmul.f32 %v847, %v847
      %v921 = vmul.f32 %v848, %v848
      %v922 = vmul.f32 %v849, %v849
      %v923 = vmul.f32 %v850, %v850
      %v924 = vmul.f32 %v851, %v851
      %v925 = vmul.f32 %v852, %v852
      %v926 = vmul.f32 %v853, %v853
      %v927 = vmul.f32 %v854, %v854
      %v928 = vmul.f32 %v855, %v855
      %v929 = vmul.f32 %v856, %v856
      %v930 = vmul.f32 %v857, %v857
      %v931 = vmul.f32 %v858, %v858
      %v932 = vmul.f32 %v859, %v859
      %v933 = vmul.f32 %v860, %v860
      %v934 = vmul.f32 %v861, %v861
      %v935 = vmul.f32 %v862, %v862
      %v936 = vmul.f32 %v863, %v863
      %v937 = vmul.f32 %v864, %v864
      %v938 = vmul.f32 %v865, %v865
      %v939 = vadd.f32 %v907, %v908
      %v940 = vadd.f32 %v939, %v909
      %v941 = vadd.f32 %v940, %v910
      %v942 = vadd.f32 %v941, %v911
      %v943 = vadd.f32 %v942, %v912
      %v944 = vadd.f32 %v943, %v913
      %v945 = vadd.f32 %v944, %v914
      %v946 = vadd.f32 %v945, %v915
      %v947 = vadd.f32 %v946, %v916
      %v948 = vadd.f32 %v947, %v917
      %v949 = vadd.f32 %v948, %v918
      %v950 = vadd.f32 %v949, %v919
      %v951 = vadd.f32 %v950, %v920
      %v952 = vadd.f32 %v951, %v921
      %v953 = vadd.f32 %v952, %v922
      %v954 = vadd.f32 %v953, %v923
      %v955 = vadd.f32 %v954, %v924
      %v956 = vadd.f32 %v955, %v925
      %v957 = vadd.f32 %v956, %v926
      %v958 = vadd.f32 %v957, %v927
      %v959 = vadd.f32 %v958, %v928
      %v960 = vadd.f32 %v959, %v929
      %v961 = vadd.f32 %v960, %v930
      %v962 = vadd.f32 %v961, %v931
      %v963 = vadd.f32 %v962, %v932
      %v964 = vadd.f32 %v963, %v933
      %v965 = vadd.f32 %v964, %v934
      %v966 = vadd.f32 %v965, %v935
      %v967 = vadd.f32 %v966, %v936
      %v968 = vadd.f32 %v967, %v937
      %v969 = vadd.f32 %v968, %v938
      %v970 = vrot.slane %v969, 4
      %v971 = vadd.f32 %v969, %v970
      %v972 = vrot.slane %v971, 2
      %v973 = vadd.f32 %v971, %v972
      %v974 = vrot.slane %v973, 1
      %v975 = vadd.f32 %v973, %v974
      %v976 = vadd.f32 %v906, %v975
      %977 = vst [vmem:[%s6] sm:$0x1] %v976
      %s978 = smul.u32 32, %s18
      %p979 = scmp.lt.s32.totalorder %s978, 63
      %s980 = scalar_select %p979, %s978, 63
      %s981 = smul.addr %s980, 8
      %s982 = scalar_lea.vmem %s4, %s981
      // Predicated region
      $region41: #{_big_res_block.5} parent=35 // pred_check
        %p983 = pneg %p125
      $region42: #{_big_res_block.5} parent=35 // pred_check_branch
        %985 = sbr.rel (%p983) target = $region44
      $region43: #{_big_res_block.5} parent=35 // pred_region
        %s986 = smul.u32 32, %s18
      $region44: #{_big_res_block.5} parent=35 // pred_fallthru
        _
      // Predicated region
      $region45: #{_big_res_block.5} parent=35 // pred_check
        %p987 = pneg %p146
      $region46: #{_big_res_block.5} parent=35 // pred_check_branch
        %989 = sbr.rel (%p987) target = $region48
      $region47: #{_big_res_block.5} parent=35 // pred_region
        _
      $region48: #{_big_res_block.5} parent=35 // pred_fallthru
        _
      // Predicated region
      $region49: #{_big_res_block.5} parent=35 // pred_check
        %p990 = pneg %p167
      $region50: #{_big_res_block.5} parent=35 // pred_check_branch
        %992 = sbr.rel (%p990) target = $region52
      $region51: #{_big_res_block.5} parent=35 // pred_region
        _
      $region52: #{_big_res_block.5} parent=35 // pred_fallthru
        _
      // Predicated region
      $region53: #{_big_res_block.5} parent=35 // pred_check
        %p993 = pneg %p146
      $region54: #{_big_res_block.5} parent=35 // pred_check_branch
        %995 = sbr.rel (%p993) target = $region56
      $region55: #{_big_res_block.5} parent=35 // pred_region
        _
      $region56: #{_big_res_block.5} parent=35 // pred_fallthru
        _
      // Predicated region
      $region57: #{_big_res_block.5} parent=35 // pred_check
        %p996 = pneg %p167
      $region58: #{_big_res_block.5} parent=35 // pred_check_branch
        %998 = sbr.rel (%p996) target = $region60
      $region59: #{_big_res_block.5} parent=35 // pred_region
        _
      $region60: #{_big_res_block.5} parent=35 // pred_fallthru
        _
    $region36: #{_big_res_block.5} parent=5 // pred_fallthru
      _
    %p999 = scmp.le.s32.totalorder 2, %s13
    // Predicated region
    $region61: #{_big_res_block.5} parent=5 // pred_check
      %p1000 = pneg %p999
    $region62: #{_big_res_block.5} parent=5 // pred_check_branch
      %1002 = sbr.rel (%p1000) target = $region64
    $region63: #{_big_res_block.5} parent=5 // pred_region
      %s1003 = ssub.s32 %s13, 2
      // Predicated region
      $region65: #{_big_res_block.5} parent=63 // pred_check
        %p1004 = pneg %p131
      $region66: #{_big_res_block.5} parent=63 // pred_check_branch
        %1006 = sbr.rel (%p1004) target = $region68
      $region67: #{_big_res_block.5} parent=63 // pred_region
        %s1007 = smul.u32 32, %s19
        %p1008 = scmp.lt.s32.totalorder %s1007, 63
        %s1009 = scalar_select %p1008, %s1007, 63
        %s1010 = smul.addr %s1009, 8
        %s1011 = scalar_lea.vmem %s4, %s1010
      $region68: #{_big_res_block.5} parent=63 // pred_fallthru
        _
    $region64: #{_big_res_block.5} parent=5 // pred_fallthru
      _
  $region6: #{_big_res_block.5} parent=0 // loop_footer
    %s17 = sadd.s32 1, %s13
  $region7: #{_big_res_block.5} parent=0 // loop_footer_branch
    %12 = sbr.rel target = $region3
  $region8: #{_big_res_block.5} parent=0 // loop_exit
    _

// kernel: _big_res_block.6
$region0: #{_big_res_block.6}
  #allocation0 [shape = 'u32[]', space=smem, size = 0x4, offset = 0x4, fixed_abs, tag = 'smem constant byte address 0x4 - core index']
  #allocation1 [shape = 'u32[144,128]{1,0:T(1,128)}', space=vmem, size = 0x12000, scoped, tag = 'internal scratch']
  %s0 = inlined_call_operand.vmem [shape: f32[2,10,10,128], index: 0, kind: input, shape index: {}]
  %s1 = inlined_call_operand.vmem [shape: f32[2,10,10,128], index: 1, kind: input, shape index: {}]
  %s2 = inlined_call_operand.vmem [shape: f32[2,10,10,128], index: 2, kind: input, shape index: {}]
  %s3 = inlined_call_operand.vmem [shape: f32[2,10,10,128], index: 3, kind: input, shape index: {}]
  %s4 = inlined_call_operand.vmem [shape: f32[4,10,10,1], index: 4, kind: input, shape index: {}]
  %s5 = inlined_call_operand.vmem [shape: f32[1,128], index: 5, kind: input, shape index: {}]
  %s6 = inlined_call_operand.vmem [shape: f32[1,128], index: 6, kind: input, shape index: {}]
  %s7 = inlined_call_operand.vmem [shape: f32[9,128,128], index: 7, kind: input, shape index: {}]
  %s8 = inlined_call_operand.vmem [shape: f32[2,64,128], index: 8, kind: output, shape index: {0}]
  %s9 = inlined_call_operand.vmem [shape: f32[1,128], index: 9, kind: output, shape index: {1}]
  %s10 = inlined_call_operand.vmem [shape: f32[1,128], index: 10, kind: output, shape index: {2}]
  %11 = xla_tuple %s8, %s9, %s10
  %s12 = sld [smem:[#allocation0]]
  $region85: #{_big_res_block.6} parent=0
    _
  %s14 = ssub.s32 1, %s12
  %s15 = scalar_select 0, %s14, %s12
  loop: start=0, step=1, limit=4
  $region2: #{_big_res_block.6} parent=0 // loop_pre_header
    _
  $region3: #{_big_res_block.6} parent=0 // loop_header
    %s17 = sphi 0, %s21
    %p18 = scmp.ge.s32.totalorder %s17, 4
    %s27 = sphi 0, %s29
    %s30 = sphi 0, %s27
    %s31 = sphi 0, %s30
    %s47 = sphi 0, %s31
    %s53 = sphi 0, %s55
    %s56 = sphi 0, %s53
    %s57 = sphi 0, %s56
    %s73 = sphi 0, %s57
    %s79 = sphi 0, %s81
    %s82 = sphi 0, %s79
    %s83 = sphi 0, %s82
    %s99 = sphi 0, %s83
    %s105 = sphi 0, %s107
    %s108 = sphi 0, %s105
    %s109 = sphi 0, %s108
    %s125 = sphi 0, %s109
    %s129 = sphi 0, %s129
    %s131 = sphi 0, %s129
    %s132 = sphi 0, %s131
    %s146 = sphi 0, %s132
    %s150 = sphi 0, %s150
    %s152 = sphi 0, %s150
    %s153 = sphi 0, %s152
    %s167 = sphi 0, %s153
    %s171 = sphi 0, %s171
    %s173 = sphi 0, %s171
    %s174 = sphi 0, %s173
    %s188 = sphi 0, %s174
    %s192 = sphi 0, %s192
    %s194 = sphi 0, %s192
    %s195 = sphi 0, %s194
    %s209 = sphi 0, %s195
    %s215 = sphi 0, %s217
    %s218 = sphi 0, %s215
    %s219 = sphi 0, %s218
    %s235 = sphi 0, %s219
    %s239 = sphi 0, %s239
    %s241 = sphi 0, %s239
    %s242 = sphi 0, %s241
    %s256 = sphi 0, %s242
    %s260 = sphi 0, %s260
    %s262 = sphi 0, %s260
    %s263 = sphi 0, %s262
    %s277 = sphi 0, %s263
  $region4: #{_big_res_block.6} parent=0 // loop_header_branch
    %20 = sbr.rel (%p18) target = $region8
  $region5: #{_big_res_block.6} parent=0 // loop_body
    %s22 = ssub.s32 %s17, 1
    %s23 = ssub.s32 %s17, 2
    %s24 = sadd.s32 %s17, 1
    %s25 = ssub.s32 %s17, %s24
    %p26 = scmp.eq.s32.totalorder %s25, 0
    %s28 = sadd.s32 %s27, 1
    %s29 = scalar_select %p26, %s27, %s28
    %p32 = pneg %p26
    %p33 = scmp.eq.s32.totalorder %s17, 1
    %p34 = por %p32, %p33
    %p35 = scmp.ne.s32.totalorder %s27, %s30
    %p36 = scmp.eq.s32.totalorder %s17, 0
    %p37 = por %p35, %p36
    %p38 = scmp.ne.s32.totalorder %s27, %s30
    %p39 = scmp.eq.s32.totalorder %s22, 1
    %p40 = por %p38, %p39
    %p41 = scmp.ne.s32.totalorder %s30, %s31
    %p42 = scmp.eq.s32.totalorder %s22, 0
    %p43 = por %p41, %p42
    %p44 = scmp.ne.s32.totalorder %s30, %s31
    %p45 = scmp.eq.s32.totalorder %s23, 1
    %p46 = por %p44, %p45
    %p48 = scmp.ne.s32.totalorder %s31, %s47
    %p49 = scmp.eq.s32.totalorder %s23, 0
    %p50 = por %p48, %p49
    %s51 = ssub.s32 %s17, %s24
    %p52 = scmp.eq.s32.totalorder %s51, 0
    %s54 = sadd.s32 %s53, 1
    %s55 = scalar_select %p52, %s53, %s54
    %p58 = pneg %p52
    %p59 = scmp.eq.s32.totalorder %s17, 1
    %p60 = por %p58, %p59
    %p61 = scmp.ne.s32.totalorder %s53, %s56
    %p62 = scmp.eq.s32.totalorder %s17, 0
    %p63 = por %p61, %p62
    %p64 = scmp.ne.s32.totalorder %s53, %s56
    %p65 = scmp.eq.s32.totalorder %s22, 1
    %p66 = por %p64, %p65
    %p67 = scmp.ne.s32.totalorder %s56, %s57
    %p68 = scmp.eq.s32.totalorder %s22, 0
    %p69 = por %p67, %p68
    %p70 = scmp.ne.s32.totalorder %s56, %s57
    %p71 = scmp.eq.s32.totalorder %s23, 1
    %p72 = por %p70, %p71
    %p74 = scmp.ne.s32.totalorder %s57, %s73
    %p75 = scmp.eq.s32.totalorder %s23, 0
    %p76 = por %p74, %p75
    %s77 = ssub.s32 %s17, %s24
    %p78 = scmp.eq.s32.totalorder %s77, 0
    %s80 = sadd.s32 %s79, 1
    %s81 = scalar_select %p78, %s79, %s80
    %p84 = pneg %p78
    %p85 = scmp.eq.s32.totalorder %s17, 1
    %p86 = por %p84, %p85
    %p87 = scmp.ne.s32.totalorder %s79, %s82
    %p88 = scmp.eq.s32.totalorder %s17, 0
    %p89 = por %p87, %p88
    %p90 = scmp.ne.s32.totalorder %s79, %s82
    %p91 = scmp.eq.s32.totalorder %s22, 1
    %p92 = por %p90, %p91
    %p93 = scmp.ne.s32.totalorder %s82, %s83
    %p94 = scmp.eq.s32.totalorder %s22, 0
    %p95 = por %p93, %p94
    %p96 = scmp.ne.s32.totalorder %s82, %s83
    %p97 = scmp.eq.s32.totalorder %s23, 1
    %p98 = por %p96, %p97
    %p100 = scmp.ne.s32.totalorder %s83, %s99
    %p101 = scmp.eq.s32.totalorder %s23, 0
    %p102 = por %p100, %p101
    %s103 = ssub.s32 %s17, %s24
    %p104 = scmp.eq.s32.totalorder %s103, 0
    %s106 = sadd.s32 %s105, 1
    %s107 = scalar_select %p104, %s105, %s106
    %p110 = pneg %p104
    %p111 = scmp.eq.s32.totalorder %s17, 1
    %p112 = por %p110, %p111
    %p113 = scmp.ne.s32.totalorder %s105, %s108
    %p114 = scmp.eq.s32.totalorder %s17, 0
    %p115 = por %p113, %p114
    %p116 = scmp.ne.s32.totalorder %s105, %s108
    %p117 = scmp.eq.s32.totalorder %s22, 1
    %p118 = por %p116, %p117
    %p119 = scmp.ne.s32.totalorder %s108, %s109
    %p120 = scmp.eq.s32.totalorder %s22, 0
    %p121 = por %p119, %p120
    %p122 = scmp.ne.s32.totalorder %s108, %s109
    %p123 = scmp.eq.s32.totalorder %s23, 1
    %p124 = por %p122, %p123
    %p126 = scmp.ne.s32.totalorder %s109, %s125
    %p127 = scmp.eq.s32.totalorder %s23, 0
    %p128 = por %p126, %p127
    %s130 = sadd.s32 %s129, 1
    %p133 = scmp.eq.s32.totalorder %s17, 1
    %p134 = scmp.ne.s32.totalorder %s129, %s131
    %p135 = scmp.eq.s32.totalorder %s17, 0
    %p136 = por %p134, %p135
    %p137 = scmp.ne.s32.totalorder %s129, %s131
    %p138 = scmp.eq.s32.totalorder %s22, 1
    %p139 = por %p137, %p138
    %p140 = scmp.ne.s32.totalorder %s131, %s132
    %p141 = scmp.eq.s32.totalorder %s22, 0
    %p142 = por %p140, %p141
    %p143 = scmp.ne.s32.totalorder %s131, %s132
    %p144 = scmp.eq.s32.totalorder %s23, 1
    %p145 = por %p143, %p144
    %p147 = scmp.ne.s32.totalorder %s132, %s146
    %p148 = scmp.eq.s32.totalorder %s23, 0
    %p149 = por %p147, %p148
    %s151 = sadd.s32 %s150, 1
    %p154 = scmp.eq.s32.totalorder %s17, 1
    %p155 = scmp.ne.s32.totalorder %s150, %s152
    %p156 = scmp.eq.s32.totalorder %s17, 0
    %p157 = por %p155, %p156
    %p158 = scmp.ne.s32.totalorder %s150, %s152
    %p159 = scmp.eq.s32.totalorder %s22, 1
    %p160 = por %p158, %p159
    %p161 = scmp.ne.s32.totalorder %s152, %s153
    %p162 = scmp.eq.s32.totalorder %s22, 0
    %p163 = por %p161, %p162
    %p164 = scmp.ne.s32.totalorder %s152, %s153
    %p165 = scmp.eq.s32.totalorder %s23, 1
    %p166 = por %p164, %p165
    %p168 = scmp.ne.s32.totalorder %s153, %s167
    %p169 = scmp.eq.s32.totalorder %s23, 0
    %p170 = por %p168, %p169
    %s172 = sadd.s32 %s171, 1
    %p175 = scmp.eq.s32.totalorder %s17, 1
    %p176 = scmp.ne.s32.totalorder %s171, %s173
    %p177 = scmp.eq.s32.totalorder %s17, 0
    %p178 = por %p176, %p177
    %p179 = scmp.ne.s32.totalorder %s171, %s173
    %p180 = scmp.eq.s32.totalorder %s22, 1
    %p181 = por %p179, %p180
    %p182 = scmp.ne.s32.totalorder %s173, %s174
    %p183 = scmp.eq.s32.totalorder %s22, 0
    %p184 = por %p182, %p183
    %p185 = scmp.ne.s32.totalorder %s173, %s174
    %p186 = scmp.eq.s32.totalorder %s23, 1
    %p187 = por %p185, %p186
    %p189 = scmp.ne.s32.totalorder %s174, %s188
    %p190 = scmp.eq.s32.totalorder %s23, 0
    %p191 = por %p189, %p190
    %s193 = sadd.s32 %s192, 1
    %p196 = scmp.eq.s32.totalorder %s17, 1
    %p197 = scmp.ne.s32.totalorder %s192, %s194
    %p198 = scmp.eq.s32.totalorder %s17, 0
    %p199 = por %p197, %p198
    %p200 = scmp.ne.s32.totalorder %s192, %s194
    %p201 = scmp.eq.s32.totalorder %s22, 1
    %p202 = por %p200, %p201
    %p203 = scmp.ne.s32.totalorder %s194, %s195
    %p204 = scmp.eq.s32.totalorder %s22, 0
    %p205 = por %p203, %p204
    %p206 = scmp.ne.s32.totalorder %s194, %s195
    %p207 = scmp.eq.s32.totalorder %s23, 1
    %p208 = por %p206, %p207
    %p210 = scmp.ne.s32.totalorder %s195, %s209
    %p211 = scmp.eq.s32.totalorder %s23, 0
    %p212 = por %p210, %p211
    %s213 = ssub.s32 %s17, %s24
    %p214 = scmp.eq.s32.totalorder %s213, 0
    %s216 = sadd.s32 %s215, 1
    %s217 = scalar_select %p214, %s215, %s216
    %p220 = pneg %p214
    %p221 = scmp.eq.s32.totalorder %s17, 1
    %p222 = por %p220, %p221
    %p223 = scmp.ne.s32.totalorder %s215, %s218
    %p224 = scmp.eq.s32.totalorder %s17, 0
    %p225 = por %p223, %p224
    %p226 = scmp.ne.s32.totalorder %s215, %s218
    %p227 = scmp.eq.s32.totalorder %s22, 1
    %p228 = por %p226, %p227
    %p229 = scmp.ne.s32.totalorder %s218, %s219
    %p230 = scmp.eq.s32.totalorder %s22, 0
    %p231 = por %p229, %p230
    %p232 = scmp.ne.s32.totalorder %s218, %s219
    %p233 = scmp.eq.s32.totalorder %s23, 1
    %p234 = por %p232, %p233
    %p236 = scmp.ne.s32.totalorder %s219, %s235
    %p237 = scmp.eq.s32.totalorder %s23, 0
    %p238 = por %p236, %p237
    %s240 = sadd.s32 %s239, 1
    %p243 = scmp.eq.s32.totalorder %s17, 1
    %p244 = scmp.ne.s32.totalorder %s239, %s241
    %p245 = scmp.eq.s32.totalorder %s17, 0
    %p246 = por %p244, %p245
    %p247 = scmp.ne.s32.totalorder %s239, %s241
    %p248 = scmp.eq.s32.totalorder %s22, 1
    %p249 = por %p247, %p248
    %p250 = scmp.ne.s32.totalorder %s241, %s242
    %p251 = scmp.eq.s32.totalorder %s22, 0
    %p252 = por %p250, %p251
    %p253 = scmp.ne.s32.totalorder %s241, %s242
    %p254 = scmp.eq.s32.totalorder %s23, 1
    %p255 = por %p253, %p254
    %p257 = scmp.ne.s32.totalorder %s242, %s256
    %p258 = scmp.eq.s32.totalorder %s23, 0
    %p259 = por %p257, %p258
    %s261 = sadd.s32 %s260, 1
    %p264 = scmp.eq.s32.totalorder %s17, 1
    %p265 = scmp.ne.s32.totalorder %s260, %s262
    %p266 = scmp.eq.s32.totalorder %s17, 0
    %p267 = por %p265, %p266
    %p268 = scmp.ne.s32.totalorder %s260, %s262
    %p269 = scmp.eq.s32.totalorder %s22, 1
    %p270 = por %p268, %p269
    %p271 = scmp.ne.s32.totalorder %s262, %s263
    %p272 = scmp.eq.s32.totalorder %s22, 0
    %p273 = por %p271, %p272
    %p274 = scmp.ne.s32.totalorder %s262, %s263
    %p275 = scmp.eq.s32.totalorder %s23, 1
    %p276 = por %p274, %p275
    %p278 = scmp.ne.s32.totalorder %s263, %s277
    %p279 = scmp.eq.s32.totalorder %s23, 0
    %p280 = por %p278, %p279
    %p281 = scmp.le.s32.totalorder 1, %s17
    %p282 = scmp.lt.s32.totalorder %s17, 3
    %p283 = pnand %p281, %p282
    %p284 = pneg %p283
    // Predicated region
    $region9: #{_big_res_block.6} parent=5 // pred_check
      _
    $region10: #{_big_res_block.6} parent=5 // pred_check_branch
      %286 = sbr.rel (%p283) target = $region12
    $region11: #{_big_res_block.6} parent=5 // pred_region
      %s287 = ssub.s32 %s17, 1
      // Predicated region
      $region13: #{_big_res_block.6} parent=11 // pred_check
        %p288 = pneg %p142
      $region14: #{_big_res_block.6} parent=11 // pred_check_branch
        %290 = sbr.rel (%p288) target = $region16
      $region15: #{_big_res_block.6} parent=11 // pred_region
        _
      $region16: #{_big_res_block.6} parent=11 // pred_fallthru
        _
      // Predicated region
      $region17: #{_big_res_block.6} parent=11 // pred_check
        %p291 = pneg %p163
      $region18: #{_big_res_block.6} parent=11 // pred_check_branch
        %293 = sbr.rel (%p291) target = $region20
      $region19: #{_big_res_block.6} parent=11 // pred_region
        _
      $region20: #{_big_res_block.6} parent=11 // pred_fallthru
        _
      // Predicated region
      $region21: #{_big_res_block.6} parent=11 // pred_check
        %p294 = pneg %p184
      $region22: #{_big_res_block.6} parent=11 // pred_check_branch
        %296 = sbr.rel (%p294) target = $region24
      $region23: #{_big_res_block.6} parent=11 // pred_region
        _
      $region24: #{_big_res_block.6} parent=11 // pred_fallthru
        _
      // Predicated region
      $region25: #{_big_res_block.6} parent=11 // pred_check
        %p297 = pneg %p205
      $region26: #{_big_res_block.6} parent=11 // pred_check_branch
        %299 = sbr.rel (%p297) target = $region28
      $region27: #{_big_res_block.6} parent=11 // pred_region
        _
      $region28: #{_big_res_block.6} parent=11 // pred_fallthru
        _
    $region12: #{_big_res_block.6} parent=5 // pred_fallthru
      _
    %p300 = scmp.lt.s32.totalorder %s17, 2
    // Predicated region
    $region29: #{_big_res_block.6} parent=5 // pred_check
      %p301 = pneg %p300
    $region30: #{_big_res_block.6} parent=5 // pred_check_branch
      %303 = sbr.rel (%p301) target = $region32
    $region31: #{_big_res_block.6} parent=5 // pred_region
      // Predicated region
      $region33: #{_big_res_block.6} parent=31 // pred_check
        %p304 = pneg %p37
      $region34: #{_big_res_block.6} parent=31 // pred_check_branch
        %306 = sbr.rel (%p304) target = $region36
      $region35: #{_big_res_block.6} parent=31 // pred_region
        %p307 = scmp.lt.s32.totalorder %s17, 1
        %s308 = scalar_select %p307, %s17, 1
        %s309 = smul.addr %s308, 20
        %s310 = smul.addr %s309, 8
        %s311 = scalar_lea.vmem %s0, %s310
      $region36: #{_big_res_block.6} parent=31 // pred_fallthru
        _
      // Predicated region
      $region37: #{_big_res_block.6} parent=31 // pred_check
        %p312 = pneg %p63
      $region38: #{_big_res_block.6} parent=31 // pred_check_branch
        %314 = sbr.rel (%p312) target = $region40
      $region39: #{_big_res_block.6} parent=31 // pred_region
        %p315 = scmp.lt.s32.totalorder %s17, 1
        %s316 = scalar_select %p315, %s17, 1
        %s317 = smul.addr %s316, 20
        %s318 = smul.addr %s317, 8
        %s319 = scalar_lea.vmem %s1, %s318
      $region40: #{_big_res_block.6} parent=31 // pred_fallthru
        _
      // Predicated region
      $region41: #{_big_res_block.6} parent=31 // pred_check
        %p320 = pneg %p89
      $region42: #{_big_res_block.6} parent=31 // pred_check_branch
        %322 = sbr.rel (%p320) target = $region44
      $region43: #{_big_res_block.6} parent=31 // pred_region
        %p323 = scmp.lt.s32.totalorder %s17, 1
        %s324 = scalar_select %p323, %s17, 1
        %s325 = smul.addr %s324, 20
        %s326 = smul.addr %s325, 8
        %s327 = scalar_lea.vmem %s2, %s326
      $region44: #{_big_res_block.6} parent=31 // pred_fallthru
        _
      // Predicated region
      $region45: #{_big_res_block.6} parent=31 // pred_check
        %p328 = pneg %p115
      $region46: #{_big_res_block.6} parent=31 // pred_check_branch
        %330 = sbr.rel (%p328) target = $region48
      $region47: #{_big_res_block.6} parent=31 // pred_region
        %p331 = scmp.lt.s32.totalorder %s17, 1
        %s332 = scalar_select %p331, %s17, 1
        %s333 = smul.addr %s332, 20
        %s334 = smul.addr %s333, 8
        %s335 = scalar_lea.vmem %s3, %s334
      $region48: #{_big_res_block.6} parent=31 // pred_fallthru
        _
    $region32: #{_big_res_block.6} parent=5 // pred_fallthru
      _
    %p336 = scmp.le.s32.totalorder 1, %s17
    %p337 = scmp.lt.s32.totalorder %s17, 3
    %p338 = pnand %p336, %p337
    %p339 = pneg %p338
    // Predicated region
    $region49: #{_big_res_block.6} parent=5 // pred_check
      _
    $region50: #{_big_res_block.6} parent=5 // pred_check_branch
      %341 = sbr.rel (%p338) target = $region52
    $region51: #{_big_res_block.6} parent=5 // pred_region
      %s342 = ssub.s32 %s17, 1
      %p343 = scmp.lt.s32.totalorder %s22, 1
      %s344 = scalar_select %p343, %s22, 1
      %s345 = smul.addr %s344, 20
      %s346 = smul.addr %s345, 8
      %s347 = scalar_lea.vmem %s0, %s346
      %p348 = pneg %p43
      %p349 = pneg %p40
      %p350 = scmp.lt.s32.totalorder %s22, 1
      %s351 = scalar_select %p350, %s22, 1
      %s352 = smul.addr %s351, 20
      %s353 = smul.addr %s352, 8
      %s354 = scalar_lea.vmem %s1, %s353
      %p355 = pneg %p69
      %p356 = pneg %p66
      %p357 = scmp.lt.s32.totalorder %s22, 1
      %s358 = scalar_select %p357, %s22, 1
      %s359 = smul.addr %s358, 20
      %s360 = smul.addr %s359, 8
      %s361 = scalar_lea.vmem %s2, %s360
      %p362 = pneg %p95
      %p363 = pneg %p92
      %p364 = scmp.lt.s32.totalorder %s22, 1
      %s365 = scalar_select %p364, %s22, 1
      %s366 = smul.addr %s365, 20
      %s367 = smul.addr %s366, 8
      %s368 = scalar_lea.vmem %s3, %s367
      %p369 = pneg %p121
      %p370 = pneg %p118
      %p371 = pneg %p142
      %p372 = pneg %p139
      %p373 = pneg %p163
      %p374 = pneg %p160
      %p375 = pneg %p184
      %p376 = pneg %p181
      %p377 = pneg %p205
      %p378 = pneg %p202
      %p379 = pneg %p231
      %p380 = pneg %p228
      %p381 = scmp.lt.s32.totalorder %s22, 1
      %s382 = scalar_select %p381, %s22, 1
      %s383 = smul.addr %s382, 8
      %s384 = smul.addr %s383, 8
      %s385 = scalar_lea.vmem %s8, %s384
      %p386 = pneg %p252
      %p387 = pneg %p249
      %p388 = pneg %p273
      %p389 = pneg %p270
      %p390 = scmp.lt.s32.totalorder %s22, 1
      %s391 = scalar_select %p390, %s22, 1
      %s392 = smul.addr %s391, 20
      %s393 = smul.addr %s392, 8
      %s394 = scalar_lea.vmem %s0, %s393
      %p395 = scmp.lt.s32.totalorder %s22, 1
      %s396 = scalar_select %p395, %s22, 1
      %s397 = smul.addr %s396, 20
      %s398 = smul.addr %s397, 8
      %s399 = scalar_lea.vmem %s1, %s398
      %p400 = scmp.lt.s32.totalorder %s22, 1
      %s401 = scalar_select %p400, %s22, 1
      %s402 = smul.addr %s401, 20
      %s403 = smul.addr %s402, 8
      %s404 = scalar_lea.vmem %s2, %s403
      %p405 = scmp.lt.s32.totalorder %s22, 1
      %s406 = scalar_select %p405, %s22, 1
      %s407 = smul.addr %s406, 20
      %s408 = smul.addr %s407, 8
      %s409 = scalar_lea.vmem %s3, %s408
      %p410 = scmp.lt.s32.totalorder %s22, 1
      %s411 = scalar_select %p410, %s22, 1
      %s412 = smul.addr %s411, 8
      %s413 = smul.addr %s412, 8
      %s414 = scalar_lea.vmem %s8, %s413
      %p415 = scmp.eq.s32.totalorder %s22, 0
      // Predicated region
      $region53: #{_big_res_block.6} parent=51 // pred_check
        %p416 = pneg %p415
      $region54: #{_big_res_block.6} parent=51 // pred_check_branch
        %418 = sbr.rel (%p416) target = $region56
      $region55: #{_big_res_block.6} parent=51 // pred_region
        %419 = vst [vmem:[%s9] sm:$0x1] 0.0
        %420 = vst [vmem:[%s10] sm:$0x1] 0.0
      $region56: #{_big_res_block.6} parent=51 // pred_fallthru
        _
      %v421 = vld [vmem:[%s5] sm:$0x1]
      %v422 = vld [vmem:[%s6] sm:$0x1]
      %v423 = vld [vmem:[%s394] sm:$0xff]
      %v424 = vld [vmem:[%s394 + $0x8] sm:$0x3]
      %v425 = vld [vmem:[%s394 + $0x10] sm:$0xff]
      %v426 = vld [vmem:[%s394 + $0x18] sm:$0x3]
      %v427 = vld [vmem:[%s394 + $0x20] sm:$0xff]
      %v428 = vld [vmem:[%s394 + $0x28] sm:$0x3]
      %v429 = vld [vmem:[%s394 + $0x30] sm:$0xff]
      %v430 = vld [vmem:[%s394 + $0x38] sm:$0x3]
      %v431 = vld [vmem:[%s394 + $0x40] sm:$0xff]
      %v432 = vld [vmem:[%s394 + $0x48] sm:$0x3]
      %v433 = vld [vmem:[%s394 + $0x50] sm:$0xff]
      %v434 = vld [vmem:[%s394 + $0x58] sm:$0x3]
      %v435 = vld [vmem:[%s394 + $0x60] sm:$0xff]
      %v436 = vld [vmem:[%s394 + $0x68] sm:$0x3]
      %v437 = vld [vmem:[%s394 + $0x70] sm:$0xff]
      %v438 = vld [vmem:[%s394 + $0x78] sm:$0x3]
      %v439 = vld [vmem:[%s394 + $0x80] sm:$0xff]
      %v440 = vld [vmem:[%s394 + $0x88] sm:$0x3]
      %v441 = vld [vmem:[%s4] sm:$0xff]
      %v442 = vld [vmem:[%s4 + $0x8] sm:$0x3]
      %v443 = vld [vmem:[%s4 + $0x10] sm:$0xff]
      %v444 = vld [vmem:[%s4 + $0x18] sm:$0x3]
      %v445 = vld [vmem:[%s4 + $0x20] sm:$0xff]
      %v446 = vld [vmem:[%s4 + $0x28] sm:$0x3]
      %v447 = vld [vmem:[%s4 + $0x30] sm:$0xff]
      %v448 = vld [vmem:[%s4 + $0x38] sm:$0x3]
      %v449 = vld [vmem:[%s4 + $0x40] sm:$0xff]
      %v450 = vld [vmem:[%s4 + $0x48] sm:$0x3]
      %v451 = vld [vmem:[%s4 + $0x50] sm:$0xff]
      %v452 = vld [vmem:[%s4 + $0x58] sm:$0x3]
      %v453 = vld [vmem:[%s4 + $0x60] sm:$0xff]
      %v454 = vld [vmem:[%s4 + $0x68] sm:$0x3]
      %v455 = vld [vmem:[%s4 + $0x70] sm:$0xff]
      %v456 = vld [vmem:[%s4 + $0x78] sm:$0x3]
      %v457 = vld [vmem:[%s4 + $0x80] sm:$0xff]
      %v458 = vld [vmem:[%s4 + $0x88] sm:$0x3]
      %v460 = vlaneseq
      %v461 = vshrl.u32 %v460, 7
      %v462 = vsub.s32 0, %v461
      %v463 = vrot.slane %v421, %v462
      %v465 = vmul.f32 %v423, %v463
      %v466 = vmul.f32 %v424, %v463
      %v467 = vmul.f32 %v425, %v463
      %v468 = vmul.f32 %v426, %v463
      %v469 = vmul.f32 %v427, %v463
      %v470 = vmul.f32 %v428, %v463
      %v471 = vmul.f32 %v429, %v463
      %v472 = vmul.f32 %v430, %v463
      %v473 = vmul.f32 %v431, %v463
      %v474 = vmul.f32 %v432, %v463
      %v475 = vmul.f32 %v433, %v463
      %v476 = vmul.f32 %v434, %v463
      %v477 = vmul.f32 %v435, %v463
      %v478 = vmul.f32 %v436, %v463
      %v479 = vmul.f32 %v437, %v463
      %v480 = vmul.f32 %v438, %v463
      %v481 = vmul.f32 %v439, %v463
      %v482 = vmul.f32 %v440, %v463
      %v484 = vlaneseq
      %v485 = vshrl.u32 %v484, 7
      %v486 = vsub.s32 0, %v485
      %v487 = vrot.slane %v422, %v486
      %v489 = vadd.f32 %v465, %v487
      %v490 = vadd.f32 %v466, %v487
      %v491 = vadd.f32 %v467, %v487
      %v492 = vadd.f32 %v468, %v487
      %v493 = vadd.f32 %v469, %v487
      %v494 = vadd.f32 %v470, %v487
      %v495 = vadd.f32 %v471, %v487
      %v496 = vadd.f32 %v472, %v487
      %v497 = vadd.f32 %v473, %v487
      %v498 = vadd.f32 %v474, %v487
      %v499 = vadd.f32 %v475, %v487
      %v500 = vadd.f32 %v476, %v487
      %v501 = vadd.f32 %v477, %v487
      %v502 = vadd.f32 %v478, %v487
      %v503 = vadd.f32 %v479, %v487
      %v504 = vadd.f32 %v480, %v487
      %v505 = vadd.f32 %v481, %v487
      %v506 = vadd.f32 %v482, %v487
      %v507 = vmax.f32 %v489, 0.0
      %v508 = vmax.f32 %v490, 0.0
      %v509 = vmax.f32 %v491, 0.0
      %v510 = vmax.f32 %v492, 0.0
      %v511 = vmax.f32 %v493, 0.0
      %v512 = vmax.f32 %v494, 0.0
      %v513 = vmax.f32 %v495, 0.0
      %v514 = vmax.f32 %v496, 0.0
      %v515 = vmax.f32 %v497, 0.0
      %v516 = vmax.f32 %v498, 0.0
      %v517 = vmax.f32 %v499, 0.0
      %v518 = vmax.f32 %v500, 0.0
      %v519 = vmax.f32 %v501, 0.0
      %v520 = vmax.f32 %v502, 0.0
      %v521 = vmax.f32 %v503, 0.0
      %v522 = vmax.f32 %v504, 0.0
      %v523 = vmax.f32 %v505, 0.0
      %v524 = vmax.f32 %v506, 0.0
      %526 = vset.pattern.permute.xlu0 0
      %527 = vperm.xlu0 %526, %v441
      %v528 = vpop.permute.xlu0 %527
      %531 = vset.pattern.permute.xlu0 0
      %532 = vperm.xlu0 %531, %v442
      %v533 = vpop.permute.xlu0 %532
      %536 = vset.pattern.permute.xlu0 0
      %537 = vperm.xlu0 %536, %v443
      %v538 = vpop.permute.xlu0 %537
      %541 = vset.pattern.permute.xlu0 0
      %542 = vperm.xlu0 %541, %v444
      %v543 = vpop.permute.xlu0 %542
      %546 = vset.pattern.permute.xlu0 0
      %547 = vperm.xlu0 %546, %v445
      %v548 = vpop.permute.xlu0 %547
      %551 = vset.pattern.permute.xlu0 0
      %552 = vperm.xlu0 %551, %v446
      %v553 = vpop.permute.xlu0 %552
      %556 = vset.pattern.permute.xlu0 0
      %557 = vperm.xlu0 %556, %v447
      %v558 = vpop.permute.xlu0 %557
      %561 = vset.pattern.permute.xlu0 0
      %562 = vperm.xlu0 %561, %v448
      %v563 = vpop.permute.xlu0 %562
      %566 = vset.pattern.permute.xlu0 0
      %567 = vperm.xlu0 %566, %v449
      %v568 = vpop.permute.xlu0 %567
      %571 = vset.pattern.permute.xlu0 0
      %572 = vperm.xlu0 %571, %v450
      %v573 = vpop.permute.xlu0 %572
      %576 = vset.pattern.permute.xlu0 0
      %577 = vperm.xlu0 %576, %v451
      %v578 = vpop.permute.xlu0 %577
      %581 = vset.pattern.permute.xlu0 0
      %582 = vperm.xlu0 %581, %v452
      %v583 = vpop.permute.xlu0 %582
      %586 = vset.pattern.permute.xlu0 0
      %587 = vperm.xlu0 %586, %v453
      %v588 = vpop.permute.xlu0 %587
      %591 = vset.pattern.permute.xlu0 0
      %592 = vperm.xlu0 %591, %v454
      %v593 = vpop.permute.xlu0 %592
      %596 = vset.pattern.permute.xlu0 0
      %597 = vperm.xlu0 %596, %v455
      %v598 = vpop.permute.xlu0 %597
      %601 = vset.pattern.permute.xlu0 0
      %602 = vperm.xlu0 %601, %v456
      %v603 = vpop.permute.xlu0 %602
      %606 = vset.pattern.permute.xlu0 0
      %607 = vperm.xlu0 %606, %v457
      %v608 = vpop.permute.xlu0 %607
      %611 = vset.pattern.permute.xlu0 0
      %612 = vperm.xlu0 %611, %v458
      %v613 = vpop.permute.xlu0 %612
      %v615 = vmul.f32 %v507, %v528
      %v616 = vmul.f32 %v508, %v533
      %v617 = vmul.f32 %v509, %v538
      %v618 = vmul.f32 %v510, %v543
      %v619 = vmul.f32 %v511, %v548
      %v620 = vmul.f32 %v512, %v553
      %v621 = vmul.f32 %v513, %v558
      %v622 = vmul.f32 %v514, %v563
      %v623 = vmul.f32 %v515, %v568
      %v624 = vmul.f32 %v516, %v573
      %v625 = vmul.f32 %v517, %v578
      %v626 = vmul.f32 %v518, %v583
      %v627 = vmul.f32 %v519, %v588
      %v628 = vmul.f32 %v520, %v593
      %v629 = vmul.f32 %v521, %v598
      %v630 = vmul.f32 %v522, %v603
      %v631 = vmul.f32 %v523, %v608
      %v632 = vmul.f32 %v524, %v613
      %v633 = vld [vmem:[%s399] sm:$0xff]
      %v634 = vld [vmem:[%s399 + $0x10] sm:$0xff]
      %v635 = vld [vmem:[%s399 + $0x20] sm:$0xff]
      %v636 = vld [vmem:[%s399 + $0x30] sm:$0xff]
      %v637 = vld [vmem:[%s399 + $0x40] sm:$0xff]
      %v638 = vld [vmem:[%s399 + $0x50] sm:$0xff]
      %v639 = vld [vmem:[%s399 + $0x60] sm:$0xff]
      %v640 = vld [vmem:[%s399 + $0x70] sm:$0xff]
      %v641 = vld [vmem:[%s399 + $0x80] sm:$0xff]
      %s642 = scalar_lea.vmem %s4, 160
      %v643 = vld [vmem:[%s642] sm:$0xff]
      %v644 = vld [vmem:[%s642 + $0x10] sm:$0xff]
      %v645 = vld [vmem:[%s642 + $0x20] sm:$0xff]
      %v646 = vld [vmem:[%s642 + $0x30] sm:$0xff]
      %v647 = vld [vmem:[%s642 + $0x40] sm:$0xff]
      %v648 = vld [vmem:[%s642 + $0x50] sm:$0xff]
      %v649 = vld [vmem:[%s642 + $0x60] sm:$0xff]
      %v650 = vld [vmem:[%s642 + $0x70] sm:$0xff]
      %v651 = vld [vmem:[%s642 + $0x80] sm:$0xff]
      %v652 = vmul.f32 %v633, %v463
      %v653 = vmul.f32 %v634, %v463
      %v654 = vmul.f32 %v635, %v463
      %v655 = vmul.f32 %v636, %v463
      %v656 = vmul.f32 %v637, %v463
      %v657 = vmul.f32 %v638, %v463
      %v658 = vmul.f32 %v639, %v463
      %v659 = vmul.f32 %v640, %v463
      %v660 = vmul.f32 %v641, %v463
      %v661 = vadd.f32 %v652, %v487
      %v662 = vadd.f32 %v653, %v487
      %v663 = vadd.f32 %v654, %v487
      %v664 = vadd.f32 %v655, %v487
      %v665 = vadd.f32 %v656, %v487
      %v666 = vadd.f32 %v657, %v487
      %v667 = vadd.f32 %v658, %v487
      %v668 = vadd.f32 %v659, %v487
      %v669 = vadd.f32 %v660, %v487
      %v670 = vmax.f32 %v661, 0.0
      %v671 = vmax.f32 %v662, 0.0
      %v672 = vmax.f32 %v663, 0.0
      %v673 = vmax.f32 %v664, 0.0
      %v674 = vmax.f32 %v665, 0.0
      %v675 = vmax.f32 %v666, 0.0
      %v676 = vmax.f32 %v667, 0.0
      %v677 = vmax.f32 %v668, 0.0
      %v678 = vmax.f32 %v669, 0.0
      %680 = vset.pattern.permute.xlu0 0
      %681 = vperm.xlu0 %680, %v643
      %v682 = vpop.permute.xlu0 %681
      %685 = vset.pattern.permute.xlu0 0
      %686 = vperm.xlu0 %685, %v644
      %v687 = vpop.permute.xlu0 %686
      %690 = vset.pattern.permute.xlu0 0
      %691 = vperm.xlu0 %690, %v645
      %v692 = vpop.permute.xlu0 %691
      %695 = vset.pattern.permute.xlu0 0
      %696 = vperm.xlu0 %695, %v646
      %v697 = vpop.permute.xlu0 %696
      %700 = vset.pattern.permute.xlu0 0
      %701 = vperm.xlu0 %700, %v647
      %v702 = vpop.permute.xlu0 %701
      %705 = vset.pattern.permute.xlu0 0
      %706 = vperm.xlu0 %705, %v648
      %v707 = vpop.permute.xlu0 %706
      %710 = vset.pattern.permute.xlu0 0
      %711 = vperm.xlu0 %710, %v649
      %v712 = vpop.permute.xlu0 %711
      %715 = vset.pattern.permute.xlu0 0
      %716 = vperm.xlu0 %715, %v650
      %v717 = vpop.permute.xlu0 %716
      %720 = vset.pattern.permute.xlu0 0
      %721 = vperm.xlu0 %720, %v651
      %v722 = vpop.permute.xlu0 %721
      %v724 = vmul.f32 %v670, %v682
      %v725 = vmul.f32 %v671, %v687
      %v726 = vmul.f32 %v672, %v692
      %v727 = vmul.f32 %v673, %v697
      %v728 = vmul.f32 %v674, %v702
      %v729 = vmul.f32 %v675, %v707
      %v730 = vmul.f32 %v676, %v712
      %v731 = vmul.f32 %v677, %v717
      %v732 = vmul.f32 %v678, %v722
      %v733 = vld [vmem:[%s404] sm:$0xff]
      %v734 = vld [vmem:[%s404 + $0x8] sm:$0x3]
      %v735 = vld [vmem:[%s404 + $0x10] sm:$0xff]
      %v736 = vld [vmem:[%s404 + $0x18] sm:$0x3]
      %v737 = vld [vmem:[%s404 + $0x20] sm:$0xff]
      %v738 = vld [vmem:[%s404 + $0x28] sm:$0x3]
      %v739 = vld [vmem:[%s404 + $0x30] sm:$0xff]
      %v740 = vld [vmem:[%s404 + $0x38] sm:$0x3]
      %v741 = vld [vmem:[%s404 + $0x40] sm:$0xff]
      %v742 = vld [vmem:[%s404 + $0x48] sm:$0x3]
      %v743 = vld [vmem:[%s404 + $0x50] sm:$0xff]
      %v744 = vld [vmem:[%s404 + $0x58] sm:$0x3]
      %v745 = vld [vmem:[%s404 + $0x60] sm:$0xff]
      %v746 = vld [vmem:[%s404 + $0x68] sm:$0x3]
      %v747 = vld [vmem:[%s404 + $0x70] sm:$0xff]
      %v748 = vld [vmem:[%s404 + $0x78] sm:$0x3]
      %s749 = scalar_lea.vmem %s4, 320
      %v750 = vld [vmem:[%s749] sm:$0xff]
      %v751 = vld [vmem:[%s749 + $0x8] sm:$0x3]
      %v752 = vld [vmem:[%s749 + $0x10] sm:$0xff]
      %v753 = vld [vmem:[%s749 + $0x18] sm:$0x3]
      %v754 = vld [vmem:[%s749 + $0x20] sm:$0xff]
      %v755 = vld [vmem:[%s749 + $0x28] sm:$0x3]
      %v756 = vld [vmem:[%s749 + $0x30] sm:$0xff]
      %v757 = vld [vmem:[%s749 + $0x38] sm:$0x3]
      %v758 = vld [vmem:[%s749 + $0x40] sm:$0xff]
      %v759 = vld [vmem:[%s749 + $0x48] sm:$0x3]
      %v760 = vld [vmem:[%s749 + $0x50] sm:$0xff]
      %v761 = vld [vmem:[%s749 + $0x58] sm:$0x3]
      %v762 = vld [vmem:[%s749 + $0x60] sm:$0xff]
      %v763 = vld [vmem:[%s749 + $0x68] sm:$0x3]
      %v764 = vld [vmem:[%s749 + $0x70] sm:$0xff]
      %v765 = vld [vmem:[%s749 + $0x78] sm:$0x3]
      %v766 = vmul.f32 %v733, %v463
      %v767 = vmul.f32 %v734, %v463
      %v768 = vmul.f32 %v735, %v463
      %v769 = vmul.f32 %v736, %v463
      %v770 = vmul.f32 %v737, %v463
      %v771 = vmul.f32 %v738, %v463
      %v772 = vmul.f32 %v739, %v463
      %v773 = vmul.f32 %v740, %v463
      %v774 = vmul.f32 %v741, %v463
      %v775 = vmul.f32 %v742, %v463
      %v776 = vmul.f32 %v743, %v463
      %v777 = vmul.f32 %v744, %v463
      %v778 = vmul.f32 %v745, %v463
      %v779 = vmul.f32 %v746, %v463
      %v780 = vmul.f32 %v747, %v463
      %v781 = vmul.f32 %v748, %v463
      %v782 = vadd.f32 %v766, %v487
      %v783 = vadd.f32 %v767, %v487
      %v784 = vadd.f32 %v768, %v487
      %v785 = vadd.f32 %v769, %v487
      %v786 = vadd.f32 %v770, %v487
      %v787 = vadd.f32 %v771, %v487
      %v788 = vadd.f32 %v772, %v487
      %v789 = vadd.f32 %v773, %v487
      %v790 = vadd.f32 %v774, %v487
      %v791 = vadd.f32 %v775, %v487
      %v792 = vadd.f32 %v776, %v487
      %v793 = vadd.f32 %v777, %v487
      %v794 = vadd.f32 %v778, %v487
      %v795 = vadd.f32 %v779, %v487
      %v796 = vadd.f32 %v780, %v487
      %v797 = vadd.f32 %v781, %v487
      %v798 = vmax.f32 %v782, 0.0
      %v799 = vmax.f32 %v783, 0.0
      %v800 = vmax.f32 %v784, 0.0
      %v801 = vmax.f32 %v785, 0.0
      %v802 = vmax.f32 %v786, 0.0
      %v803 = vmax.f32 %v787, 0.0
      %v804 = vmax.f32 %v788, 0.0
      %v805 = vmax.f32 %v789, 0.0
      %v806 = vmax.f32 %v790, 0.0
      %v807 = vmax.f32 %v791, 0.0
      %v808 = vmax.f32 %v792, 0.0
      %v809 = vmax.f32 %v793, 0.0
      %v810 = vmax.f32 %v794, 0.0
      %v811 = vmax.f32 %v795, 0.0
      %v812 = vmax.f32 %v796, 0.0
      %v813 = vmax.f32 %v797, 0.0
      %815 = vset.pattern.permute.xlu0 0
      %816 = vperm.xlu0 %815, %v750
      %v817 = vpop.permute.xlu0 %816
      %820 = vset.pattern.permute.xlu0 0
      %821 = vperm.xlu0 %820, %v751
      %v822 = vpop.permute.xlu0 %821
      %825 = vset.pattern.permute.xlu0 0
      %826 = vperm.xlu0 %825, %v752
      %v827 = vpop.permute.xlu0 %826
      %830 = vset.pattern.permute.xlu0 0
      %831 = vperm.xlu0 %830, %v753
      %v832 = vpop.permute.xlu0 %831
      %835 = vset.pattern.permute.xlu0 0
      %836 = vperm.xlu0 %835, %v754
      %v837 = vpop.permute.xlu0 %836
      %840 = vset.pattern.permute.xlu0 0
      %841 = vperm.xlu0 %840, %v755
      %v842 = vpop.permute.xlu0 %841
      %845 = vset.pattern.permute.xlu0 0
      %846 = vperm.xlu0 %845, %v756
      %v847 = vpop.permute.xlu0 %846
      %850 = vset.pattern.permute.xlu0 0
      %851 = vperm.xlu0 %850, %v757
      %v852 = vpop.permute.xlu0 %851
      %855 = vset.pattern.permute.xlu0 0
      %856 = vperm.xlu0 %855, %v758
      %v857 = vpop.permute.xlu0 %856
      %860 = vset.pattern.permute.xlu0 0
      %861 = vperm.xlu0 %860, %v759
      %v862 = vpop.permute.xlu0 %861
      %865 = vset.pattern.permute.xlu0 0
      %866 = vperm.xlu0 %865, %v760
      %v867 = vpop.permute.xlu0 %866
      %870 = vset.pattern.permute.xlu0 0
      %871 = vperm.xlu0 %870, %v761
      %v872 = vpop.permute.xlu0 %871
      %875 = vset.pattern.permute.xlu0 0
      %876 = vperm.xlu0 %875, %v762
      %v877 = vpop.permute.xlu0 %876
      %880 = vset.pattern.permute.xlu0 0
      %881 = vperm.xlu0 %880, %v763
      %v882 = vpop.permute.xlu0 %881
      %885 = vset.pattern.permute.xlu0 0
      %886 = vperm.xlu0 %885, %v764
      %v887 = vpop.permute.xlu0 %886
      %890 = vset.pattern.permute.xlu0 0
      %891 = vperm.xlu0 %890, %v765
      %v892 = vpop.permute.xlu0 %891
      %v894 = vmul.f32 %v798, %v817
      %v895 = vmul.f32 %v799, %v822
      %v896 = vmul.f32 %v800, %v827
      %v897 = vmul.f32 %v801, %v832
      %v898 = vmul.f32 %v802, %v837
      %v899 = vmul.f32 %v803, %v842
      %v900 = vmul.f32 %v804, %v847
      %v901 = vmul.f32 %v805, %v852
      %v902 = vmul.f32 %v806, %v857
      %v903 = vmul.f32 %v807, %v862
      %v904 = vmul.f32 %v808, %v867
      %v905 = vmul.f32 %v809, %v872
      %v906 = vmul.f32 %v810, %v877
      %v907 = vmul.f32 %v811, %v882
      %v908 = vmul.f32 %v812, %v887
      %v909 = vmul.f32 %v813, %v892
      %v910 = vld [vmem:[%s409] sm:$0xff]
      %v911 = vld [vmem:[%s409 + $0x10] sm:$0xff]
      %v912 = vld [vmem:[%s409 + $0x20] sm:$0xff]
      %v913 = vld [vmem:[%s409 + $0x30] sm:$0xff]
      %v914 = vld [vmem:[%s409 + $0x40] sm:$0xff]
      %v915 = vld [vmem:[%s409 + $0x50] sm:$0xff]
      %v916 = vld [vmem:[%s409 + $0x60] sm:$0xff]
      %v917 = vld [vmem:[%s409 + $0x70] sm:$0xff]
      %s918 = scalar_lea.vmem %s4, 480
      %v919 = vld [vmem:[%s918] sm:$0xff]
      %v920 = vld [vmem:[%s918 + $0x10] sm:$0xff]
      %v921 = vld [vmem:[%s918 + $0x20] sm:$0xff]
      %v922 = vld [vmem:[%s918 + $0x30] sm:$0xff]
      %v923 = vld [vmem:[%s918 + $0x40] sm:$0xff]
      %v924 = vld [vmem:[%s918 + $0x50] sm:$0xff]
      %v925 = vld [vmem:[%s918 + $0x60] sm:$0xff]
      %v926 = vld [vmem:[%s918 + $0x70] sm:$0xff]
      %v927 = vmul.f32 %v910, %v463
      %v928 = vmul.f32 %v911, %v463
      %v929 = vmul.f32 %v912, %v463
      %v930 = vmul.f32 %v913, %v463
      %v931 = vmul.f32 %v914, %v463
      %v932 = vmul.f32 %v915, %v463
      %v933 = vmul.f32 %v916, %v463
      %v934 = vmul.f32 %v917, %v463
      %v935 = vadd.f32 %v927, %v487
      %v936 = vadd.f32 %v928, %v487
      %v937 = vadd.f32 %v929, %v487
      %v938 = vadd.f32 %v930, %v487
      %v939 = vadd.f32 %v931, %v487
      %v940 = vadd.f32 %v932, %v487
      %v941 = vadd.f32 %v933, %v487
      %v942 = vadd.f32 %v934, %v487
      %v943 = vmax.f32 %v935, 0.0
      %v944 = vmax.f32 %v936, 0.0
      %v945 = vmax.f32 %v937, 0.0
      %v946 = vmax.f32 %v938, 0.0
      %v947 = vmax.f32 %v939, 0.0
      %v948 = vmax.f32 %v940, 0.0
      %v949 = vmax.f32 %v941, 0.0
      %v950 = vmax.f32 %v942, 0.0
      %952 = vset.pattern.permute.xlu0 0
      %953 = vperm.xlu0 %952, %v919
      %v954 = vpop.permute.xlu0 %953
      %957 = vset.pattern.permute.xlu0 0
      %958 = vperm.xlu0 %957, %v920
      %v959 = vpop.permute.xlu0 %958
      %962 = vset.pattern.permute.xlu0 0
      %963 = vperm.xlu0 %962, %v921
      %v964 = vpop.permute.xlu0 %963
      %967 = vset.pattern.permute.xlu0 0
      %968 = vperm.xlu0 %967, %v922
      %v969 = vpop.permute.xlu0 %968
      %972 = vset.pattern.permute.xlu0 0
      %973 = vperm.xlu0 %972, %v923
      %v974 = vpop.permute.xlu0 %973
      %977 = vset.pattern.permute.xlu0 0
      %978 = vperm.xlu0 %977, %v924
      %v979 = vpop.permute.xlu0 %978
      %982 = vset.pattern.permute.xlu0 0
      %983 = vperm.xlu0 %982, %v925
      %v984 = vpop.permute.xlu0 %983
      %987 = vset.pattern.permute.xlu0 0
      %988 = vperm.xlu0 %987, %v926
      %v989 = vpop.permute.xlu0 %988
      %v991 = vmul.f32 %v943, %v954
      %v992 = vmul.f32 %v944, %v959
      %v993 = vmul.f32 %v945, %v964
      %v994 = vmul.f32 %v946, %v969
      %v995 = vmul.f32 %v947, %v974
      %v996 = vmul.f32 %v948, %v979
      %v997 = vmul.f32 %v949, %v984
      %v998 = vmul.f32 %v950, %v989
      %v999 = vld [vmem:[%s7] sm:$0xff]
      %v1000 = vld [vmem:[%s7 + $0x8] sm:$0xff]
      %v1001 = vld [vmem:[%s7 + $0x10] sm:$0xff]
      %v1002 = vld [vmem:[%s7 + $0x18] sm:$0xff]
      %v1003 = vld [vmem:[%s7 + $0x20] sm:$0xff]
      %v1004 = vld [vmem:[%s7 + $0x28] sm:$0xff]
      %v1005 = vld [vmem:[%s7 + $0x30] sm:$0xff]
      %v1006 = vld [vmem:[%s7 + $0x38] sm:$0xff]
      %v1007 = vld [vmem:[%s7 + $0x40] sm:$0xff]
      %v1008 = vld [vmem:[%s7 + $0x48] sm:$0xff]
      %v1009 = vld [vmem:[%s7 + $0x50] sm:$0xff]
      %v1010 = vld [vmem:[%s7 + $0x58] sm:$0xff]
      %v1011 = vld [vmem:[%s7 + $0x60] sm:$0xff]
      %v1012 = vld [vmem:[%s7 + $0x68] sm:$0xff]
      %v1013 = vld [vmem:[%s7 + $0x70] sm:$0xff]
      %v1014 = vld [vmem:[%s7 + $0x78] sm:$0xff]
      %s1015 = scalar_lea.vmem %s7, 128
      %v1016 = vld [vmem:[%s1015] sm:$0xff]
      %v1017 = vld [vmem:[%s1015 + $0x8] sm:$0xff]
      %v1018 = vld [vmem:[%s1015 + $0x10] sm:$0xff]
      %v1019 = vld [vmem:[%s1015 + $0x18] sm:$0xff]
      %v1020 = vld [vmem:[%s1015 + $0x20] sm:$0xff]
      %v1021 = vld [vmem:[%s1015 + $0x28] sm:$0xff]
      %v1022 = vld [vmem:[%s1015 + $0x30] sm:$0xff]
      %v1023 = vld [vmem:[%s1015 + $0x38] sm:$0xff]
      %v1024 = vld [vmem:[%s1015 + $0x40] sm:$0xff]
      %v1025 = vld [vmem:[%s1015 + $0x48] sm:$0xff]
      %v1026 = vld [vmem:[%s1015 + $0x50] sm:$0xff]
      %v1027 = vld [vmem:[%s1015 + $0x58] sm:$0xff]
      %v1028 = vld [vmem:[%s1015 + $0x60] sm:$0xff]
      %v1029 = vld [vmem:[%s1015 + $0x68] sm:$0xff]
      %v1030 = vld [vmem:[%s1015 + $0x70] sm:$0xff]
      %v1031 = vld [vmem:[%s1015 + $0x78] sm:$0xff]
      %1032 = vmatprep.subr.mxu0 0.0
      %1033 = vmatpush1.msra.mxu0 %v1016
      %1034 = vmatprep.subr.mxu0 0.0
      %1035 = vmatpush1.msra.mxu0 %v1017
      %1036 = vmatprep.subr.mxu0 0.0
      %1037 = vmatpush1.msra.mxu0 %v1018
      %1038 = vmatprep.subr.mxu0 0.0
      %1039 = vmatpush1.msra.mxu0 %v1019
      %1040 = vmatprep.subr.mxu0 0.0
      %1041 = vmatpush1.msra.mxu0 %v1020
      %1042 = vmatprep.subr.mxu0 0.0
      %1043 = vmatpush1.msra.mxu0 %v1021
      %1044 = vmatprep.subr.mxu0 0.0
      %1045 = vmatpush1.msra.mxu0 %v1022
      %1046 = vmatprep.subr.mxu0 0.0
      %1047 = vmatpush1.msra.mxu0 %v1023
      %1048 = vmatprep.subr.mxu0 0.0
      %1049 = vmatpush1.msra.mxu0 %v1024
      %1050 = vmatprep.subr.mxu0 0.0
      %1051 = vmatpush1.msra.mxu0 %v1025
      %1052 = vmatprep.subr.mxu0 0.0
      %1053 = vmatpush1.msra.mxu0 %v1026
      %1054 = vmatprep.subr.mxu0 0.0
      %1055 = vmatpush1.msra.mxu0 %v1027
      %1056 = vmatprep.subr.mxu0 0.0
      %1057 = vmatpush1.msra.mxu0 %v1028
      %1058 = vmatprep.subr.mxu0 0.0
      %1059 = vmatpush1.msra.mxu0 %v1029
      %1060 = vmatprep.subr.mxu0 0.0
      %1061 = vmatpush1.msra.mxu0 %v1030
      %1062 = vmatprep.subr.mxu0 0.0
      %1063 = vmatpush1.msra.mxu0 %v1031
      %1064 = vmatprep.subr.mxu0 0.0
      %1065 = vmatpush1.msra.mxu0 0.0
      %1066 = vmatprep.subr.mxu0 0.0
      %1067 = vmatpush1.msra.mxu0 0.0
      %1068 = vmatprep.subr.mxu0 0.0
      %1069 = vmatpush1.msra.mxu0 0.0
      %1070 = vmatprep.subr.mxu0 0.0
      %1071 = vmatpush1.msra.mxu0 0.0
      %1072 = vmatprep.subr.mxu0 0.0
      %1073 = vmatpush1.msra.mxu0 0.0
      %1074 = vmatprep.subr.mxu0 0.0
      %1075 = vmatpush1.msra.mxu0 0.0
      %1076 = vmatprep.subr.mxu0 0.0
      %1077 = vmatpush1.msra.mxu0 0.0
      %1078 = vmatprep.subr.mxu0 0.0
      %1079 = vmatpush1.msra.mxu0 0.0
      %1080 = vmatprep.subr.mxu0 0.0
      %1081 = vmatpush1.msra.mxu0 0.0
      %1082 = vmatprep.subr.mxu0 0.0
      %1083 = vmatpush1.msra.mxu0 0.0
      %1084 = vmatprep.subr.mxu0 0.0
      %1085 = vmatpush1.msra.mxu0 0.0
      %1086 = vmatprep.subr.mxu0 0.0
      %1087 = vmatpush1.msra.mxu0 0.0
      %1088 = vmatprep.subr.mxu0 0.0
      %1089 = vmatpush1.msra.mxu0 0.0
      %1090 = vmatprep.subr.mxu0 0.0
      %1091 = vmatpush1.msra.mxu0 0.0
      %1092 = vmatprep.subr.mxu0 0.0
      %1093 = vmatpush1.msra.mxu0 0.0
      %1094 = vmatprep.subr.mxu0 0.0
      %1095 = vmatpush1.msra.mxu0 0.0
      %1096 = vmatprep.mubr.f32.mxu0 0.0
      %1097 = vmatmul.mubr.f32.gmra.mrb[0].mxu0 %v724
      %v1098 = vpop.f32.mrb[0].mxu0
      %v1099 = vadd.f32 0.0, %v1098
      %v1100 = vpop.f32.mrb[0].mxu0
      %1101 = vmatprep.mubr.f32.mxu0 0.0
      %1102 = vmatmul.mubr.f32.gmra.mrb[0].mxu0 %v725
      %v1103 = vpop.f32.mrb[0].mxu0
      %v1104 = vadd.f32 0.0, %v1103
      %v1105 = vpop.f32.mrb[0].mxu0
      %1106 = vmatprep.mubr.f32.mxu0 0.0
      %1107 = vmatmul.mubr.f32.gmra.mrb[0].mxu0 %v726
      %v1108 = vpop.f32.mrb[0].mxu0
      %v1109 = vadd.f32 0.0, %v1108
      %v1110 = vpop.f32.mrb[0].mxu0
      %1111 = vmatprep.mubr.f32.mxu0 0.0
      %1112 = vmatmul.mubr.f32.gmra.mrb[0].mxu0 %v727
      %v1113 = vpop.f32.mrb[0].mxu0
      %v1114 = vadd.f32 0.0, %v1113
      %v1115 = vpop.f32.mrb[0].mxu0
      %1116 = vmatprep.mubr.f32.mxu0 0.0
      %1117 = vmatmul.mubr.f32.gmra.mrb[0].mxu0 %v728
      %v1118 = vpop.f32.mrb[0].mxu0
      %v1119 = vadd.f32 0.0, %v1118
      %v1120 = vpop.f32.mrb[0].mxu0
      %1121 = vmatprep.mubr.f32.mxu0 0.0
      %1122 = vmatmul.mubr.f32.gmra.mrb[0].mxu0 %v729
      %v1123 = vpop.f32.mrb[0].mxu0
      %v1124 = vadd.f32 0.0, %v1123
      %v1125 = vpop.f32.mrb[0].mxu0
      %1126 = vmatprep.mubr.f32.mxu0 0.0
      %1127 = vmatmul.mubr.f32.gmra.mrb[0].mxu0 %v730
      %v1128 = vpop.f32.mrb[0].mxu0
      %v1129 = vadd.f32 0.0, %v1128
      %v1130 = vpop.f32.mrb[0].mxu0
      %1131 = vmatprep.mubr.f32.mxu0 0.0
      %1132 = vmatmul.mubr.f32.gmra.mrb[0].mxu0 %v731
      %v1133 = vpop.f32.mrb[0].mxu0
      %v1134 = vadd.f32 0.0, %v1133
      %v1135 = vpop.f32.mrb[0].mxu0
      %1136 = vdwg.mxu0
      %1137 = vmatprep.subr.mxu0 0.0
      %1138 = vmatpush1.msra.mxu0 %v999
      %1139 = vmatprep.subr.mxu0 0.0
      %1140 = vmatpush1.msra.mxu0 %v1000
      %1141 = vmatprep.subr.mxu0 0.0
      %1142 = vmatpush1.msra.mxu0 %v1001
      %1143 = vmatprep.subr.mxu0 0.0
      %1144 = vmatpush1.msra.mxu0 %v1002
      %1145 = vmatprep.subr.mxu0 0.0
      %1146 = vmatpush1.msra.mxu0 %v1003
      %1147 = vmatprep.subr.mxu0 0.0
      %1148 = vmatpush1.msra.mxu0 %v1004
      %1149 = vmatprep.subr.mxu0 0.0
      %1150 = vmatpush1.msra.mxu0 %v1005
      %1151 = vmatprep.subr.mxu0 0.0
      %1152 = vmatpush1.msra.mxu0 %v1006
      %1153 = vmatprep.subr.mxu0 0.0
      %1154 = vmatpush1.msra.mxu0 %v1007
      %1155 = vmatprep.subr.mxu0 0.0
      %1156 = vmatpush1.msra.mxu0 %v1008
      %1157 = vmatprep.subr.mxu0 0.0
      %1158 = vmatpush1.msra.mxu0 %v1009
      %1159 = vmatprep.subr.mxu0 0.0
      %1160 = vmatpush1.msra.mxu0 %v1010
      %1161 = vmatprep.subr.mxu0 0.0
      %1162 = vmatpush1.msra.mxu0 %v1011
      %1163 = vmatprep.subr.mxu0 0.0
      %1164 = vmatpush1.msra.mxu0 %v1012
      %1165 = vmatprep.subr.mxu0 0.0
      %1166 = vmatpush1.msra.mxu0 %v1013
      %1167 = vmatprep.subr.mxu0 0.0
      %1168 = vmatpush1.msra.mxu0 %v1014
      %1169 = vmatprep.subr.mxu0 0.0
      %1170 = vmatpush1.msra.mxu0 0.0
      %1171 = vmatprep.subr.mxu0 0.0
      %1172 = vmatpush1.msra.mxu0 0.0
      %1173 = vmatprep.subr.mxu0 0.0
      %1174 = vmatpush1.msra.mxu0 0.0
      %1175 = vmatprep.subr.mxu0 0.0
      %1176 = vmatpush1.msra.mxu0 0.0
      %1177 = vmatprep.subr.mxu0 0.0
      %1178 = vmatpush1.msra.mxu0 0.0
      %1179 = vmatprep.subr.mxu0 0.0
      %1180 = vmatpush1.msra.mxu0 0.0
      %1181 = vmatprep.subr.mxu0 0.0
      %1182 = vmatpush1.msra.mxu0 0.0
      %1183 = vmatprep.subr.mxu0 0.0
      %1184 = vmatpush1.msra.mxu0 0.0
      %1185 = vmatprep.subr.mxu0 0.0
      %1186 = vmatpush1.msra.mxu0 0.0
      %1187 = vmatprep.subr.mxu0 0.0
      %1188 = vmatpush1.msra.mxu0 0.0
      %1189 = vmatprep.subr.mxu0 0.0
      %1190 = vmatpush1.msra.mxu0 0.0
      %1191 = vmatprep.subr.mxu0 0.0
      %1192 = vmatpush1.msra.mxu0 0.0
      %1193 = vmatprep.subr.mxu0 0.0
      %1194 = vmatpush1.msra.mxu0 0.0
      %1195 = vmatprep.subr.mxu0 0.0
      %1196 = vmatpush1.msra.mxu0 0.0
      %1197 = vmatprep.subr.mxu0 0.0
      %1198 = vmatpush1.msra.mxu0 0.0
      %1199 = vmatprep.subr.mxu0 0.0
      %1200 = vmatpush1.msra.mxu0 0.0
      %1201 = vmatprep.mubr.f32.mxu0 0.0
      %1202 = vmatmul.mubr.f32.gmra.mrb[0].mxu0 %v615
      %v1203 = vpop.f32.mrb[0].mxu0
      %v1204 = vadd.f32 %v1099, %v1203
      %v1205 = vpop.f32.mrb[0].mxu0
      %1206 = vmatprep.mubr.f32.mxu0 0.0
      %1207 = vmatmul.mubr.f32.gmra.mrb[0].mxu0 %v617
      %v1208 = vpop.f32.mrb[0].mxu0
      %v1209 = vadd.f32 %v1104, %v1208
      %v1210 = vpop.f32.mrb[0].mxu0
      %1211 = vmatprep.mubr.f32.mxu0 0.0
      %1212 = vmatmul.mubr.f32.gmra.mrb[0].mxu0 %v619
      %v1213 = vpop.f32.mrb[0].mxu0
      %v1214 = vadd.f32 %v1109, %v1213
      %v1215 = vpop.f32.mrb[0].mxu0
      %1216 = vmatprep.mubr.f32.mxu0 0.0
      %1217 = vmatmul.mubr.f32.gmra.mrb[0].mxu0 %v621
      %v1218 = vpop.f32.mrb[0].mxu0
      %v1219 = vadd.f32 %v1114, %v1218
      %v1220 = vpop.f32.mrb[0].mxu0
      %1221 = vmatprep.mubr.f32.mxu0 0.0
      %1222 = vmatmul.mubr.f32.gmra.mrb[0].mxu0 %v623
      %v1223 = vpop.f32.mrb[0].mxu0
      %v1224 = vadd.f32 %v1119, %v1223
      %v1225 = vpop.f32.mrb[0].mxu0
      %1226 = vmatprep.mubr.f32.mxu0 0.0
      %1227 = vmatmul.mubr.f32.gmra.mrb[0].mxu0 %v625
      %v1228 = vpop.f32.mrb[0].mxu0
      %v1229 = vadd.f32 %v1124, %v1228
      %v1230 = vpop.f32.mrb[0].mxu0
      %1231 = vmatprep.mubr.f32.mxu0 0.0
      %1232 = vmatmul.mubr.f32.gmra.mrb[0].mxu0 %v627
      %v1233 = vpop.f32.mrb[0].mxu0
      %v1234 = vadd.f32 %v1129, %v1233
      %v1235 = vpop.f32.mrb[0].mxu0
      %1236 = vmatprep.mubr.f32.mxu0 0.0
      %1237 = vmatmul.mubr.f32.gmra.mrb[0].mxu0 %v629
      %v1238 = vpop.f32.mrb[0].mxu0
      %v1239 = vadd.f32 %v1134, %v1238
      %v1240 = vpop.f32.mrb[0].mxu0
      %1241 = vdwg.mxu0
      %vm1258 = vcmask 1046528
      %v1259 = vrot.slane %v615, 1
      %v1260 = vrot.slane %v616, 1
      %v1261 = vsel %vm1258, %v1259, %v1260
      %v1262 = vrot.slane %v617, 1
      %v1263 = vrot.slane %v618, 1
      %v1264 = vsel %vm1258, %v1262, %v1263
      %v1265 = vrot.slane %v619, 1
      %v1266 = vrot.slane %v620, 1
      %v1267 = vsel %vm1258, %v1265, %v1266
      %v1268 = vrot.slane %v621, 1
      %v1269 = vrot.slane %v622, 1
      %v1270 = vsel %vm1258, %v1268, %v1269
      %v1271 = vrot.slane %v623, 1
      %v1272 = vrot.slane %v624, 1
      %v1273 = vsel %vm1258, %v1271, %v1272
      %v1274 = vrot.slane %v625, 1
      %v1275 = vrot.slane %v626, 1
      %v1276 = vsel %vm1258, %v1274, %v1275
      %v1277 = vrot.slane %v627, 1
      %v1278 = vrot.slane %v628, 1
      %v1279 = vsel %vm1258, %v1277, %v1278
      %v1280 = vrot.slane %v629, 1
      %v1281 = vrot.slane %v630, 1
      %v1282 = vsel %vm1258, %v1280, %v1281
      %s1291 = scalar_lea.vmem %s7, 256
      %v1292 = vld [vmem:[%s1291] sm:$0xff]
      %v1293 = vld [vmem:[%s1291 + $0x8] sm:$0xff]
      %v1294 = vld [vmem:[%s1291 + $0x10] sm:$0xff]
      %v1295 = vld [vmem:[%s1291 + $0x18] sm:$0xff]
      %v1296 = vld [vmem:[%s1291 + $0x20] sm:$0xff]
      %v1297 = vld [vmem:[%s1291 + $0x28] sm:$0xff]
      %v1298 = vld [vmem:[%s1291 + $0x30] sm:$0xff]
      %v1299 = vld [vmem:[%s1291 + $0x38] sm:$0xff]
      %v1300 = vld [vmem:[%s1291 + $0x40] sm:$0xff]
      %v1301 = vld [vmem:[%s1291 + $0x48] sm:$0xff]
      %v1302 = vld [vmem:[%s1291 + $0x50] sm:$0xff]
      %v1303 = vld [vmem:[%s1291 + $0x58] sm:$0xff]
      %v1304 = vld [vmem:[%s1291 + $0x60] sm:$0xff]
      %v1305 = vld [vmem:[%s1291 + $0x68] sm:$0xff]
      %v1306 = vld [vmem:[%s1291 + $0x70] sm:$0xff]
      %v1307 = vld [vmem:[%s1291 + $0x78] sm:$0xff]
      %1308 = vmatprep.subr.mxu0 0.0
      %1309 = vmatpush1.msra.mxu0 %v1292
      %1310 = vmatprep.subr.mxu0 0.0
      %1311 = vmatpush1.msra.mxu0 %v1293
      %1312 = vmatprep.subr.mxu0 0.0
      %1313 = vmatpush1.msra.mxu0 %v1294
      %1314 = vmatprep.subr.mxu0 0.0
      %1315 = vmatpush1.msra.mxu0 %v1295
      %1316 = vmatprep.subr.mxu0 0.0
      %1317 = vmatpush1.msra.mxu0 %v1296
      %1318 = vmatprep.subr.mxu0 0.0
      %1319 = vmatpush1.msra.mxu0 %v1297
      %1320 = vmatprep.subr.mxu0 0.0
      %1321 = vmatpush1.msra.mxu0 %v1298
      %1322 = vmatprep.subr.mxu0 0.0
      %1323 = vmatpush1.msra.mxu0 %v1299
      %1324 = vmatprep.subr.mxu0 0.0
      %1325 = vmatpush1.msra.mxu0 %v1300
      %1326 = vmatprep.subr.mxu0 0.0
      %1327 = vmatpush1.msra.mxu0 %v1301
      %1328 = vmatprep.subr.mxu0 0.0
      %1329 = vmatpush1.msra.mxu0 %v1302
      %1330 = vmatprep.subr.mxu0 0.0
      %1331 = vmatpush1.msra.mxu0 %v1303
      %1332 = vmatprep.subr.mxu0 0.0
      %1333 = vmatpush1.msra.mxu0 %v1304
      %1334 = vmatprep.subr.mxu0 0.0
      %1335 = vmatpush1.msra.mxu0 %v1305
      %1336 = vmatprep.subr.mxu0 0.0
      %1337 = vmatpush1.msra.mxu0 %v1306
      %1338 = vmatprep.subr.mxu0 0.0
      %1339 = vmatpush1.msra.mxu0 %v1307
      %1340 = vmatprep.subr.mxu0 0.0
      %1341 = vmatpush1.msra.mxu0 0.0
      %1342 = vmatprep.subr.mxu0 0.0
      %1343 = vmatpush1.msra.mxu0 0.0
      %1344 = vmatprep.subr.mxu0 0.0
      %1345 = vmatpush1.msra.mxu0 0.0
      %1346 = vmatprep.subr.mxu0 0.0
      %1347 = vmatpush1.msra.mxu0 0.0
      %1348 = vmatprep.subr.mxu0 0.0
      %1349 = vmatpush1.msra.mxu0 0.0
      %1350 = vmatprep.subr.mxu0 0.0
      %1351 = vmatpush1.msra.mxu0 0.0
      %1352 = vmatprep.subr.mxu0 0.0
      %1353 = vmatpush1.msra.mxu0 0.0
      %1354 = vmatprep.subr.mxu0 0.0
      %1355 = vmatpush1.msra.mxu0 0.0
      %1356 = vmatprep.subr.mxu0 0.0
      %1357 = vmatpush1.msra.mxu0 0.0
      %1358 = vmatprep.subr.mxu0 0.0
      %1359 = vmatpush1.msra.mxu0 0.0
      %1360 = vmatprep.subr.mxu0 0.0
      %1361 = vmatpush1.msra.mxu0 0.0
      %1362 = vmatprep.subr.mxu0 0.0
      %1363 = vmatpush1.msra.mxu0 0.0
      %1364 = vmatprep.subr.mxu0 0.0
      %1365 = vmatpush1.msra.mxu0 0.0
      %1366 = vmatprep.subr.mxu0 0.0
      %1367 = vmatpush1.msra.mxu0 0.0
      %1368 = vmatprep.subr.mxu0 0.0
      %1369 = vmatpush1.msra.mxu0 0.0
      %1370 = vmatprep.subr.mxu0 0.0
      %1371 = vmatpush1.msra.mxu0 0.0
      %1372 = vmatprep.mubr.f32.mxu0 0.0
      %1373 = vmatmul.mubr.f32.gmra.mrb[0].mxu0 %v1261
      %v1374 = vpop.f32.mrb[0].mxu0
      %v1375 = vadd.f32 0.0, %v1374
      %v1376 = vpop.f32.mrb[0].mxu0
      %1377 = vmatprep.mubr.f32.mxu0 0.0
      %1378 = vmatmul.mubr.f32.gmra.mrb[0].mxu0 %v1264
      %v1379 = vpop.f32.mrb[0].mxu0
      %v1380 = vadd.f32 0.0, %v1379
      %v1381 = vpop.f32.mrb[0].mxu0
      %1382 = vmatprep.mubr.f32.mxu0 0.0
      %1383 = vmatmul.mubr.f32.gmra.mrb[0].mxu0 %v1267
      %v1384 = vpop.f32.mrb[0].mxu0
      %v1385 = vadd.f32 0.0, %v1384
      %v1386 = vpop.f32.mrb[0].mxu0
      %1387 = vmatprep.mubr.f32.mxu0 0.0
      %1388 = vmatmul.mubr.f32.gmra.mrb[0].mxu0 %v1270
      %v1389 = vpop.f32.mrb[0].mxu0
      %v1390 = vadd.f32 0.0, %v1389
      %v1391 = vpop.f32.mrb[0].mxu0
      %1392 = vmatprep.mubr.f32.mxu0 0.0
      %1393 = vmatmul.mubr.f32.gmra.mrb[0].mxu0 %v1273
      %v1394 = vpop.f32.mrb[0].mxu0
      %v1395 = vadd.f32 0.0, %v1394
      %v1396 = vpop.f32.mrb[0].mxu0
      %1397 = vmatprep.mubr.f32.mxu0 0.0
      %1398 = vmatmul.mubr.f32.gmra.mrb[0].mxu0 %v1276
      %v1399 = vpop.f32.mrb[0].mxu0
      %v1400 = vadd.f32 0.0, %v1399
      %v1401 = vpop.f32.mrb[0].mxu0
      %1402 = vmatprep.mubr.f32.mxu0 0.0
      %1403 = vmatmul.mubr.f32.gmra.mrb[0].mxu0 %v1279
      %v1404 = vpop.f32.mrb[0].mxu0
      %v1405 = vadd.f32 0.0, %v1404
      %v1406 = vpop.f32.mrb[0].mxu0
      %1407 = vmatprep.mubr.f32.mxu0 0.0
      %1408 = vmatmul.mubr.f32.gmra.mrb[0].mxu0 %v1282
      %v1409 = vpop.f32.mrb[0].mxu0
      %v1410 = vadd.f32 0.0, %v1409
      %v1411 = vpop.f32.mrb[0].mxu0
      %1412 = vdwg.mxu0
      %v1413 = vadd.f32 %v1204, %v1375
      %v1414 = vadd.f32 %v1209, %v1380
      %v1415 = vadd.f32 %v1214, %v1385
      %v1416 = vadd.f32 %v1219, %v1390
      %v1417 = vadd.f32 %v1224, %v1395
      %v1418 = vadd.f32 %v1229, %v1400
      %v1419 = vadd.f32 %v1234, %v1405
      %v1420 = vadd.f32 %v1239, %v1410
      %s1421 = scalar_lea.vmem %s7, 384
      %v1422 = vld [vmem:[%s1421] sm:$0xff]
      %v1423 = vld [vmem:[%s1421 + $0x8] sm:$0xff]
      %v1424 = vld [vmem:[%s1421 + $0x10] sm:$0xff]
      %v1425 = vld [vmem:[%s1421 + $0x18] sm:$0xff]
      %v1426 = vld [vmem:[%s1421 + $0x20] sm:$0xff]
      %v1427 = vld [vmem:[%s1421 + $0x28] sm:$0xff]
      %v1428 = vld [vmem:[%s1421 + $0x30] sm:$0xff]
      %v1429 = vld [vmem:[%s1421 + $0x38] sm:$0xff]
      %v1430 = vld [vmem:[%s1421 + $0x40] sm:$0xff]
      %v1431 = vld [vmem:[%s1421 + $0x48] sm:$0xff]
      %v1432 = vld [vmem:[%s1421 + $0x50] sm:$0xff]
      %v1433 = vld [vmem:[%s1421 + $0x58] sm:$0xff]
      %v1434 = vld [vmem:[%s1421 + $0x60] sm:$0xff]
      %v1435 = vld [vmem:[%s1421 + $0x68] sm:$0xff]
      %v1436 = vld [vmem:[%s1421 + $0x70] sm:$0xff]
      %v1437 = vld [vmem:[%s1421 + $0x78] sm:$0xff]
      %1438 = vmatprep.subr.mxu0 0.0
      %1439 = vmatpush1.msra.mxu0 %v1422
      %1440 = vmatprep.subr.mxu0 0.0
      %1441 = vmatpush1.msra.mxu0 %v1423
      %1442 = vmatprep.subr.mxu0 0.0
      %1443 = vmatpush1.msra.mxu0 %v1424
      %1444 = vmatprep.subr.mxu0 0.0
      %1445 = vmatpush1.msra.mxu0 %v1425
      %1446 = vmatprep.subr.mxu0 0.0
      %1447 = vmatpush1.msra.mxu0 %v1426
      %1448 = vmatprep.subr.mxu0 0.0
      %1449 = vmatpush1.msra.mxu0 %v1427
      %1450 = vmatprep.subr.mxu0 0.0
      %1451 = vmatpush1.msra.mxu0 %v1428
      %1452 = vmatprep.subr.mxu0 0.0
      %1453 = vmatpush1.msra.mxu0 %v1429
      %1454 = vmatprep.subr.mxu0 0.0
      %1455 = vmatpush1.msra.mxu0 %v1430
      %1456 = vmatprep.subr.mxu0 0.0
      %1457 = vmatpush1.msra.mxu0 %v1431
      %1458 = vmatprep.subr.mxu0 0.0
      %1459 = vmatpush1.msra.mxu0 %v1432
      %1460 = vmatprep.subr.mxu0 0.0
      %1461 = vmatpush1.msra.mxu0 %v1433
      %1462 = vmatprep.subr.mxu0 0.0
      %1463 = vmatpush1.msra.mxu0 %v1434
      %1464 = vmatprep.subr.mxu0 0.0
      %1465 = vmatpush1.msra.mxu0 %v1435
      %1466 = vmatprep.subr.mxu0 0.0
      %1467 = vmatpush1.msra.mxu0 %v1436
      %1468 = vmatprep.subr.mxu0 0.0
      %1469 = vmatpush1.msra.mxu0 %v1437
      %1470 = vmatprep.subr.mxu0 0.0
      %1471 = vmatpush1.msra.mxu0 0.0
      %1472 = vmatprep.subr.mxu0 0.0
      %1473 = vmatpush1.msra.mxu0 0.0
      %1474 = vmatprep.subr.mxu0 0.0
      %1475 = vmatpush1.msra.mxu0 0.0
      %1476 = vmatprep.subr.mxu0 0.0
      %1477 = vmatpush1.msra.mxu0 0.0
      %1478 = vmatprep.subr.mxu0 0.0
      %1479 = vmatpush1.msra.mxu0 0.0
      %1480 = vmatprep.subr.mxu0 0.0
      %1481 = vmatpush1.msra.mxu0 0.0
      %1482 = vmatprep.subr.mxu0 0.0
      %1483 = vmatpush1.msra.mxu0 0.0
      %1484 = vmatprep.subr.mxu0 0.0
      %1485 = vmatpush1.msra.mxu0 0.0
      %1486 = vmatprep.subr.mxu0 0.0
      %1487 = vmatpush1.msra.mxu0 0.0
      %1488 = vmatprep.subr.mxu0 0.0
      %1489 = vmatpush1.msra.mxu0 0.0
      %1490 = vmatprep.subr.mxu0 0.0
      %1491 = vmatpush1.msra.mxu0 0.0
      %1492 = vmatprep.subr.mxu0 0.0
      %1493 = vmatpush1.msra.mxu0 0.0
      %1494 = vmatprep.subr.mxu0 0.0
      %1495 = vmatpush1.msra.mxu0 0.0
      %1496 = vmatprep.subr.mxu0 0.0
      %1497 = vmatpush1.msra.mxu0 0.0
      %1498 = vmatprep.subr.mxu0 0.0
      %1499 = vmatpush1.msra.mxu0 0.0
      %1500 = vmatprep.subr.mxu0 0.0
      %1501 = vmatpush1.msra.mxu0 0.0
      %1502 = vmatprep.mubr.f32.mxu0 0.0
      %1503 = vmatmul.mubr.f32.gmra.mrb[0].mxu0 %v894
      %v1504 = vpop.f32.mrb[0].mxu0
      %v1505 = vadd.f32 0.0, %v1504
      %v1506 = vpop.f32.mrb[0].mxu0
      %1507 = vmatprep.mubr.f32.mxu0 0.0
      %1508 = vmatmul.mubr.f32.gmra.mrb[0].mxu0 %v896
      %v1509 = vpop.f32.mrb[0].mxu0
      %v1510 = vadd.f32 0.0, %v1509
      %v1511 = vpop.f32.mrb[0].mxu0
      %1512 = vmatprep.mubr.f32.mxu0 0.0
      %1513 = vmatmul.mubr.f32.gmra.mrb[0].mxu0 %v898
      %v1514 = vpop.f32.mrb[0].mxu0
      %v1515 = vadd.f32 0.0, %v1514
      %v1516 = vpop.f32.mrb[0].mxu0
      %1517 = vmatprep.mubr.f32.mxu0 0.0
      %1518 = vmatmul.mubr.f32.gmra.mrb[0].mxu0 %v900
      %v1519 = vpop.f32.mrb[0].mxu0
      %v1520 = vadd.f32 0.0, %v1519
      %v1521 = vpop.f32.mrb[0].mxu0
      %1522 = vmatprep.mubr.f32.mxu0 0.0
      %1523 = vmatmul.mubr.f32.gmra.mrb[0].mxu0 %v902
      %v1524 = vpop.f32.mrb[0].mxu0
      %v1525 = vadd.f32 0.0, %v1524
      %v1526 = vpop.f32.mrb[0].mxu0
      %1527 = vmatprep.mubr.f32.mxu0 0.0
      %1528 = vmatmul.mubr.f32.gmra.mrb[0].mxu0 %v904
      %v1529 = vpop.f32.mrb[0].mxu0
      %v1530 = vadd.f32 0.0, %v1529
      %v1531 = vpop.f32.mrb[0].mxu0
      %1532 = vmatprep.mubr.f32.mxu0 0.0
      %1533 = vmatmul.mubr.f32.gmra.mrb[0].mxu0 %v906
      %v1534 = vpop.f32.mrb[0].mxu0
      %v1535 = vadd.f32 0.0, %v1534
      %v1536 = vpop.f32.mrb[0].mxu0
      %1537 = vmatprep.mubr.f32.mxu0 0.0
      %1538 = vmatmul.mubr.f32.gmra.mrb[0].mxu0 %v908
      %v1539 = vpop.f32.mrb[0].mxu0
      %v1540 = vadd.f32 0.0, %v1539
      %v1541 = vpop.f32.mrb[0].mxu0
      %1542 = vdwg.mxu0
      %v1543 = vadd.f32 %v1413, %v1505
      %v1544 = vadd.f32 %v1414, %v1510
      %v1545 = vadd.f32 %v1415, %v1515
      %v1546 = vadd.f32 %v1416, %v1520
      %v1547 = vadd.f32 %v1417, %v1525
      %v1548 = vadd.f32 %v1418, %v1530
      %v1549 = vadd.f32 %v1419, %v1535
      %v1550 = vadd.f32 %v1420, %v1540
      %s1551 = scalar_lea.vmem %s7, 512
      %v1552 = vld [vmem:[%s1551] sm:$0xff]
      %v1553 = vld [vmem:[%s1551 + $0x8] sm:$0xff]
      %v1554 = vld [vmem:[%s1551 + $0x10] sm:$0xff]
      %v1555 = vld [vmem:[%s1551 + $0x18] sm:$0xff]
      %v1556 = vld [vmem:[%s1551 + $0x20] sm:$0xff]
      %v1557 = vld [vmem:[%s1551 + $0x28] sm:$0xff]
      %v1558 = vld [vmem:[%s1551 + $0x30] sm:$0xff]
      %v1559 = vld [vmem:[%s1551 + $0x38] sm:$0xff]
      %v1560 = vld [vmem:[%s1551 + $0x40] sm:$0xff]
      %v1561 = vld [vmem:[%s1551 + $0x48] sm:$0xff]
      %v1562 = vld [vmem:[%s1551 + $0x50] sm:$0xff]
      %v1563 = vld [vmem:[%s1551 + $0x58] sm:$0xff]
      %v1564 = vld [vmem:[%s1551 + $0x60] sm:$0xff]
      %v1565 = vld [vmem:[%s1551 + $0x68] sm:$0xff]
      %v1566 = vld [vmem:[%s1551 + $0x70] sm:$0xff]
      %v1567 = vld [vmem:[%s1551 + $0x78] sm:$0xff]
      %1568 = vmatprep.subr.mxu0 0.0
      %1569 = vmatpush1.msra.mxu0 %v1552
      %1570 = vmatprep.subr.mxu0 0.0
      %1571 = vmatpush1.msra.mxu0 %v1553
      %1572 = vmatprep.subr.mxu0 0.0
      %1573 = vmatpush1.msra.mxu0 %v1554
      %1574 = vmatprep.subr.mxu0 0.0
      %1575 = vmatpush1.msra.mxu0 %v1555
      %1576 = vmatprep.subr.mxu0 0.0
      %1577 = vmatpush1.msra.mxu0 %v1556
      %1578 = vmatprep.subr.mxu0 0.0
      %1579 = vmatpush1.msra.mxu0 %v1557
      %1580 = vmatprep.subr.mxu0 0.0
      %1581 = vmatpush1.msra.mxu0 %v1558
      %1582 = vmatprep.subr.mxu0 0.0
      %1583 = vmatpush1.msra.mxu0 %v1559
      %1584 = vmatprep.subr.mxu0 0.0
      %1585 = vmatpush1.msra.mxu0 %v1560
      %1586 = vmatprep.subr.mxu0 0.0
      %1587 = vmatpush1.msra.mxu0 %v1561
      %1588 = vmatprep.subr.mxu0 0.0
      %1589 = vmatpush1.msra.mxu0 %v1562
      %1590 = vmatprep.subr.mxu0 0.0
      %1591 = vmatpush1.msra.mxu0 %v1563
      %1592 = vmatprep.subr.mxu0 0.0
      %1593 = vmatpush1.msra.mxu0 %v1564
      %1594 = vmatprep.subr.mxu0 0.0
      %1595 = vmatpush1.msra.mxu0 %v1565
      %1596 = vmatprep.subr.mxu0 0.0
      %1597 = vmatpush1.msra.mxu0 %v1566
      %1598 = vmatprep.subr.mxu0 0.0
      %1599 = vmatpush1.msra.mxu0 %v1567
      %1600 = vmatprep.subr.mxu0 0.0
      %1601 = vmatpush1.msra.mxu0 0.0
      %1602 = vmatprep.subr.mxu0 0.0
      %1603 = vmatpush1.msra.mxu0 0.0
      %1604 = vmatprep.subr.mxu0 0.0
      %1605 = vmatpush1.msra.mxu0 0.0
      %1606 = vmatprep.subr.mxu0 0.0
      %1607 = vmatpush1.msra.mxu0 0.0
      %1608 = vmatprep.subr.mxu0 0.0
      %1609 = vmatpush1.msra.mxu0 0.0
      %1610 = vmatprep.subr.mxu0 0.0
      %1611 = vmatpush1.msra.mxu0 0.0
      %1612 = vmatprep.subr.mxu0 0.0
      %1613 = vmatpush1.msra.mxu0 0.0
      %1614 = vmatprep.subr.mxu0 0.0
      %1615 = vmatpush1.msra.mxu0 0.0
      %1616 = vmatprep.subr.mxu0 0.0
      %1617 = vmatpush1.msra.mxu0 0.0
      %1618 = vmatprep.subr.mxu0 0.0
      %1619 = vmatpush1.msra.mxu0 0.0
      %1620 = vmatprep.subr.mxu0 0.0
      %1621 = vmatpush1.msra.mxu0 0.0
      %1622 = vmatprep.subr.mxu0 0.0
      %1623 = vmatpush1.msra.mxu0 0.0
      %1624 = vmatprep.subr.mxu0 0.0
      %1625 = vmatpush1.msra.mxu0 0.0
      %1626 = vmatprep.subr.mxu0 0.0
      %1627 = vmatpush1.msra.mxu0 0.0
      %1628 = vmatprep.subr.mxu0 0.0
      %1629 = vmatpush1.msra.mxu0 0.0
      %1630 = vmatprep.subr.mxu0 0.0
      %1631 = vmatpush1.msra.mxu0 0.0
      %1632 = vmatprep.mubr.f32.mxu0 0.0
      %1633 = vmatmul.mubr.f32.gmra.mrb[0].mxu0 %v991
      %v1634 = vpop.f32.mrb[0].mxu0
      %v1635 = vadd.f32 0.0, %v1634
      %v1636 = vpop.f32.mrb[0].mxu0
      %1637 = vmatprep.mubr.f32.mxu0 0.0
      %1638 = vmatmul.mubr.f32.gmra.mrb[0].mxu0 %v992
      %v1639 = vpop.f32.mrb[0].mxu0
      %v1640 = vadd.f32 0.0, %v1639
      %v1641 = vpop.f32.mrb[0].mxu0
      %1642 = vmatprep.mubr.f32.mxu0 0.0
      %1643 = vmatmul.mubr.f32.gmra.mrb[0].mxu0 %v993
      %v1644 = vpop.f32.mrb[0].mxu0
      %v1645 = vadd.f32 0.0, %v1644
      %v1646 = vpop.f32.mrb[0].mxu0
      %1647 = vmatprep.mubr.f32.mxu0 0.0
      %1648 = vmatmul.mubr.f32.gmra.mrb[0].mxu0 %v994
      %v1649 = vpop.f32.mrb[0].mxu0
      %v1650 = vadd.f32 0.0, %v1649
      %v1651 = vpop.f32.mrb[0].mxu0
      %1652 = vmatprep.mubr.f32.mxu0 0.0
      %1653 = vmatmul.mubr.f32.gmra.mrb[0].mxu0 %v995
      %v1654 = vpop.f32.mrb[0].mxu0
      %v1655 = vadd.f32 0.0, %v1654
      %v1656 = vpop.f32.mrb[0].mxu0
      %1657 = vmatprep.mubr.f32.mxu0 0.0
      %1658 = vmatmul.mubr.f32.gmra.mrb[0].mxu0 %v996
      %v1659 = vpop.f32.mrb[0].mxu0
      %v1660 = vadd.f32 0.0, %v1659
      %v1661 = vpop.f32.mrb[0].mxu0
      %1662 = vmatprep.mubr.f32.mxu0 0.0
      %1663 = vmatmul.mubr.f32.gmra.mrb[0].mxu0 %v997
      %v1664 = vpop.f32.mrb[0].mxu0
      %v1665 = vadd.f32 0.0, %v1664
      %v1666 = vpop.f32.mrb[0].mxu0
      %1667 = vmatprep.mubr.f32.mxu0 0.0
      %1668 = vmatmul.mubr.f32.gmra.mrb[0].mxu0 %v998
      %v1669 = vpop.f32.mrb[0].mxu0
      %v1670 = vadd.f32 0.0, %v1669
      %v1671 = vpop.f32.mrb[0].mxu0
      %1672 = vdwg.mxu0
      %v1673 = vadd.f32 %v1543, %v1635
      %v1674 = vadd.f32 %v1544, %v1640
      %v1675 = vadd.f32 %v1545, %v1645
      %v1676 = vadd.f32 %v1546, %v1650
      %v1677 = vadd.f32 %v1547, %v1655
      %v1678 = vadd.f32 %v1548, %v1660
      %v1679 = vadd.f32 %v1549, %v1665
      %v1680 = vadd.f32 %v1550, %v1670
      %v1697 = vrot.slane %v894, 1
      %v1698 = vrot.slane %v895, 1
      %v1699 = vsel %vm1258, %v1697, %v1698
      %v1700 = vrot.slane %v896, 1
      %v1701 = vrot.slane %v897, 1
      %v1702 = vsel %vm1258, %v1700, %v1701
      %v1703 = vrot.slane %v898, 1
      %v1704 = vrot.slane %v899, 1
      %v1705 = vsel %vm1258, %v1703, %v1704
      %v1706 = vrot.slane %v900, 1
      %v1707 = vrot.slane %v901, 1
      %v1708 = vsel %vm1258, %v1706, %v1707
      %v1709 = vrot.slane %v902, 1
      %v1710 = vrot.slane %v903, 1
      %v1711 = vsel %vm1258, %v1709, %v1710
      %v1712 = vrot.slane %v904, 1
      %v1713 = vrot.slane %v905, 1
      %v1714 = vsel %vm1258, %v1712, %v1713
      %v1715 = vrot.slane %v906, 1
      %v1716 = vrot.slane %v907, 1
      %v1717 = vsel %vm1258, %v1715, %v1716
      %v1718 = vrot.slane %v908, 1
      %v1719 = vrot.slane %v909, 1
      %v1720 = vsel %vm1258, %v1718, %v1719
      %s1729 = scalar_lea.vmem %s7, 640
      %v1730 = vld [vmem:[%s1729] sm:$0xff]
      %v1731 = vld [vmem:[%s1729 + $0x8] sm:$0xff]
      %v1732 = vld [vmem:[%s1729 + $0x10] sm:$0xff]
      %v1733 = vld [vmem:[%s1729 + $0x18] sm:$0xff]
      %v1734 = vld [vmem:[%s1729 + $0x20] sm:$0xff]
      %v1735 = vld [vmem:[%s1729 + $0x28] sm:$0xff]
      %v1736 = vld [vmem:[%s1729 + $0x30] sm:$0xff]
      %v1737 = vld [vmem:[%s1729 + $0x38] sm:$0xff]
      %v1738 = vld [vmem:[%s1729 + $0x40] sm:$0xff]
      %v1739 = vld [vmem:[%s1729 + $0x48] sm:$0xff]
      %v1740 = vld [vmem:[%s1729 + $0x50] sm:$0xff]
      %v1741 = vld [vmem:[%s1729 + $0x58] sm:$0xff]
      %v1742 = vld [vmem:[%s1729 + $0x60] sm:$0xff]
      %v1743 = vld [vmem:[%s1729 + $0x68] sm:$0xff]
      %v1744 = vld [vmem:[%s1729 + $0x70] sm:$0xff]
      %v1745 = vld [vmem:[%s1729 + $0x78] sm:$0xff]
      %1746 = vmatprep.subr.mxu0 0.0
      %1747 = vmatpush1.msra.mxu0 %v1730
      %1748 = vmatprep.subr.mxu0 0.0
      %1749 = vmatpush1.msra.mxu0 %v1731
      %1750 = vmatprep.subr.mxu0 0.0
      %1751 = vmatpush1.msra.mxu0 %v1732
      %1752 = vmatprep.subr.mxu0 0.0
      %1753 = vmatpush1.msra.mxu0 %v1733
      %1754 = vmatprep.subr.mxu0 0.0
      %1755 = vmatpush1.msra.mxu0 %v1734
      %1756 = vmatprep.subr.mxu0 0.0
      %1757 = vmatpush1.msra.mxu0 %v1735
      %1758 = vmatprep.subr.mxu0 0.0
      %1759 = vmatpush1.msra.mxu0 %v1736
      %1760 = vmatprep.subr.mxu0 0.0
      %1761 = vmatpush1.msra.mxu0 %v1737
      %1762 = vmatprep.subr.mxu0 0.0
      %1763 = vmatpush1.msra.mxu0 %v1738
      %1764 = vmatprep.subr.mxu0 0.0
      %1765 = vmatpush1.msra.mxu0 %v1739
      %1766 = vmatprep.subr.mxu0 0.0
      %1767 = vmatpush1.msra.mxu0 %v1740
      %1768 = vmatprep.subr.mxu0 0.0
      %1769 = vmatpush1.msra.mxu0 %v1741
      %1770 = vmatprep.subr.mxu0 0.0
      %1771 = vmatpush1.msra.mxu0 %v1742
      %1772 = vmatprep.subr.mxu0 0.0
      %1773 = vmatpush1.msra.mxu0 %v1743
      %1774 = vmatprep.subr.mxu0 0.0
      %1775 = vmatpush1.msra.mxu0 %v1744
      %1776 = vmatprep.subr.mxu0 0.0
      %1777 = vmatpush1.msra.mxu0 %v1745
      %1778 = vmatprep.subr.mxu0 0.0
      %1779 = vmatpush1.msra.mxu0 0.0
      %1780 = vmatprep.subr.mxu0 0.0
      %1781 = vmatpush1.msra.mxu0 0.0
      %1782 = vmatprep.subr.mxu0 0.0
      %1783 = vmatpush1.msra.mxu0 0.0
      %1784 = vmatprep.subr.mxu0 0.0
      %1785 = vmatpush1.msra.mxu0 0.0
      %1786 = vmatprep.subr.mxu0 0.0
      %1787 = vmatpush1.msra.mxu0 0.0
      %1788 = vmatprep.subr.mxu0 0.0
      %1789 = vmatpush1.msra.mxu0 0.0
      %1790 = vmatprep.subr.mxu0 0.0
      %1791 = vmatpush1.msra.mxu0 0.0
      %1792 = vmatprep.subr.mxu0 0.0
      %1793 = vmatpush1.msra.mxu0 0.0
      %1794 = vmatprep.subr.mxu0 0.0
      %1795 = vmatpush1.msra.mxu0 0.0
      %1796 = vmatprep.subr.mxu0 0.0
      %1797 = vmatpush1.msra.mxu0 0.0
      %1798 = vmatprep.subr.mxu0 0.0
      %1799 = vmatpush1.msra.mxu0 0.0
      %1800 = vmatprep.subr.mxu0 0.0
      %1801 = vmatpush1.msra.mxu0 0.0
      %1802 = vmatprep.subr.mxu0 0.0
      %1803 = vmatpush1.msra.mxu0 0.0
      %1804 = vmatprep.subr.mxu0 0.0
      %1805 = vmatpush1.msra.mxu0 0.0
      %1806 = vmatprep.subr.mxu0 0.0
      %1807 = vmatpush1.msra.mxu0 0.0
      %1808 = vmatprep.subr.mxu0 0.0
      %1809 = vmatpush1.msra.mxu0 0.0
      %1810 = vmatprep.mubr.f32.mxu0 0.0
      %1811 = vmatmul.mubr.f32.gmra.mrb[0].mxu0 %v1699
      %v1812 = vpop.f32.mrb[0].mxu0
      %v1813 = vadd.f32 0.0, %v1812
      %v1814 = vpop.f32.mrb[0].mxu0
      %1815 = vmatprep.mubr.f32.mxu0 0.0
      %1816 = vmatmul.mubr.f32.gmra.mrb[0].mxu0 %v1702
      %v1817 = vpop.f32.mrb[0].mxu0
      %v1818 = vadd.f32 0.0, %v1817
      %v1819 = vpop.f32.mrb[0].mxu0
      %1820 = vmatprep.mubr.f32.mxu0 0.0
      %1821 = vmatmul.mubr.f32.gmra.mrb[0].mxu0 %v1705
      %v1822 = vpop.f32.mrb[0].mxu0
      %v1823 = vadd.f32 0.0, %v1822
      %v1824 = vpop.f32.mrb[0].mxu0
      %1825 = vmatprep.mubr.f32.mxu0 0.0
      %1826 = vmatmul.mubr.f32.gmra.mrb[0].mxu0 %v1708
      %v1827 = vpop.f32.mrb[0].mxu0
      %v1828 = vadd.f32 0.0, %v1827
      %v1829 = vpop.f32.mrb[0].mxu0
      %1830 = vmatprep.mubr.f32.mxu0 0.0
      %1831 = vmatmul.mubr.f32.gmra.mrb[0].mxu0 %v1711
      %v1832 = vpop.f32.mrb[0].mxu0
      %v1833 = vadd.f32 0.0, %v1832
      %v1834 = vpop.f32.mrb[0].mxu0
      %1835 = vmatprep.mubr.f32.mxu0 0.0
      %1836 = vmatmul.mubr.f32.gmra.mrb[0].mxu0 %v1714
      %v1837 = vpop.f32.mrb[0].mxu0
      %v1838 = vadd.f32 0.0, %v1837
      %v1839 = vpop.f32.mrb[0].mxu0
      %1840 = vmatprep.mubr.f32.mxu0 0.0
      %1841 = vmatmul.mubr.f32.gmra.mrb[0].mxu0 %v1717
      %v1842 = vpop.f32.mrb[0].mxu0
      %v1843 = vadd.f32 0.0, %v1842
      %v1844 = vpop.f32.mrb[0].mxu0
      %1845 = vmatprep.mubr.f32.mxu0 0.0
      %1846 = vmatmul.mubr.f32.gmra.mrb[0].mxu0 %v1720
      %v1847 = vpop.f32.mrb[0].mxu0
      %v1848 = vadd.f32 0.0, %v1847
      %v1849 = vpop.f32.mrb[0].mxu0
      %1850 = vdwg.mxu0
      %v1851 = vadd.f32 %v1673, %v1813
      %v1852 = vadd.f32 %v1674, %v1818
      %v1853 = vadd.f32 %v1675, %v1823
      %v1854 = vadd.f32 %v1676, %v1828
      %v1855 = vadd.f32 %v1677, %v1833
      %v1856 = vadd.f32 %v1678, %v1838
      %v1857 = vadd.f32 %v1679, %v1843
      %v1858 = vadd.f32 %v1680, %v1848
      %s1859 = scalar_lea.vmem %s7, 768
      %v1860 = vld [vmem:[%s1859] sm:$0xff]
      %v1861 = vld [vmem:[%s1859 + $0x8] sm:$0xff]
      %v1862 = vld [vmem:[%s1859 + $0x10] sm:$0xff]
      %v1863 = vld [vmem:[%s1859 + $0x18] sm:$0xff]
      %v1864 = vld [vmem:[%s1859 + $0x20] sm:$0xff]
      %v1865 = vld [vmem:[%s1859 + $0x28] sm:$0xff]
      %v1866 = vld [vmem:[%s1859 + $0x30] sm:$0xff]
      %v1867 = vld [vmem:[%s1859 + $0x38] sm:$0xff]
      %v1868 = vld [vmem:[%s1859 + $0x40] sm:$0xff]
      %v1869 = vld [vmem:[%s1859 + $0x48] sm:$0xff]
      %v1870 = vld [vmem:[%s1859 + $0x50] sm:$0xff]
      %v1871 = vld [vmem:[%s1859 + $0x58] sm:$0xff]
      %v1872 = vld [vmem:[%s1859 + $0x60] sm:$0xff]
      %v1873 = vld [vmem:[%s1859 + $0x68] sm:$0xff]
      %v1874 = vld [vmem:[%s1859 + $0x70] sm:$0xff]
      %v1875 = vld [vmem:[%s1859 + $0x78] sm:$0xff]
      %1876 = vmatprep.subr.mxu0 0.0
      %1877 = vmatpush1.msra.mxu0 %v1860
      %1878 = vmatprep.subr.mxu0 0.0
      %1879 = vmatpush1.msra.mxu0 %v1861
      %1880 = vmatprep.subr.mxu0 0.0
      %1881 = vmatpush1.msra.mxu0 %v1862
      %1882 = vmatprep.subr.mxu0 0.0
      %1883 = vmatpush1.msra.mxu0 %v1863
      %1884 = vmatprep.subr.mxu0 0.0
      %1885 = vmatpush1.msra.mxu0 %v1864
      %1886 = vmatprep.subr.mxu0 0.0
      %1887 = vmatpush1.msra.mxu0 %v1865
      %1888 = vmatprep.subr.mxu0 0.0
      %1889 = vmatpush1.msra.mxu0 %v1866
      %1890 = vmatprep.subr.mxu0 0.0
      %1891 = vmatpush1.msra.mxu0 %v1867
      %1892 = vmatprep.subr.mxu0 0.0
      %1893 = vmatpush1.msra.mxu0 %v1868
      %1894 = vmatprep.subr.mxu0 0.0
      %1895 = vmatpush1.msra.mxu0 %v1869
      %1896 = vmatprep.subr.mxu0 0.0
      %1897 = vmatpush1.msra.mxu0 %v1870
      %1898 = vmatprep.subr.mxu0 0.0
      %1899 = vmatpush1.msra.mxu0 %v1871
      %1900 = vmatprep.subr.mxu0 0.0
      %1901 = vmatpush1.msra.mxu0 %v1872
      %1902 = vmatprep.subr.mxu0 0.0
      %1903 = vmatpush1.msra.mxu0 %v1873
      %1904 = vmatprep.subr.mxu0 0.0
      %1905 = vmatpush1.msra.mxu0 %v1874
      %1906 = vmatprep.subr.mxu0 0.0
      %1907 = vmatpush1.msra.mxu0 %v1875
      %1908 = vmatprep.subr.mxu0 0.0
      %1909 = vmatpush1.msra.mxu0 0.0
      %1910 = vmatprep.subr.mxu0 0.0
      %1911 = vmatpush1.msra.mxu0 0.0
      %1912 = vmatprep.subr.mxu0 0.0
      %1913 = vmatpush1.msra.mxu0 0.0
      %1914 = vmatprep.subr.mxu0 0.0
      %1915 = vmatpush1.msra.mxu0 0.0
      %1916 = vmatprep.subr.mxu0 0.0
      %1917 = vmatpush1.msra.mxu0 0.0
      %1918 = vmatprep.subr.mxu0 0.0
      %1919 = vmatpush1.msra.mxu0 0.0
      %1920 = vmatprep.subr.mxu0 0.0
      %1921 = vmatpush1.msra.mxu0 0.0
      %1922 = vmatprep.subr.mxu0 0.0
      %1923 = vmatpush1.msra.mxu0 0.0
      %1924 = vmatprep.subr.mxu0 0.0
      %1925 = vmatpush1.msra.mxu0 0.0
      %1926 = vmatprep.subr.mxu0 0.0
      %1927 = vmatpush1.msra.mxu0 0.0
      %1928 = vmatprep.subr.mxu0 0.0
      %1929 = vmatpush1.msra.mxu0 0.0
      %1930 = vmatprep.subr.mxu0 0.0
      %1931 = vmatpush1.msra.mxu0 0.0
      %1932 = vmatprep.subr.mxu0 0.0
      %1933 = vmatpush1.msra.mxu0 0.0
      %1934 = vmatprep.subr.mxu0 0.0
      %1935 = vmatpush1.msra.mxu0 0.0
      %1936 = vmatprep.subr.mxu0 0.0
      %1937 = vmatpush1.msra.mxu0 0.0
      %1938 = vmatprep.subr.mxu0 0.0
      %1939 = vmatpush1.msra.mxu0 0.0
      %1940 = vmatprep.mubr.f32.mxu0 0.0
      %1941 = vmatmul.mubr.f32.gmra.mrb[0].mxu0 %v617
      %v1942 = vpop.f32.mrb[0].mxu0
      %v1943 = vadd.f32 0.0, %v1942
      %v1944 = vpop.f32.mrb[0].mxu0
      %1945 = vmatprep.mubr.f32.mxu0 0.0
      %1946 = vmatmul.mubr.f32.gmra.mrb[0].mxu0 %v619
      %v1947 = vpop.f32.mrb[0].mxu0
      %v1948 = vadd.f32 0.0, %v1947
      %v1949 = vpop.f32.mrb[0].mxu0
      %1950 = vmatprep.mubr.f32.mxu0 0.0
      %1951 = vmatmul.mubr.f32.gmra.mrb[0].mxu0 %v621
      %v1952 = vpop.f32.mrb[0].mxu0
      %v1953 = vadd.f32 0.0, %v1952
      %v1954 = vpop.f32.mrb[0].mxu0
      %1955 = vmatprep.mubr.f32.mxu0 0.0
      %1956 = vmatmul.mubr.f32.gmra.mrb[0].mxu0 %v623
      %v1957 = vpop.f32.mrb[0].mxu0
      %v1958 = vadd.f32 0.0, %v1957
      %v1959 = vpop.f32.mrb[0].mxu0
      %1960 = vmatprep.mubr.f32.mxu0 0.0
      %1961 = vmatmul.mubr.f32.gmra.mrb[0].mxu0 %v625
      %v1962 = vpop.f32.mrb[0].mxu0
      %v1963 = vadd.f32 0.0, %v1962
      %v1964 = vpop.f32.mrb[0].mxu0
      %1965 = vmatprep.mubr.f32.mxu0 0.0
      %1966 = vmatmul.mubr.f32.gmra.mrb[0].mxu0 %v627
      %v1967 = vpop.f32.mrb[0].mxu0
      %v1968 = vadd.f32 0.0, %v1967
      %v1969 = vpop.f32.mrb[0].mxu0
      %1970 = vmatprep.mubr.f32.mxu0 0.0
      %1971 = vmatmul.mubr.f32.gmra.mrb[0].mxu0 %v629
      %v1972 = vpop.f32.mrb[0].mxu0
      %v1973 = vadd.f32 0.0, %v1972
      %v1974 = vpop.f32.mrb[0].mxu0
      %1975 = vmatprep.mubr.f32.mxu0 0.0
      %1976 = vmatmul.mubr.f32.gmra.mrb[0].mxu0 %v631
      %v1977 = vpop.f32.mrb[0].mxu0
      %v1978 = vadd.f32 0.0, %v1977
      %v1979 = vpop.f32.mrb[0].mxu0
      %1980 = vdwg.mxu0
      %v1981 = vadd.f32 %v1851, %v1943
      %v1982 = vadd.f32 %v1852, %v1948
      %v1983 = vadd.f32 %v1853, %v1953
      %v1984 = vadd.f32 %v1854, %v1958
      %v1985 = vadd.f32 %v1855, %v1963
      %v1986 = vadd.f32 %v1856, %v1968
      %v1987 = vadd.f32 %v1857, %v1973
      %v1988 = vadd.f32 %v1858, %v1978
      %s1989 = scalar_lea.vmem %s7, 896
      %v1990 = vld [vmem:[%s1989] sm:$0xff]
      %v1991 = vld [vmem:[%s1989 + $0x8] sm:$0xff]
      %v1992 = vld [vmem:[%s1989 + $0x10] sm:$0xff]
      %v1993 = vld [vmem:[%s1989 + $0x18] sm:$0xff]
      %v1994 = vld [vmem:[%s1989 + $0x20] sm:$0xff]
      %v1995 = vld [vmem:[%s1989 + $0x28] sm:$0xff]
      %v1996 = vld [vmem:[%s1989 + $0x30] sm:$0xff]
      %v1997 = vld [vmem:[%s1989 + $0x38] sm:$0xff]
      %v1998 = vld [vmem:[%s1989 + $0x40] sm:$0xff]
      %v1999 = vld [vmem:[%s1989 + $0x48] sm:$0xff]
      %v2000 = vld [vmem:[%s1989 + $0x50] sm:$0xff]
      %v2001 = vld [vmem:[%s1989 + $0x58] sm:$0xff]
      %v2002 = vld [vmem:[%s1989 + $0x60] sm:$0xff]
      %v2003 = vld [vmem:[%s1989 + $0x68] sm:$0xff]
      %v2004 = vld [vmem:[%s1989 + $0x70] sm:$0xff]
      %v2005 = vld [vmem:[%s1989 + $0x78] sm:$0xff]
      %2006 = vmatprep.subr.mxu0 0.0
      %2007 = vmatpush1.msra.mxu0 %v1990
      %2008 = vmatprep.subr.mxu0 0.0
      %2009 = vmatpush1.msra.mxu0 %v1991
      %2010 = vmatprep.subr.mxu0 0.0
      %2011 = vmatpush1.msra.mxu0 %v1992
      %2012 = vmatprep.subr.mxu0 0.0
      %2013 = vmatpush1.msra.mxu0 %v1993
      %2014 = vmatprep.subr.mxu0 0.0
      %2015 = vmatpush1.msra.mxu0 %v1994
      %2016 = vmatprep.subr.mxu0 0.0
      %2017 = vmatpush1.msra.mxu0 %v1995
      %2018 = vmatprep.subr.mxu0 0.0
      %2019 = vmatpush1.msra.mxu0 %v1996
      %2020 = vmatprep.subr.mxu0 0.0
      %2021 = vmatpush1.msra.mxu0 %v1997
      %2022 = vmatprep.subr.mxu0 0.0
      %2023 = vmatpush1.msra.mxu0 %v1998
      %2024 = vmatprep.subr.mxu0 0.0
      %2025 = vmatpush1.msra.mxu0 %v1999
      %2026 = vmatprep.subr.mxu0 0.0
      %2027 = vmatpush1.msra.mxu0 %v2000
      %2028 = vmatprep.subr.mxu0 0.0
      %2029 = vmatpush1.msra.mxu0 %v2001
      %2030 = vmatprep.subr.mxu0 0.0
      %2031 = vmatpush1.msra.mxu0 %v2002
      %2032 = vmatprep.subr.mxu0 0.0
      %2033 = vmatpush1.msra.mxu0 %v2003
      %2034 = vmatprep.subr.mxu0 0.0
      %2035 = vmatpush1.msra.mxu0 %v2004
      %2036 = vmatprep.subr.mxu0 0.0
      %2037 = vmatpush1.msra.mxu0 %v2005
      %2038 = vmatprep.subr.mxu0 0.0
      %2039 = vmatpush1.msra.mxu0 0.0
      %2040 = vmatprep.subr.mxu0 0.0
      %2041 = vmatpush1.msra.mxu0 0.0
      %2042 = vmatprep.subr.mxu0 0.0
      %2043 = vmatpush1.msra.mxu0 0.0
      %2044 = vmatprep.subr.mxu0 0.0
      %2045 = vmatpush1.msra.mxu0 0.0
      %2046 = vmatprep.subr.mxu0 0.0
      %2047 = vmatpush1.msra.mxu0 0.0
      %2048 = vmatprep.subr.mxu0 0.0
      %2049 = vmatpush1.msra.mxu0 0.0
      %2050 = vmatprep.subr.mxu0 0.0
      %2051 = vmatpush1.msra.mxu0 0.0
      %2052 = vmatprep.subr.mxu0 0.0
      %2053 = vmatpush1.msra.mxu0 0.0
      %2054 = vmatprep.subr.mxu0 0.0
      %2055 = vmatpush1.msra.mxu0 0.0
      %2056 = vmatprep.subr.mxu0 0.0
      %2057 = vmatpush1.msra.mxu0 0.0
      %2058 = vmatprep.subr.mxu0 0.0
      %2059 = vmatpush1.msra.mxu0 0.0
      %2060 = vmatprep.subr.mxu0 0.0
      %2061 = vmatpush1.msra.mxu0 0.0
      %2062 = vmatprep.subr.mxu0 0.0
      %2063 = vmatpush1.msra.mxu0 0.0
      %2064 = vmatprep.subr.mxu0 0.0
      %2065 = vmatpush1.msra.mxu0 0.0
      %2066 = vmatprep.subr.mxu0 0.0
      %2067 = vmatpush1.msra.mxu0 0.0
      %2068 = vmatprep.subr.mxu0 0.0
      %2069 = vmatpush1.msra.mxu0 0.0
      %2070 = vmatprep.mubr.f32.mxu0 0.0
      %2071 = vmatmul.mubr.f32.gmra.mrb[0].mxu0 %v725
      %v2072 = vpop.f32.mrb[0].mxu0
      %v2073 = vadd.f32 0.0, %v2072
      %v2074 = vpop.f32.mrb[0].mxu0
      %2075 = vmatprep.mubr.f32.mxu0 0.0
      %2076 = vmatmul.mubr.f32.gmra.mrb[0].mxu0 %v726
      %v2077 = vpop.f32.mrb[0].mxu0
      %v2078 = vadd.f32 0.0, %v2077
      %v2079 = vpop.f32.mrb[0].mxu0
      %2080 = vmatprep.mubr.f32.mxu0 0.0
      %2081 = vmatmul.mubr.f32.gmra.mrb[0].mxu0 %v727
      %v2082 = vpop.f32.mrb[0].mxu0
      %v2083 = vadd.f32 0.0, %v2082
      %v2084 = vpop.f32.mrb[0].mxu0
      %2085 = vmatprep.mubr.f32.mxu0 0.0
      %2086 = vmatmul.mubr.f32.gmra.mrb[0].mxu0 %v728
      %v2087 = vpop.f32.mrb[0].mxu0
      %v2088 = vadd.f32 0.0, %v2087
      %v2089 = vpop.f32.mrb[0].mxu0
      %2090 = vmatprep.mubr.f32.mxu0 0.0
      %2091 = vmatmul.mubr.f32.gmra.mrb[0].mxu0 %v729
      %v2092 = vpop.f32.mrb[0].mxu0
      %v2093 = vadd.f32 0.0, %v2092
      %v2094 = vpop.f32.mrb[0].mxu0
      %2095 = vmatprep.mubr.f32.mxu0 0.0
      %2096 = vmatmul.mubr.f32.gmra.mrb[0].mxu0 %v730
      %v2097 = vpop.f32.mrb[0].mxu0
      %v2098 = vadd.f32 0.0, %v2097
      %v2099 = vpop.f32.mrb[0].mxu0
      %2100 = vmatprep.mubr.f32.mxu0 0.0
      %2101 = vmatmul.mubr.f32.gmra.mrb[0].mxu0 %v731
      %v2102 = vpop.f32.mrb[0].mxu0
      %v2103 = vadd.f32 0.0, %v2102
      %v2104 = vpop.f32.mrb[0].mxu0
      %2105 = vmatprep.mubr.f32.mxu0 0.0
      %2106 = vmatmul.mubr.f32.gmra.mrb[0].mxu0 %v732
      %v2107 = vpop.f32.mrb[0].mxu0
      %v2108 = vadd.f32 0.0, %v2107
      %v2109 = vpop.f32.mrb[0].mxu0
      %2110 = vdwg.mxu0
      %v2111 = vadd.f32 %v1981, %v2073
      %v2112 = vadd.f32 %v1982, %v2078
      %v2113 = vadd.f32 %v1983, %v2083
      %v2114 = vadd.f32 %v1984, %v2088
      %v2115 = vadd.f32 %v1985, %v2093
      %v2116 = vadd.f32 %v1986, %v2098
      %v2117 = vadd.f32 %v1987, %v2103
      %v2118 = vadd.f32 %v1988, %v2108
      %v2121 = vrot.slane %v631, 1
      %v2122 = vrot.slane %v632, 1
      %v2123 = vsel %vm1258, %v2121, %v2122
      %s2125 = scalar_lea.vmem %s7, 1024
      %v2126 = vld [vmem:[%s2125] sm:$0xff]
      %v2127 = vld [vmem:[%s2125 + $0x8] sm:$0xff]
      %v2128 = vld [vmem:[%s2125 + $0x10] sm:$0xff]
      %v2129 = vld [vmem:[%s2125 + $0x18] sm:$0xff]
      %v2130 = vld [vmem:[%s2125 + $0x20] sm:$0xff]
      %v2131 = vld [vmem:[%s2125 + $0x28] sm:$0xff]
      %v2132 = vld [vmem:[%s2125 + $0x30] sm:$0xff]
      %v2133 = vld [vmem:[%s2125 + $0x38] sm:$0xff]
      %v2134 = vld [vmem:[%s2125 + $0x40] sm:$0xff]
      %v2135 = vld [vmem:[%s2125 + $0x48] sm:$0xff]
      %v2136 = vld [vmem:[%s2125 + $0x50] sm:$0xff]
      %v2137 = vld [vmem:[%s2125 + $0x58] sm:$0xff]
      %v2138 = vld [vmem:[%s2125 + $0x60] sm:$0xff]
      %v2139 = vld [vmem:[%s2125 + $0x68] sm:$0xff]
      %v2140 = vld [vmem:[%s2125 + $0x70] sm:$0xff]
      %v2141 = vld [vmem:[%s2125 + $0x78] sm:$0xff]
      %2142 = vmatprep.subr.mxu0 0.0
      %2143 = vmatpush1.msra.mxu0 %v2126
      %2144 = vmatprep.subr.mxu0 0.0
      %2145 = vmatpush1.msra.mxu0 %v2127
      %2146 = vmatprep.subr.mxu0 0.0
      %2147 = vmatpush1.msra.mxu0 %v2128
      %2148 = vmatprep.subr.mxu0 0.0
      %2149 = vmatpush1.msra.mxu0 %v2129
      %2150 = vmatprep.subr.mxu0 0.0
      %2151 = vmatpush1.msra.mxu0 %v2130
      %2152 = vmatprep.subr.mxu0 0.0
      %2153 = vmatpush1.msra.mxu0 %v2131
      %2154 = vmatprep.subr.mxu0 0.0
      %2155 = vmatpush1.msra.mxu0 %v2132
      %2156 = vmatprep.subr.mxu0 0.0
      %2157 = vmatpush1.msra.mxu0 %v2133
      %2158 = vmatprep.subr.mxu0 0.0
      %2159 = vmatpush1.msra.mxu0 %v2134
      %2160 = vmatprep.subr.mxu0 0.0
      %2161 = vmatpush1.msra.mxu0 %v2135
      %2162 = vmatprep.subr.mxu0 0.0
      %2163 = vmatpush1.msra.mxu0 %v2136
      %2164 = vmatprep.subr.mxu0 0.0
      %2165 = vmatpush1.msra.mxu0 %v2137
      %2166 = vmatprep.subr.mxu0 0.0
      %2167 = vmatpush1.msra.mxu0 %v2138
      %2168 = vmatprep.subr.mxu0 0.0
      %2169 = vmatpush1.msra.mxu0 %v2139
      %2170 = vmatprep.subr.mxu0 0.0
      %2171 = vmatpush1.msra.mxu0 %v2140
      %2172 = vmatprep.subr.mxu0 0.0
      %2173 = vmatpush1.msra.mxu0 %v2141
      %2174 = vmatprep.subr.mxu0 0.0
      %2175 = vmatpush1.msra.mxu0 0.0
      %2176 = vmatprep.subr.mxu0 0.0
      %2177 = vmatpush1.msra.mxu0 0.0
      %2178 = vmatprep.subr.mxu0 0.0
      %2179 = vmatpush1.msra.mxu0 0.0
      %2180 = vmatprep.subr.mxu0 0.0
      %2181 = vmatpush1.msra.mxu0 0.0
      %2182 = vmatprep.subr.mxu0 0.0
      %2183 = vmatpush1.msra.mxu0 0.0
      %2184 = vmatprep.subr.mxu0 0.0
      %2185 = vmatpush1.msra.mxu0 0.0
      %2186 = vmatprep.subr.mxu0 0.0
      %2187 = vmatpush1.msra.mxu0 0.0
      %2188 = vmatprep.subr.mxu0 0.0
      %2189 = vmatpush1.msra.mxu0 0.0
      %2190 = vmatprep.subr.mxu0 0.0
      %2191 = vmatpush1.msra.mxu0 0.0
      %2192 = vmatprep.subr.mxu0 0.0
      %2193 = vmatpush1.msra.mxu0 0.0
      %2194 = vmatprep.subr.mxu0 0.0
      %2195 = vmatpush1.msra.mxu0 0.0
      %2196 = vmatprep.subr.mxu0 0.0
      %2197 = vmatpush1.msra.mxu0 0.0
      %2198 = vmatprep.subr.mxu0 0.0
      %2199 = vmatpush1.msra.mxu0 0.0
      %2200 = vmatprep.subr.mxu0 0.0
      %2201 = vmatpush1.msra.mxu0 0.0
      %2202 = vmatprep.subr.mxu0 0.0
      %2203 = vmatpush1.msra.mxu0 0.0
      %2204 = vmatprep.subr.mxu0 0.0
      %2205 = vmatpush1.msra.mxu0 0.0
      %2206 = vmatprep.mubr.f32.mxu0 0.0
      %2207 = vmatmul.mubr.f32.gmra.mrb[0].mxu0 %v1264
      %v2208 = vpop.f32.mrb[0].mxu0
      %v2209 = vadd.f32 0.0, %v2208
      %v2210 = vpop.f32.mrb[0].mxu0
      %2211 = vmatprep.mubr.f32.mxu0 0.0
      %2212 = vmatmul.mubr.f32.gmra.mrb[0].mxu0 %v1267
      %v2213 = vpop.f32.mrb[0].mxu0
      %v2214 = vadd.f32 0.0, %v2213
      %v2215 = vpop.f32.mrb[0].mxu0
      %2216 = vmatprep.mubr.f32.mxu0 0.0
      %2217 = vmatmul.mubr.f32.gmra.mrb[0].mxu0 %v1270
      %v2218 = vpop.f32.mrb[0].mxu0
      %v2219 = vadd.f32 0.0, %v2218
      %v2220 = vpop.f32.mrb[0].mxu0
      %2221 = vmatprep.mubr.f32.mxu0 0.0
      %2222 = vmatmul.mubr.f32.gmra.mrb[0].mxu0 %v1273
      %v2223 = vpop.f32.mrb[0].mxu0
      %v2224 = vadd.f32 0.0, %v2223
      %v2225 = vpop.f32.mrb[0].mxu0
      %2226 = vmatprep.mubr.f32.mxu0 0.0
      %2227 = vmatmul.mubr.f32.gmra.mrb[0].mxu0 %v1276
      %v2228 = vpop.f32.mrb[0].mxu0
      %v2229 = vadd.f32 0.0, %v2228
      %v2230 = vpop.f32.mrb[0].mxu0
      %2231 = vmatprep.mubr.f32.mxu0 0.0
      %2232 = vmatmul.mubr.f32.gmra.mrb[0].mxu0 %v1279
      %v2233 = vpop.f32.mrb[0].mxu0
      %v2234 = vadd.f32 0.0, %v2233
      %v2235 = vpop.f32.mrb[0].mxu0
      %2236 = vmatprep.mubr.f32.mxu0 0.0
      %2237 = vmatmul.mubr.f32.gmra.mrb[0].mxu0 %v1282
      %v2238 = vpop.f32.mrb[0].mxu0
      %v2239 = vadd.f32 0.0, %v2238
      %v2240 = vpop.f32.mrb[0].mxu0
      %2241 = vmatprep.mubr.f32.mxu0 0.0
      %2242 = vmatmul.mubr.f32.gmra.mrb[0].mxu0 %v2123
      %v2243 = vpop.f32.mrb[0].mxu0
      %v2244 = vadd.f32 0.0, %v2243
      %v2245 = vpop.f32.mrb[0].mxu0
      %2246 = vdwg.mxu0
      %v2247 = vadd.f32 %v2111, %v2209
      %v2248 = vadd.f32 %v2112, %v2214
      %v2249 = vadd.f32 %v2113, %v2219
      %v2250 = vadd.f32 %v2114, %v2224
      %v2251 = vadd.f32 %v2115, %v2229
      %v2252 = vadd.f32 %v2116, %v2234
      %v2253 = vadd.f32 %v2117, %v2239
      %v2254 = vadd.f32 %v2118, %v2244
      %2255 = vst [vmem:[%s414] sm:$0xff] %v2247
      %2256 = vst [vmem:[%s414 + $0x8] sm:$0xff] %v2248
      %2257 = vst [vmem:[%s414 + $0x10] sm:$0xff] %v2249
      %2258 = vst [vmem:[%s414 + $0x18] sm:$0xff] %v2250
      %2259 = vst [vmem:[%s414 + $0x20] sm:$0xff] %v2251
      %2260 = vst [vmem:[%s414 + $0x28] sm:$0xff] %v2252
      %2261 = vst [vmem:[%s414 + $0x30] sm:$0xff] %v2253
      %2262 = vst [vmem:[%s414 + $0x38] sm:$0xff] %v2254
      %v2263 = vld [vmem:[%s9] sm:$0x1]
      %v2264 = vadd.f32 %v2247, %v2248
      %v2265 = vadd.f32 %v2264, %v2249
      %v2266 = vadd.f32 %v2265, %v2250
      %v2267 = vadd.f32 %v2266, %v2251
      %v2268 = vadd.f32 %v2267, %v2252
      %v2269 = vadd.f32 %v2268, %v2253
      %v2270 = vadd.f32 %v2269, %v2254
      %v2271 = vrot.slane %v2270, 4
      %v2272 = vadd.f32 %v2270, %v2271
      %v2273 = vrot.slane %v2272, 2
      %v2274 = vadd.f32 %v2272, %v2273
      %v2275 = vrot.slane %v2274, 1
      %v2276 = vadd.f32 %v2274, %v2275
      %v2277 = vadd.f32 %v2263, %v2276
      %2278 = vst [vmem:[%s9] sm:$0x1] %v2277
      %v2279 = vld [vmem:[%s10] sm:$0x1]
      %v2280 = vmul.f32 %v2247, %v2247
      %v2281 = vmul.f32 %v2248, %v2248
      %v2282 = vmul.f32 %v2249, %v2249
      %v2283 = vmul.f32 %v2250, %v2250
      %v2284 = vmul.f32 %v2251, %v2251
      %v2285 = vmul.f32 %v2252, %v2252
      %v2286 = vmul.f32 %v2253, %v2253
      %v2287 = vmul.f32 %v2254, %v2254
      %v2288 = vadd.f32 %v2280, %v2281
      %v2289 = vadd.f32 %v2288, %v2282
      %v2290 = vadd.f32 %v2289, %v2283
      %v2291 = vadd.f32 %v2290, %v2284
      %v2292 = vadd.f32 %v2291, %v2285
      %v2293 = vadd.f32 %v2292, %v2286
      %v2294 = vadd.f32 %v2293, %v2287
      %v2295 = vrot.slane %v2294, 4
      %v2296 = vadd.f32 %v2294, %v2295
      %v2297 = vrot.slane %v2296, 2
      %v2298 = vadd.f32 %v2296, %v2297
      %v2299 = vrot.slane %v2298, 1
      %v2300 = vadd.f32 %v2298, %v2299
      %v2301 = vadd.f32 %v2279, %v2300
      %2302 = vst [vmem:[%s10] sm:$0x1] %v2301
      %p2303 = scmp.lt.s32.totalorder %s22, 1
      %s2304 = scalar_select %p2303, %s22, 1
      %s2305 = smul.addr %s2304, 8
      %s2306 = smul.addr %s2305, 8
      %s2307 = scalar_lea.vmem %s8, %s2306
      // Predicated region
      $region57: #{_big_res_block.6} parent=51 // pred_check
        %p2308 = pneg %p228
      $region58: #{_big_res_block.6} parent=51 // pred_check_branch
        %2310 = sbr.rel (%p2308) target = $region60
      $region59: #{_big_res_block.6} parent=51 // pred_region
        _
      $region60: #{_big_res_block.6} parent=51 // pred_fallthru
        _
      // Predicated region
      $region61: #{_big_res_block.6} parent=51 // pred_check
        %p2311 = pneg %p249
      $region62: #{_big_res_block.6} parent=51 // pred_check_branch
        %2313 = sbr.rel (%p2311) target = $region64
      $region63: #{_big_res_block.6} parent=51 // pred_region
        _
      $region64: #{_big_res_block.6} parent=51 // pred_fallthru
        _
      // Predicated region
      $region65: #{_big_res_block.6} parent=51 // pred_check
        %p2314 = pneg %p270
      $region66: #{_big_res_block.6} parent=51 // pred_check_branch
        %2316 = sbr.rel (%p2314) target = $region68
      $region67: #{_big_res_block.6} parent=51 // pred_region
        _
      $region68: #{_big_res_block.6} parent=51 // pred_fallthru
        _
      // Predicated region
      $region69: #{_big_res_block.6} parent=51 // pred_check
        %p2317 = pneg %p249
      $region70: #{_big_res_block.6} parent=51 // pred_check_branch
        %2319 = sbr.rel (%p2317) target = $region72
      $region71: #{_big_res_block.6} parent=51 // pred_region
        _
      $region72: #{_big_res_block.6} parent=51 // pred_fallthru
        _
      // Predicated region
      $region73: #{_big_res_block.6} parent=51 // pred_check
        %p2320 = pneg %p270
      $region74: #{_big_res_block.6} parent=51 // pred_check_branch
        %2322 = sbr.rel (%p2320) target = $region76
      $region75: #{_big_res_block.6} parent=51 // pred_region
        _
      $region76: #{_big_res_block.6} parent=51 // pred_fallthru
        _
    $region52: #{_big_res_block.6} parent=5 // pred_fallthru
      _
    %p2323 = scmp.le.s32.totalorder 2, %s17
    // Predicated region
    $region77: #{_big_res_block.6} parent=5 // pred_check
      %p2324 = pneg %p2323
    $region78: #{_big_res_block.6} parent=5 // pred_check_branch
      %2326 = sbr.rel (%p2324) target = $region80
    $region79: #{_big_res_block.6} parent=5 // pred_region
      %s2327 = ssub.s32 %s17, 2
      // Predicated region
      $region81: #{_big_res_block.6} parent=79 // pred_check
        %p2328 = pneg %p234
      $region82: #{_big_res_block.6} parent=79 // pred_check_branch
        %2330 = sbr.rel (%p2328) target = $region84
      $region83: #{_big_res_block.6} parent=79 // pred_region
        %p2331 = scmp.lt.s32.totalorder %s23, 1
        %s2332 = scalar_select %p2331, %s23, 1
        %s2333 = smul.addr %s2332, 8
        %s2334 = smul.addr %s2333, 8
        %s2335 = scalar_lea.vmem %s8, %s2334
      $region84: #{_big_res_block.6} parent=79 // pred_fallthru
        _
    $region80: #{_big_res_block.6} parent=5 // pred_fallthru
      _
  $region6: #{_big_res_block.6} parent=0 // loop_footer
    %s21 = sadd.s32 1, %s17
  $region7: #{_big_res_block.6} parent=0 // loop_footer_branch
    %16 = sbr.rel target = $region3
  $region8: #{_big_res_block.6} parent=0 // loop_exit
    _

// kernel: _big_res_block.7
$region0: #{_big_res_block.7}
  #allocation0 [shape = 'u32[]', space=smem, size = 0x4, offset = 0x4, fixed_abs, tag = 'smem constant byte address 0x4 - core index']
  #allocation1 [shape = 'u32[144,128]{1,0:T(1,128)}', space=vmem, size = 0x12000, scoped, tag = 'internal scratch']
  %s0 = inlined_call_operand.vmem [shape: f32[128,128], index: 0, kind: input, shape index: {}]
  %s1 = inlined_call_operand.vmem [shape: f32[128,128], index: 1, kind: input, shape index: {}]
  %s2 = inlined_call_operand.vmem [shape: f32[1,128], index: 2, kind: input, shape index: {}]
  %s3 = inlined_call_operand.vmem [shape: f32[1,128], index: 3, kind: input, shape index: {}]
  %s4 = inlined_call_operand.vmem [shape: f32[1,128], index: 4, kind: input, shape index: {}]
  %s5 = inlined_call_operand.vmem [shape: f32[1,128], index: 5, kind: input, shape index: {}]
  %s6 = inlined_call_operand.vmem [shape: f32[256,128], index: 6, kind: input, shape index: {}]
  %s7 = inlined_call_operand.hbm [shape: f32[128,128], index: 7, kind: output, shape index: {}]
  %s8 = sld [smem:[#allocation0]]
  $region38: #{_big_res_block.7} parent=0
    _
  %s10 = ssub.s32 1, %s8
  %s11 = scalar_select 0, %s10, %s8
  $region1: #{_big_res_block.7} parent=0
    #allocation2 [shape = 'u8[65536]{0}', space=vmem, size = 0x10000, scoped, tag = 'output window, operand 0, single buffered']
    #allocation3 [shape = 's32[1]{0}', space=sflag, size = 0x4, scoped, tag = 'scoped memory for _big_res_block.7']
    %12 = vsyncpa [#allocation3], 0
    // Predicated region
    $region2: #{_big_res_block.7} parent=1 // pred_check
      _
    $region3: #{_big_res_block.7} parent=1 // pred_check_branch
      %14 = sbr.rel (0) target = $region5
    $region4: #{_big_res_block.7} parent=1 // pred_region
      _
    $region5: #{_big_res_block.7} parent=1 // pred_fallthru
      _
    // Predicated region
    $region6: #{_big_res_block.7} parent=1 // pred_check
      _
    $region7: #{_big_res_block.7} parent=1 // pred_check_branch
      %16 = sbr.rel (0) target = $region9
    $region8: #{_big_res_block.7} parent=1 // pred_region
      _
    $region9: #{_big_res_block.7} parent=1 // pred_fallthru
      _
    // Predicated region
    $region10: #{_big_res_block.7} parent=1 // pred_check
      _
    $region11: #{_big_res_block.7} parent=1 // pred_check_branch
      %18 = sbr.rel (0) target = $region13
    $region12: #{_big_res_block.7} parent=1 // pred_region
      _
    $region13: #{_big_res_block.7} parent=1 // pred_fallthru
      _
    // Predicated region
    $region14: #{_big_res_block.7} parent=1 // pred_check
      _
    $region15: #{_big_res_block.7} parent=1 // pred_check_branch
      %20 = sbr.rel (0) target = $region17
    $region16: #{_big_res_block.7} parent=1 // pred_region
      _
    $region17: #{_big_res_block.7} parent=1 // pred_fallthru
      _
    // Predicated region
    $region18: #{_big_res_block.7} parent=1 // pred_check
      _
    $region19: #{_big_res_block.7} parent=1 // pred_check_branch
      %22 = sbr.rel (0) target = $region21
    $region20: #{_big_res_block.7} parent=1 // pred_region
      _
    $region21: #{_big_res_block.7} parent=1 // pred_fallthru
      _
    // Predicated region
    $region22: #{_big_res_block.7} parent=1 // pred_check
      _
    $region23: #{_big_res_block.7} parent=1 // pred_check_branch
      %24 = sbr.rel (0) target = $region25
    $region24: #{_big_res_block.7} parent=1 // pred_region
      _
    $region25: #{_big_res_block.7} parent=1 // pred_fallthru
      _
    // Predicated region
    $region26: #{_big_res_block.7} parent=1 // pred_check
      _
    $region27: #{_big_res_block.7} parent=1 // pred_check_branch
      %26 = sbr.rel (0) target = $region29
    $region28: #{_big_res_block.7} parent=1 // pred_region
      _
    $region29: #{_big_res_block.7} parent=1 // pred_fallthru
      _
    %v27 = vld [vmem:[%s0] sm:$0xff]
    %v28 = vld [vmem:[%s0 + $0x8] sm:$0xff]
    %v29 = vld [vmem:[%s0 + $0x10] sm:$0xff]
    %v30 = vld [vmem:[%s0 + $0x18] sm:$0xff]
    %v31 = vld [vmem:[%s0 + $0x20] sm:$0xff]
    %v32 = vld [vmem:[%s0 + $0x28] sm:$0xff]
    %v33 = vld [vmem:[%s0 + $0x30] sm:$0xff]
    %v34 = vld [vmem:[%s0 + $0x38] sm:$0xff]
    %v35 = vld [vmem:[%s0 + $0x40] sm:$0xff]
    %v36 = vld [vmem:[%s0 + $0x48] sm:$0xff]
    %v37 = vld [vmem:[%s0 + $0x50] sm:$0xff]
    %v38 = vld [vmem:[%s0 + $0x58] sm:$0xff]
    %v39 = vld [vmem:[%s0 + $0x60] sm:$0xff]
    %v40 = vld [vmem:[%s0 + $0x68] sm:$0xff]
    %v41 = vld [vmem:[%s0 + $0x70] sm:$0xff]
    %v42 = vld [vmem:[%s0 + $0x78] sm:$0xff]
    %v43 = vld [vmem:[%s2] sm:$0x1]
    %v45 = vlaneseq
    %v46 = vshrl.u32 %v45, 7
    %v47 = vsub.s32 0, %v46
    %v48 = vrot.slane %v43, %v47
    %v50 = vmul.f32 %v27, %v48
    %v51 = vmul.f32 %v28, %v48
    %v52 = vmul.f32 %v29, %v48
    %v53 = vmul.f32 %v30, %v48
    %v54 = vmul.f32 %v31, %v48
    %v55 = vmul.f32 %v32, %v48
    %v56 = vmul.f32 %v33, %v48
    %v57 = vmul.f32 %v34, %v48
    %v58 = vmul.f32 %v35, %v48
    %v59 = vmul.f32 %v36, %v48
    %v60 = vmul.f32 %v37, %v48
    %v61 = vmul.f32 %v38, %v48
    %v62 = vmul.f32 %v39, %v48
    %v63 = vmul.f32 %v40, %v48
    %v64 = vmul.f32 %v41, %v48
    %v65 = vmul.f32 %v42, %v48
    %v66 = vld [vmem:[%s3] sm:$0x1]
    %v68 = vlaneseq
    %v69 = vshrl.u32 %v68, 7
    %v70 = vsub.s32 0, %v69
    %v71 = vrot.slane %v66, %v70
    %v73 = vadd.f32 %v50, %v71
    %v74 = vadd.f32 %v51, %v71
    %v75 = vadd.f32 %v52, %v71
    %v76 = vadd.f32 %v53, %v71
    %v77 = vadd.f32 %v54, %v71
    %v78 = vadd.f32 %v55, %v71
    %v79 = vadd.f32 %v56, %v71
    %v80 = vadd.f32 %v57, %v71
    %v81 = vadd.f32 %v58, %v71
    %v82 = vadd.f32 %v59, %v71
    %v83 = vadd.f32 %v60, %v71
    %v84 = vadd.f32 %v61, %v71
    %v85 = vadd.f32 %v62, %v71
    %v86 = vadd.f32 %v63, %v71
    %v87 = vadd.f32 %v64, %v71
    %v88 = vadd.f32 %v65, %v71
    %v89 = vmax.f32 %v73, 0.0
    %v90 = vmax.f32 %v74, 0.0
    %v91 = vmax.f32 %v75, 0.0
    %v92 = vmax.f32 %v76, 0.0
    %v93 = vmax.f32 %v77, 0.0
    %v94 = vmax.f32 %v78, 0.0
    %v95 = vmax.f32 %v79, 0.0
    %v96 = vmax.f32 %v80, 0.0
    %v97 = vmax.f32 %v81, 0.0
    %v98 = vmax.f32 %v82, 0.0
    %v99 = vmax.f32 %v83, 0.0
    %v100 = vmax.f32 %v84, 0.0
    %v101 = vmax.f32 %v85, 0.0
    %v102 = vmax.f32 %v86, 0.0
    %v103 = vmax.f32 %v87, 0.0
    %v104 = vmax.f32 %v88, 0.0
    %v105 = vld [vmem:[%s1] sm:$0xff]
    %v106 = vld [vmem:[%s1 + $0x8] sm:$0xff]
    %v107 = vld [vmem:[%s1 + $0x10] sm:$0xff]
    %v108 = vld [vmem:[%s1 + $0x18] sm:$0xff]
    %v109 = vld [vmem:[%s1 + $0x20] sm:$0xff]
    %v110 = vld [vmem:[%s1 + $0x28] sm:$0xff]
    %v111 = vld [vmem:[%s1 + $0x30] sm:$0xff]
    %v112 = vld [vmem:[%s1 + $0x38] sm:$0xff]
    %v113 = vld [vmem:[%s1 + $0x40] sm:$0xff]
    %v114 = vld [vmem:[%s1 + $0x48] sm:$0xff]
    %v115 = vld [vmem:[%s1 + $0x50] sm:$0xff]
    %v116 = vld [vmem:[%s1 + $0x58] sm:$0xff]
    %v117 = vld [vmem:[%s1 + $0x60] sm:$0xff]
    %v118 = vld [vmem:[%s1 + $0x68] sm:$0xff]
    %v119 = vld [vmem:[%s1 + $0x70] sm:$0xff]
    %v120 = vld [vmem:[%s1 + $0x78] sm:$0xff]
    %v121 = vld [vmem:[%s4] sm:$0x1]
    %v123 = vlaneseq
    %v124 = vshrl.u32 %v123, 7
    %v125 = vsub.s32 0, %v124
    %v126 = vrot.slane %v121, %v125
    %v128 = vmul.f32 %v105, %v126
    %v129 = vmul.f32 %v106, %v126
    %v130 = vmul.f32 %v107, %v126
    %v131 = vmul.f32 %v108, %v126
    %v132 = vmul.f32 %v109, %v126
    %v133 = vmul.f32 %v110, %v126
    %v134 = vmul.f32 %v111, %v126
    %v135 = vmul.f32 %v112, %v126
    %v136 = vmul.f32 %v113, %v126
    %v137 = vmul.f32 %v114, %v126
    %v138 = vmul.f32 %v115, %v126
    %v139 = vmul.f32 %v116, %v126
    %v140 = vmul.f32 %v117, %v126
    %v141 = vmul.f32 %v118, %v126
    %v142 = vmul.f32 %v119, %v126
    %v143 = vmul.f32 %v120, %v126
    %v144 = vld [vmem:[%s5] sm:$0x1]
    %v146 = vlaneseq
    %v147 = vshrl.u32 %v146, 7
    %v148 = vsub.s32 0, %v147
    %v149 = vrot.slane %v144, %v148
    %v151 = vadd.f32 %v128, %v149
    %v152 = vadd.f32 %v129, %v149
    %v153 = vadd.f32 %v130, %v149
    %v154 = vadd.f32 %v131, %v149
    %v155 = vadd.f32 %v132, %v149
    %v156 = vadd.f32 %v133, %v149
    %v157 = vadd.f32 %v134, %v149
    %v158 = vadd.f32 %v135, %v149
    %v159 = vadd.f32 %v136, %v149
    %v160 = vadd.f32 %v137, %v149
    %v161 = vadd.f32 %v138, %v149
    %v162 = vadd.f32 %v139, %v149
    %v163 = vadd.f32 %v140, %v149
    %v164 = vadd.f32 %v141, %v149
    %v165 = vadd.f32 %v142, %v149
    %v166 = vadd.f32 %v143, %v149
    %v167 = vmax.f32 %v151, 0.0
    %v168 = vmax.f32 %v152, 0.0
    %v169 = vmax.f32 %v153, 0.0
    %v170 = vmax.f32 %v154, 0.0
    %v171 = vmax.f32 %v155, 0.0
    %v172 = vmax.f32 %v156, 0.0
    %v173 = vmax.f32 %v157, 0.0
    %v174 = vmax.f32 %v158, 0.0
    %v175 = vmax.f32 %v159, 0.0
    %v176 = vmax.f32 %v160, 0.0
    %v177 = vmax.f32 %v161, 0.0
    %v178 = vmax.f32 %v162, 0.0
    %v179 = vmax.f32 %v163, 0.0
    %v180 = vmax.f32 %v164, 0.0
    %v181 = vmax.f32 %v165, 0.0
    %v182 = vmax.f32 %v166, 0.0
    %v183 = vld [vmem:[%s6] sm:$0xff]
    %v184 = vld [vmem:[%s6 + $0x8] sm:$0xff]
    %v185 = vld [vmem:[%s6 + $0x10] sm:$0xff]
    %v186 = vld [vmem:[%s6 + $0x18] sm:$0xff]
    %v187 = vld [vmem:[%s6 + $0x20] sm:$0xff]
    %v188 = vld [vmem:[%s6 + $0x28] sm:$0xff]
    %v189 = vld [vmem:[%s6 + $0x30] sm:$0xff]
    %v190 = vld [vmem:[%s6 + $0x38] sm:$0xff]
    %v191 = vld [vmem:[%s6 + $0x40] sm:$0xff]
    %v192 = vld [vmem:[%s6 + $0x48] sm:$0xff]
    %v193 = vld [vmem:[%s6 + $0x50] sm:$0xff]
    %v194 = vld [vmem:[%s6 + $0x58] sm:$0xff]
    %v195 = vld [vmem:[%s6 + $0x60] sm:$0xff]
    %v196 = vld [vmem:[%s6 + $0x68] sm:$0xff]
    %v197 = vld [vmem:[%s6 + $0x70] sm:$0xff]
    %v198 = vld [vmem:[%s6 + $0x78] sm:$0xff]
    %v199 = vld [vmem:[%s6 + $0x80] sm:$0xff]
    %v200 = vld [vmem:[%s6 + $0x88] sm:$0xff]
    %v201 = vld [vmem:[%s6 + $0x90] sm:$0xff]
    %v202 = vld [vmem:[%s6 + $0x98] sm:$0xff]
    %v203 = vld [vmem:[%s6 + $0xa0] sm:$0xff]
    %v204 = vld [vmem:[%s6 + $0xa8] sm:$0xff]
    %v205 = vld [vmem:[%s6 + $0xb0] sm:$0xff]
    %v206 = vld [vmem:[%s6 + $0xb8] sm:$0xff]
    %v207 = vld [vmem:[%s6 + $0xc0] sm:$0xff]
    %v208 = vld [vmem:[%s6 + $0xc8] sm:$0xff]
    %v209 = vld [vmem:[%s6 + $0xd0] sm:$0xff]
    %v210 = vld [vmem:[%s6 + $0xd8] sm:$0xff]
    %v211 = vld [vmem:[%s6 + $0xe0] sm:$0xff]
    %v212 = vld [vmem:[%s6 + $0xe8] sm:$0xff]
    %v213 = vld [vmem:[%s6 + $0xf0] sm:$0xff]
    %v214 = vld [vmem:[%s6 + $0xf8] sm:$0xff]
    %215 = vmatprep.subr.mxu0 0.0
    %216 = vmatpush1.msra.mxu0 %v183
    %217 = vmatprep.subr.mxu0 0.0
    %218 = vmatpush1.msra.mxu0 %v184
    %219 = vmatprep.subr.mxu0 0.0
    %220 = vmatpush1.msra.mxu0 %v185
    %221 = vmatprep.subr.mxu0 0.0
    %222 = vmatpush1.msra.mxu0 %v186
    %223 = vmatprep.subr.mxu0 0.0
    %224 = vmatpush1.msra.mxu0 %v187
    %225 = vmatprep.subr.mxu0 0.0
    %226 = vmatpush1.msra.mxu0 %v188
    %227 = vmatprep.subr.mxu0 0.0
    %228 = vmatpush1.msra.mxu0 %v189
    %229 = vmatprep.subr.mxu0 0.0
    %230 = vmatpush1.msra.mxu0 %v190
    %231 = vmatprep.subr.mxu0 0.0
    %232 = vmatpush1.msra.mxu0 %v191
    %233 = vmatprep.subr.mxu0 0.0
    %234 = vmatpush1.msra.mxu0 %v192
    %235 = vmatprep.subr.mxu0 0.0
    %236 = vmatpush1.msra.mxu0 %v193
    %237 = vmatprep.subr.mxu0 0.0
    %238 = vmatpush1.msra.mxu0 %v194
    %239 = vmatprep.subr.mxu0 0.0
    %240 = vmatpush1.msra.mxu0 %v195
    %241 = vmatprep.subr.mxu0 0.0
    %242 = vmatpush1.msra.mxu0 %v196
    %243 = vmatprep.subr.mxu0 0.0
    %244 = vmatpush1.msra.mxu0 %v197
    %245 = vmatprep.subr.mxu0 0.0
    %246 = vmatpush1.msra.mxu0 %v198
    %247 = vmatprep.subr.mxu0 0.0
    %248 = vmatpush1.msra.mxu0 %v199
    %249 = vmatprep.subr.mxu0 0.0
    %250 = vmatpush1.msra.mxu0 %v200
    %251 = vmatprep.subr.mxu0 0.0
    %252 = vmatpush1.msra.mxu0 %v201
    %253 = vmatprep.subr.mxu0 0.0
    %254 = vmatpush1.msra.mxu0 %v202
    %255 = vmatprep.subr.mxu0 0.0
    %256 = vmatpush1.msra.mxu0 %v203
    %257 = vmatprep.subr.mxu0 0.0
    %258 = vmatpush1.msra.mxu0 %v204
    %259 = vmatprep.subr.mxu0 0.0
    %260 = vmatpush1.msra.mxu0 %v205
    %261 = vmatprep.subr.mxu0 0.0
    %262 = vmatpush1.msra.mxu0 %v206
    %263 = vmatprep.subr.mxu0 0.0
    %264 = vmatpush1.msra.mxu0 %v207
    %265 = vmatprep.subr.mxu0 0.0
    %266 = vmatpush1.msra.mxu0 %v208
    %267 = vmatprep.subr.mxu0 0.0
    %268 = vmatpush1.msra.mxu0 %v209
    %269 = vmatprep.subr.mxu0 0.0
    %270 = vmatpush1.msra.mxu0 %v210
    %271 = vmatprep.subr.mxu0 0.0
    %272 = vmatpush1.msra.mxu0 %v211
    %273 = vmatprep.subr.mxu0 0.0
    %274 = vmatpush1.msra.mxu0 %v212
    %275 = vmatprep.subr.mxu0 0.0
    %276 = vmatpush1.msra.mxu0 %v213
    %277 = vmatprep.subr.mxu0 0.0
    %278 = vmatpush1.msra.mxu0 %v214
    %279 = vmatprep.mubr.f32.mxu0 %v167
    %280 = vmatmul.mubr.f32.gmra.mrb[0].mxu0 %v89
    %v281 = vpop.f32.mrb[0].mxu0
    %v282 = vadd.f32 0.0, %v281
    %v283 = vpop.f32.mrb[0].mxu0
    %284 = vmatprep.mubr.f32.mxu0 %v168
    %285 = vmatmul.mubr.f32.gmra.mrb[0].mxu0 %v90
    %v286 = vpop.f32.mrb[0].mxu0
    %v287 = vadd.f32 0.0, %v286
    %v288 = vpop.f32.mrb[0].mxu0
    %289 = vmatprep.mubr.f32.mxu0 %v169
    %290 = vmatmul.mubr.f32.gmra.mrb[0].mxu0 %v91
    %v291 = vpop.f32.mrb[0].mxu0
    %v292 = vadd.f32 0.0, %v291
    %v293 = vpop.f32.mrb[0].mxu0
    %294 = vmatprep.mubr.f32.mxu0 %v170
    %295 = vmatmul.mubr.f32.gmra.mrb[0].mxu0 %v92
    %v296 = vpop.f32.mrb[0].mxu0
    %v297 = vadd.f32 0.0, %v296
    %v298 = vpop.f32.mrb[0].mxu0
    %299 = vmatprep.mubr.f32.mxu0 %v171
    %300 = vmatmul.mubr.f32.gmra.mrb[0].mxu0 %v93
    %v301 = vpop.f32.mrb[0].mxu0
    %v302 = vadd.f32 0.0, %v301
    %v303 = vpop.f32.mrb[0].mxu0
    %304 = vmatprep.mubr.f32.mxu0 %v172
    %305 = vmatmul.mubr.f32.gmra.mrb[0].mxu0 %v94
    %v306 = vpop.f32.mrb[0].mxu0
    %v307 = vadd.f32 0.0, %v306
    %v308 = vpop.f32.mrb[0].mxu0
    %309 = vmatprep.mubr.f32.mxu0 %v173
    %310 = vmatmul.mubr.f32.gmra.mrb[0].mxu0 %v95
    %v311 = vpop.f32.mrb[0].mxu0
    %v312 = vadd.f32 0.0, %v311
    %v313 = vpop.f32.mrb[0].mxu0
    %314 = vmatprep.mubr.f32.mxu0 %v174
    %315 = vmatmul.mubr.f32.gmra.mrb[0].mxu0 %v96
    %v316 = vpop.f32.mrb[0].mxu0
    %v317 = vadd.f32 0.0, %v316
    %v318 = vpop.f32.mrb[0].mxu0
    %319 = vmatprep.mubr.f32.mxu0 %v175
    %320 = vmatmul.mubr.f32.gmra.mrb[0].mxu0 %v97
    %v321 = vpop.f32.mrb[0].mxu0
    %v322 = vadd.f32 0.0, %v321
    %v323 = vpop.f32.mrb[0].mxu0
    %324 = vmatprep.mubr.f32.mxu0 %v176
    %325 = vmatmul.mubr.f32.gmra.mrb[0].mxu0 %v98
    %v326 = vpop.f32.mrb[0].mxu0
    %v327 = vadd.f32 0.0, %v326
    %v328 = vpop.f32.mrb[0].mxu0
    %329 = vmatprep.mubr.f32.mxu0 %v177
    %330 = vmatmul.mubr.f32.gmra.mrb[0].mxu0 %v99
    %v331 = vpop.f32.mrb[0].mxu0
    %v332 = vadd.f32 0.0, %v331
    %v333 = vpop.f32.mrb[0].mxu0
    %334 = vmatprep.mubr.f32.mxu0 %v178
    %335 = vmatmul.mubr.f32.gmra.mrb[0].mxu0 %v100
    %v336 = vpop.f32.mrb[0].mxu0
    %v337 = vadd.f32 0.0, %v336
    %v338 = vpop.f32.mrb[0].mxu0
    %339 = vmatprep.mubr.f32.mxu0 %v179
    %340 = vmatmul.mubr.f32.gmra.mrb[0].mxu0 %v101
    %v341 = vpop.f32.mrb[0].mxu0
    %v342 = vadd.f32 0.0, %v341
    %v343 = vpop.f32.mrb[0].mxu0
    %344 = vmatprep.mubr.f32.mxu0 %v180
    %345 = vmatmul.mubr.f32.gmra.mrb[0].mxu0 %v102
    %v346 = vpop.f32.mrb[0].mxu0
    %v347 = vadd.f32 0.0, %v346
    %v348 = vpop.f32.mrb[0].mxu0
    %349 = vmatprep.mubr.f32.mxu0 %v181
    %350 = vmatmul.mubr.f32.gmra.mrb[0].mxu0 %v103
    %v351 = vpop.f32.mrb[0].mxu0
    %v352 = vadd.f32 0.0, %v351
    %v353 = vpop.f32.mrb[0].mxu0
    %354 = vmatprep.mubr.f32.mxu0 %v182
    %355 = vmatmul.mubr.f32.gmra.mrb[0].mxu0 %v104
    %v356 = vpop.f32.mrb[0].mxu0
    %v357 = vadd.f32 0.0, %v356
    %v358 = vpop.f32.mrb[0].mxu0
    %359 = vdwg.mxu0
    %360 = vst [vmem:[#allocation2] sm:$0xff] %v282
    %361 = vst [vmem:[#allocation2 + $0x8] sm:$0xff] %v287
    %362 = vst [vmem:[#allocation2 + $0x10] sm:$0xff] %v292
    %363 = vst [vmem:[#allocation2 + $0x18] sm:$0xff] %v297
    %364 = vst [vmem:[#allocation2 + $0x20] sm:$0xff] %v302
    %365 = vst [vmem:[#allocation2 + $0x28] sm:$0xff] %v307
    %366 = vst [vmem:[#allocation2 + $0x30] sm:$0xff] %v312
    %367 = vst [vmem:[#allocation2 + $0x38] sm:$0xff] %v317
    %368 = vst [vmem:[#allocation2 + $0x40] sm:$0xff] %v322
    %369 = vst [vmem:[#allocation2 + $0x48] sm:$0xff] %v327
    %370 = vst [vmem:[#allocation2 + $0x50] sm:$0xff] %v332
    %371 = vst [vmem:[#allocation2 + $0x58] sm:$0xff] %v337
    %372 = vst [vmem:[#allocation2 + $0x60] sm:$0xff] %v342
    %373 = vst [vmem:[#allocation2 + $0x68] sm:$0xff] %v347
    %374 = vst [vmem:[#allocation2 + $0x70] sm:$0xff] %v352
    %375 = vst [vmem:[#allocation2 + $0x78] sm:$0xff] %v357
    // Predicated region
    $region30: #{_big_res_block.7} parent=1 // pred_check
      _
    $region31: #{_big_res_block.7} parent=1 // pred_check_branch
      %377 = sbr.rel (0) target = $region33
    $region32: #{_big_res_block.7} parent=1 // pred_region
      %s379 = ssub.s32 2048, 2048
      %380 = vsyncadd [#allocation3], %s379
      %s381 = sshll.u32 [#allocation2], 4
      %s382 = int_to_ptr.vmem [resolvable:$true] %s381
      %387 = dma.vmem_to_hbm [thread:$0]  %s382, 2048, %s7, [#allocation3], 128, 128, 8
    $region33: #{_big_res_block.7} parent=1 // pred_fallthru
      _
    // Predicated region
    $region34: #{_big_res_block.7} parent=1 // pred_check
      _
    $region35: #{_big_res_block.7} parent=1 // pred_check_branch
      %389 = sbr.rel (0) target = $region37
    $region36: #{_big_res_block.7} parent=1 // pred_region
      %390 = dma.done [#allocation3], 2048
    $region37: #{_big_res_block.7} parent=1 // pred_fallthru
      _
    %391 = vsyncpa [#allocation3], 1

</llo_original>
